<compile_context>
chip_gen: v5e
topology: v5e:2x2
jax: 0.10.0
libtpu: 0.0.40
codegen_flags: <defaults>
</compile_context>

<pallas_src>
import functools

import jax
import jax.numpy as jnp
from jax import lax
from jax.experimental import pallas as pl
from jax.experimental.pallas import tpu as pltpu


BN_EPS = 1e-3
LANE = 128
ROW_ALIGN = 16          # bf16 native sublane packing (16, 128)


def _round_up(x, m):
    return (x + m - 1) // m * m


def _pick_vmem_limit():
    """Generation-aware scoped-VMEM limit: ~3/4 of physical, capped at 96 MiB.

    v5e/v6e (128 MiB physical) -> 96 MiB; v7x (64 MiB) -> 48 MiB."""
    try:
        cap = int(pltpu.get_tpu_info().vmem_capacity_bytes)
    except Exception:
        cap = 64 * 1024 * 1024          # conservative fallback, fits every generation
    return int(min((cap * 3) // 4, 96 * 1024 * 1024))


# --------------------------------------------------------------------------
# Pass 1: convolution as a K-tiled MXU matmul + global per-channel stats.
#   acc_ref   : (tm, Cp) f32 VMEM scratch accumulator over K tiles
#   conv_ref  : bf16 conv intermediate (written once per M tile, at last K tile)
#   sum_ref   : sum_m x                  (resident accumulator across M tiles)
#   sq_ref    : sum_m (x - c)^2          (shifted second moment, well conditioned)
#   c_ref     : per-channel shift c (first tile's mean), exported for the wrapper
# --------------------------------------------------------------------------
def conv_stats_kernel(a_ref, w_ref, conv_ref, sum_ref, sq_ref, c_ref, acc_ref,
                      *, m_true, tm):
    i = pl.program_id(0)                 # M tile (outer)
    k = pl.program_id(1)                 # K tile (reduction, innermost)
    nk = pl.num_programs(1)
    last_k = k == nk - 1

    @pl.when(k == 0)
    def _zero_acc():
        acc_ref[...] = jnp.zeros_like(acc_ref)

    # (tm, tk) bf16 @ (tk, Cp) bf16 -> f32 accumulate on the MXU.
    acc_ref[...] += jnp.dot(a_ref[...], w_ref[...],
                            preferred_element_type=jnp.float32)

    @pl.when(last_k)
    def _writeback():
        conv_ref[...] = acc_ref[...].astype(conv_ref.dtype)      # bf16 intermediate

    # Valid-row mask: zero-padded tail rows must not pollute the batch stats.
    row = i * tm + lax.broadcasted_iota(jnp.int32, acc_ref.shape, 0)
    valid = (row < m_true).astype(jnp.float32)                   # (tm, Cp)

    @pl.when(jnp.logical_and(last_k, i == 0))
    def _init_stats():
        acc = acc_ref[...] * valid
        s = jnp.sum(acc, axis=0, keepdims=True)                  # (1, Cp)
        c = s * (1.0 / tm)               # conditioning shift only; algebra stays exact
        d = (acc_ref[...] - c) * valid
        c_ref[...] = c
        sum_ref[...] = s
        sq_ref[...] = jnp.sum(d * d, axis=0, keepdims=True)

    @pl.when(jnp.logical_and(last_k, i != 0))
    def _acc_stats():
        acc = acc_ref[...] * valid
        c = c_ref[...]
        d = (acc_ref[...] - c) * valid
        sum_ref[...] = sum_ref[...] + jnp.sum(acc, axis=0, keepdims=True)
        sq_ref[...] = sq_ref[...] + jnp.sum(d * d, axis=0, keepdims=True)


# --------------------------------------------------------------------------
# Pass 2: fused BatchNorm affine (precomputed per-channel scale/shift) + ReLU6.
# Output aliases the bf16 conv intermediate in place.
# --------------------------------------------------------------------------
def bn_relu6_kernel(conv_ref, scale_ref, shift_ref, out_ref):
    y = conv_ref[...].astype(jnp.float32) * scale_ref[...] + shift_ref[...]
    out_ref[...] = jnp.clip(y, 0.0, 6.0).astype(out_ref.dtype)


# --------------------------------------------------------------------------
# Host-side glue.
# --------------------------------------------------------------------------
def im2col_nhwc(x_nhwc, kh, kw, pad):
    """(kh, kw) patches, stride 1, 'same' padding -> (N*H*W, kh*kw*Cin) in x's dtype.

    Inner column ordering is (i, j, ci) to match the flattened PyTorch weight
    (Cout, Cin, kh, kw) -> (kh, kw, Cin, Cout)."""
    n, h, w, c = x_nhwc.shape
    xp = jnp.pad(x_nhwc, ((0, 0), (pad, pad), (pad, pad), (0, 0)))
    cols = [xp[:, i:i + h, j:j + w, :] for i in range(kh) for j in range(kw)]
    patches = jnp.stack(cols, axis=-2)                           # (N, H, W, kh*kw, C)
    return patches.reshape(n * h * w, kh * kw * c)


@functools.partial(jax.jit, static_argnames=("padding",))
def basic_conv2d_forward(x_nchw, weight, gamma, beta, *, padding=1):
    """x_nchw: (N, Cin, H, W); weight: (Cout, Cin, KH, KW); gamma/beta: (Cout,)."""
    n, cin, h, w = x_nchw.shape
    cout, _, kh, kw = weight.shape

    # Cast to bf16 BEFORE any layout work: halves transpose + im2col HBM traffic.
    x_nhwc = jnp.transpose(x_nchw.astype(jnp.bfloat16), (0, 2, 3, 1))
    patches = im2col_nhwc(x_nhwc, kh, kw, padding)               # (M, K) bf16
    m, k = patches.shape

    # ---- tiling ------------------------------------------------------------
    # Full-width output lane block (keeps 256-wide MXU columns full on v6e/v7x).
    cp = _round_up(cout, LANE)

    tk = 512
    if k <= tk:
        kp = _round_up(k, LANE)
        tk = kp
    else:
        kp = _round_up(k, tk)
    grid_k = kp // tk

    m_al = _round_up(m, ROW_ALIGN)
    tm1 = min(512, m_al)                          # pass-1 row tile
    tm2 = min(2048, _round_up(m_al, tm1))         # bigger tile for mem-bound epilogue
    tm2 = max((tm2 // tm1) * tm1, tm1)            # keep tm2 a multiple of tm1
    m_pad = _round_up(m, tm2)
    grid_m1 = m_pad // tm1
    grid_m2 = m_pad // tm2

    patches_p = jnp.pad(patches, ((0, m_pad - m), (0, kp - k)))          # bf16
    w_mat = jnp.transpose(weight, (2, 3, 1, 0)).reshape(k, cout).astype(jnp.bfloat16)
    w_p = jnp.pad(w_mat, ((0, kp - k), (0, cp - cout)))                  # bf16

    vmem_limit = _pick_vmem_limit()

    kernel1 = functools.partial(conv_stats_kernel, m_true=m, tm=tm1)
    conv_flat, ch_sum, ch_sq, ch_c = pl.pallas_call(
        kernel1,
        out_shape=(
            jax.ShapeDtypeStruct((m_pad, cp), jnp.bfloat16),     # conv intermediate
            jax.ShapeDtypeStruct((1, cp), jnp.float32),          # sum x
            jax.ShapeDtypeStruct((1, cp), jnp.float32),          # sum (x - c)^2
            jax.ShapeDtypeStruct((1, cp), jnp.float32),          # shift c
        ),
        grid=(grid_m1, grid_k),
        in_specs=[
            pl.BlockSpec((tm1, tk), lambda i, kk: (i, kk)),
            pl.BlockSpec((tk, cp), lambda i, kk: (kk, 0)),
        ],
        out_specs=(
            pl.BlockSpec((tm1, cp), lambda i, kk: (i, 0)),
            pl.BlockSpec((1, cp), lambda i, kk: (0, 0)),         # resident accumulator
            pl.BlockSpec((1, cp), lambda i, kk: (0, 0)),         # resident accumulator
            pl.BlockSpec((1, cp), lambda i, kk: (0, 0)),         # resident shift
        ),
        scratch_shapes=[pltpu.VMEM((tm1, cp), jnp.float32)],
        compiler_params=pltpu.CompilerParams(
            dimension_semantics=("arbitrary", "arbitrary"),      # stats carried across M; K is reduction
            vmem_limit_bytes=vmem_limit),
        cost_estimate=pl.CostEstimate(
            flops=2 * m_pad * kp * cp,
            transcendentals=0,
            bytes_accessed=(m_pad * kp * 2 + grid_m1 * kp * cp * 2
                            + m_pad * cp * 2 + 3 * cp * 4)),
    )(patches_p, w_p)

    # Fold train-mode BatchNorm (biased batch stats over the true M = N*H*W) into a
    # single per-channel scale/shift. var = E[(x-c)^2] - (mean - c)^2 (exact, well
    # conditioned). Padded channels end up with scale = shift = 0 and are sliced off.
    inv_m = 1.0 / float(m)
    mean = ch_sum * inv_m                                        # (1, Cp)
    var = jnp.maximum(ch_sq * inv_m - (mean - ch_c) ** 2, 0.0)
    inv_std = lax.rsqrt(var + BN_EPS)
    gamma_p = jnp.pad(gamma.astype(jnp.float32), (0, cp - cout)).reshape(1, cp)
    beta_p = jnp.pad(beta.astype(jnp.float32), (0, cp - cout)).reshape(1, cp)
    scale = gamma_p * inv_std
    shift = beta_p - mean * scale

    out_flat = pl.pallas_call(
        bn_relu6_kernel,
        out_shape=jax.ShapeDtypeStruct((m_pad, cp), jnp.bfloat16),
        grid=(grid_m2,),
        in_specs=[
            pl.BlockSpec((tm2, cp), lambda i: (i, 0)),
            pl.BlockSpec((1, cp), lambda i: (0, 0)),
            pl.BlockSpec((1, cp), lambda i: (0, 0)),
        ],
        out_specs=pl.BlockSpec((tm2, cp), lambda i: (i, 0)),
        input_output_aliases={0: 0},                             # ReLU6 in place over conv
        compiler_params=pltpu.CompilerParams(
            dimension_semantics=("parallel",),                   # independent tiles
            vmem_limit_bytes=vmem_limit),
        cost_estimate=pl.CostEstimate(
            flops=3 * m_pad * cp,
            transcendentals=0,
            bytes_accessed=2 * m_pad * cp * 2 + 2 * cp * 4),
    )(conv_flat, scale, shift)

    out_nhwc = out_flat[:m, :cout].reshape(n, h, w, cout)
    return jnp.transpose(out_nhwc, (0, 3, 1, 2)).astype(jnp.float32)    # back to NCHW


def reference_forward(x_nchw, weight, gamma, beta, *, padding=1):
    """Pure-JAX reference (conv + train-mode BN + relu6)."""
    conv = lax.conv_general_dilated(
        x_nchw, weight, window_strides=(1, 1),
        padding=[(padding, padding), (padding, padding)],
        dimension_numbers=("NCHW", "OIHW", "NCHW"))
    mean = jnp.mean(conv, axis=(0, 2, 3), keepdims=True)
    var = jnp.mean((conv - mean) ** 2, axis=(0, 2, 3), keepdims=True)
    y = (conv - mean) * lax.rsqrt(var + BN_EPS)
    y = y * gamma.reshape(1, -1, 1, 1) + beta.reshape(1, -1, 1, 1)
    return jnp.clip(y, 0.0, 6.0)


if __name__ == "__main__":
    key = jax.random.PRNGKey(0)
    kx, kw_, kg, kb = jax.random.split(key, 4)

    N, CIN, H, W = 2, 4, 16, 16
    COUT, KH, KW = 8, 3, 3

    x = jax.random.normal(kx, (N, CIN, H, W), dtype=jnp.float32)
    fan_in = CIN * KH * KW
    bound = 1.0 / (fan_in ** 0.5)
    weight = jax.random.uniform(kw_, (COUT, CIN, KH, KW),
                                minval=-bound, maxval=bound, dtype=jnp.float32)
    # Make test inputs exactly bf16-representable so the bf16-MXU path matches
    # the f32 reference tightly.
    x = x.astype(jnp.bfloat16).astype(jnp.float32)
    weight = weight.astype(jnp.bfloat16).astype(jnp.float32)

    # Non-trivial BN affine parameters (module defaults are ones/zeros).
    gamma = 1.0 + 0.1 * jax.random.normal(kg, (COUT,), dtype=jnp.float32)
    beta = 0.1 * jax.random.normal(kb, (COUT,), dtype=jnp.float32)

    out = basic_conv2d_forward(x, weight, gamma, beta, padding=1)
    out = jax.block_until_ready(out)

    ref = jax.block_until_ready(reference_forward(x, weight, gamma, beta, padding=1))
    assert out.shape == (N, COUT, H, W)
    # Tolerance accounts for the bf16 conv intermediate and bf16 output path.
    assert jnp.allclose(out, ref, atol=2e-2, rtol=2e-2)

    print("KERNEL_OK")
</pallas_src>

<mosaic_0001>
module attributes {stable_mosaic.version = 11 : i64} {
  func.func @conv_stats_kernel(%arg0: i32, %arg1: i32, %arg2: memref<512x128xbf16, #tpu.memory_space<vmem>>, %arg3: memref<128x128xbf16, #tpu.memory_space<vmem>>, %arg4: memref<512x128xbf16, #tpu.memory_space<vmem>>, %arg5: memref<1x128xf32, #tpu.memory_space<vmem>>, %arg6: memref<1x128xf32, #tpu.memory_space<vmem>>, %arg7: memref<1x128xf32, #tpu.memory_space<vmem>>, %arg8: memref<512x128xf32, #tpu.memory_space<vmem>>) attributes {dimension_semantics = [#tpu.dimension_semantics<arbitrary>, #tpu.dimension_semantics<arbitrary>], iteration_bounds = array<i64: 1, 1>, scalar_prefetch = 0 : i64, scratch_operands = 1 : i64, tpu.core_type = #tpu.core_type<tc>, window_params = [{transform_indices = @transform_0, window_bounds = array<i64: 512, 128>}, {transform_indices = @transform_1, window_bounds = array<i64: 128, 128>}, {transform_indices = @transform_2, window_bounds = array<i64: 512, 128>}, {pipeline_mode = #tpu.pipeline_mode<synchronous>, transform_indices = @transform_3, window_bounds = array<i64: 1, 128>}, {pipeline_mode = #tpu.pipeline_mode<synchronous>, transform_indices = @transform_4, window_bounds = array<i64: 1, 128>}, {pipeline_mode = #tpu.pipeline_mode<synchronous>, transform_indices = @transform_5, window_bounds = array<i64: 1, 128>}]} {
    %c0_i32 = arith.constant 0 : i32
    %0 = arith.cmpi eq, %arg1, %c0_i32 : i32
    %c0_i32_0 = arith.constant 0 : i32
    %1 = arith.cmpi eq, %arg1, %c0_i32_0 : i32
    %2 = arith.extui %1 : i1 to i32
    %c0_i32_1 = arith.constant 0 : i32
    %3 = arith.cmpi ne, %2, %c0_i32_1 : i32
    scf.if %3 {
      %cst_15 = arith.constant 0.000000e+00 : f32
      %28 = vector.broadcast %cst_15 : f32 to vector<512x128xf32>
      %c0_16 = arith.constant 0 : index
      %c0_17 = arith.constant 0 : index
      %29 = vector.load %arg8[%c0_16, %c0_17] : memref<512x128xf32, #tpu.memory_space<vmem>>, vector<512x128xf32>
      tpu.vector_store %arg8[%c0_16, %c0_17], %28 {strides = array<i32>} : memref<512x128xf32, #tpu.memory_space<vmem>>, vector<512x128xf32>,
    } else {
    }
    %c0 = arith.constant 0 : index
    %c0_2 = arith.constant 0 : index
    %4 = vector.load %arg8[%c0, %c0_2] : memref<512x128xf32, #tpu.memory_space<vmem>>, vector<512x128xf32>
    %c0_3 = arith.constant 0 : index
    %c0_4 = arith.constant 0 : index
    %5 = vector.load %arg2[%c0_3, %c0_4] : memref<512x128xbf16, #tpu.memory_space<vmem>>, vector<512x128xbf16>
    %c0_5 = arith.constant 0 : index
    %c0_6 = arith.constant 0 : index
    %6 = vector.load %arg3[%c0_5, %c0_6] : memref<128x128xbf16, #tpu.memory_space<vmem>>, vector<128x128xbf16>
    %cst = arith.constant dense<0.000000e+00> : vector<512x128xf32>
    %7 = tpu.matmul %5, %6, %cst {dimension_numbers = #tpu.dot_dimension_numbers<[1], [0], [0], [1], [0, 0, 1, 1], [], []>} : vector<512x128xbf16>, vector<128x128xbf16>, vector<512x128xf32> -> vector<512x128xf32>
    %8 = arith.addf %4, %7 : vector<512x128xf32>
    %c0_7 = arith.constant 0 : index
    %c0_8 = arith.constant 0 : index
    %9 = vector.load %arg8[%c0_7, %c0_8] : memref<512x128xf32, #tpu.memory_space<vmem>>, vector<512x128xf32>
    tpu.vector_store %arg8[%c0_7, %c0_8], %8 {strides = array<i32>} : memref<512x128xf32, #tpu.memory_space<vmem>>, vector<512x128xf32>,
    %10 = arith.extui %0 : i1 to i32
    %c0_i32_9 = arith.constant 0 : i32
    %11 = arith.cmpi ne, %10, %c0_i32_9 : i32
    scf.if %11 {
      %c0_15 = arith.constant 0 : index
      %c0_16 = arith.constant 0 : index
      %28 = vector.load %arg8[%c0_15, %c0_16] : memref<512x128xf32, #tpu.memory_space<vmem>>, vector<512x128xf32>
      %29 = arith.truncf %28 : vector<512x128xf32> to vector<512x128xbf16>
      %c0_17 = arith.constant 0 : index
      %c0_18 = arith.constant 0 : index
      %30 = vector.load %arg4[%c0_17, %c0_18] : memref<512x128xbf16, #tpu.memory_space<vmem>>, vector<512x128xbf16>
      tpu.vector_store %arg4[%c0_17, %c0_18], %29 {strides = array<i32>} : memref<512x128xbf16, #tpu.memory_space<vmem>>, vector<512x128xbf16>,
    } else {
    }
    %c512_i32 = arith.constant 512 : i32
    %12 = arith.muli %arg0, %c512_i32 : i32
    %13 = tpu.iota {dimensions = array<i32: 0>} : vector<512x128xi32>
    %14 = vector.broadcast %12 : i32 to vector<512x128xi32>
    %15 = arith.addi %14, %13 : vector<512x128xi32>
    %c512_i32_10 = arith.constant 512 : i32
    %16 = vector.broadcast %c512_i32_10 : i32 to vector<512x128xi32>
    %17 = arith.cmpi slt, %15, %16 : vector<512x128xi32>
    %18 = arith.extui %17 : vector<512x128xi1> to vector<512x128xi32>
    %19 = arith.sitofp %18 : vector<512x128xi32> to vector<512x128xf32>
    %c0_i32_11 = arith.constant 0 : i32
    %20 = arith.cmpi eq, %arg0, %c0_i32_11 : i32
    %21 = arith.andi %0, %20 : i1
    %22 = arith.extui %21 : i1 to i32
    %c0_i32_12 = arith.constant 0 : i32
    %23 = arith.cmpi ne, %22, %c0_i32_12 : i32
    scf.if %23 {
      %c0_15 = arith.constant 0 : index
      %c0_16 = arith.constant 0 : index
      %28 = vector.load %arg8[%c0_15, %c0_16] : memref<512x128xf32, #tpu.memory_space<vmem>>, vector<512x128xf32>
      %29 = arith.mulf %28, %19 : vector<512x128xf32>
      %cst_17 = arith.constant dense<0.000000e+00> : vector<128xf32>
      %30 = vector.multi_reduction <add>, %29, %cst_17 [0] : vector<512x128xf32> to vector<128xf32>
      %31 = vector.shape_cast %30 : vector<128xf32> to vector<1x128xf32>
      %cst_18 = arith.constant 0.001953125 : f32
      %32 = vector.broadcast %cst_18 : f32 to vector<1x128xf32>
      %33 = arith.mulf %31, %32 : vector<1x128xf32>
      %c0_19 = arith.constant 0 : index
      %c0_20 = arith.constant 0 : index
      %34 = vector.load %arg8[%c0_19, %c0_20] : memref<512x128xf32, #tpu.memory_space<vmem>>, vector<512x128xf32>
      %35 = vector.broadcast %33 : vector<1x128xf32> to vector<512x128xf32>
      %36 = arith.subf %34, %35 : vector<512x128xf32>
      %37 = arith.mulf %36, %19 : vector<512x128xf32>
      %c0_21 = arith.constant 0 : index
      %c0_22 = arith.constant 0 : index
      %38 = vector.load %arg7[%c0_21, %c0_22] : memref<1x128xf32, #tpu.memory_space<vmem>>, vector<1x128xf32>
      tpu.vector_store %arg7[%c0_21, %c0_22], %33 {strides = array<i32>} : memref<1x128xf32, #tpu.memory_space<vmem>>, vector<1x128xf32>,
      %c0_23 = arith.constant 0 : index
      %c0_24 = arith.constant 0 : index
      %39 = vector.load %arg5[%c0_23, %c0_24] : memref<1x128xf32, #tpu.memory_space<vmem>>, vector<1x128xf32>
      tpu.vector_store %arg5[%c0_23, %c0_24], %31 {strides = array<i32>} : memref<1x128xf32, #tpu.memory_space<vmem>>, vector<1x128xf32>,
      %40 = arith.mulf %37, %37 : vector<512x128xf32>
      %cst_25 = arith.constant dense<0.000000e+00> : vector<128xf32>
      %41 = vector.multi_reduction <add>, %40, %cst_25 [0] : vector<512x128xf32> to vector<128xf32>
      %42 = vector.shape_cast %41 : vector<128xf32> to vector<1x128xf32>
      %c0_26 = arith.constant 0 : index
      %c0_27 = arith.constant 0 : index
      %43 = vector.load %arg6[%c0_26, %c0_27] : memref<1x128xf32, #tpu.memory_space<vmem>>, vector<1x128xf32>
      tpu.vector_store %arg6[%c0_26, %c0_27], %42 {strides = array<i32>} : memref<1x128xf32, #tpu.memory_space<vmem>>, vector<1x128xf32>,
    } else {
    }
    %c0_i32_13 = arith.constant 0 : i32
    %24 = arith.cmpi ne, %arg0, %c0_i32_13 : i32
    %25 = arith.andi %0, %24 : i1
    %26 = arith.extui %25 : i1 to i32
    %c0_i32_14 = arith.constant 0 : i32
    %27 = arith.cmpi ne, %26, %c0_i32_14 : i32
    scf.if %27 {
      %c0_15 = arith.constant 0 : index
      %c0_16 = arith.constant 0 : index
      %28 = vector.load %arg8[%c0_15, %c0_16] : memref<512x128xf32, #tpu.memory_space<vmem>>, vector<512x128xf32>
      %29 = arith.mulf %28, %19 : vector<512x128xf32>
      %c0_17 = arith.constant 0 : index
      %c0_18 = arith.constant 0 : index
      %30 = vector.load %arg7[%c0_17, %c0_18] : memref<1x128xf32, #tpu.memory_space<vmem>>, vector<1x128xf32>
      %c0_19 = arith.constant 0 : index
      %c0_20 = arith.constant 0 : index
      %31 = vector.load %arg8[%c0_19, %c0_20] : memref<512x128xf32, #tpu.memory_space<vmem>>, vector<512x128xf32>
      %32 = vector.broadcast %30 : vector<1x128xf32> to vector<512x128xf32>
      %33 = arith.subf %31, %32 : vector<512x128xf32>
      %34 = arith.mulf %33, %19 : vector<512x128xf32>
      %c0_21 = arith.constant 0 : index
      %c0_22 = arith.constant 0 : index
      %35 = vector.load %arg5[%c0_21, %c0_22] : memref<1x128xf32, #tpu.memory_space<vmem>>, vector<1x128xf32>
      %cst_23 = arith.constant dense<0.000000e+00> : vector<128xf32>
      %36 = vector.multi_reduction <add>, %29, %cst_23 [0] : vector<512x128xf32> to vector<128xf32>
      %37 = vector.shape_cast %36 : vector<128xf32> to vector<1x128xf32>
      %38 = arith.addf %35, %37 : vector<1x128xf32>
      %c0_24 = arith.constant 0 : index
      %c0_25 = arith.constant 0 : index
      %39 = vector.load %arg5[%c0_24, %c0_25] : memref<1x128xf32, #tpu.memory_space<vmem>>, vector<1x128xf32>
      tpu.vector_store %arg5[%c0_24, %c0_25], %38 {strides = array<i32>} : memref<1x128xf32, #tpu.memory_space<vmem>>, vector<1x128xf32>,
      %c0_26 = arith.constant 0 : index
      %c0_27 = arith.constant 0 : index
      %40 = vector.load %arg6[%c0_26, %c0_27] : memref<1x128xf32, #tpu.memory_space<vmem>>, vector<1x128xf32>
      %41 = arith.mulf %34, %34 : vector<512x128xf32>
      %cst_28 = arith.constant dense<0.000000e+00> : vector<128xf32>
      %42 = vector.multi_reduction <add>, %41, %cst_28 [0] : vector<512x128xf32> to vector<128xf32>
      %43 = vector.shape_cast %42 : vector<128xf32> to vector<1x128xf32>
      %44 = arith.addf %40, %43 : vector<1x128xf32>
      %c0_29 = arith.constant 0 : index
      %c0_30 = arith.constant 0 : index
      %45 = vector.load %arg6[%c0_29, %c0_30] : memref<1x128xf32, #tpu.memory_space<vmem>>, vector<1x128xf32>
      tpu.vector_store %arg6[%c0_29, %c0_30], %44 {strides = array<i32>} : memref<1x128xf32, #tpu.memory_space<vmem>>, vector<1x128xf32>,
    } else {
    }
    return
  }
  func.func @transform_0(%arg0: i32, %arg1: i32) -> (i32, i32) {
    %c0_i32 = arith.constant 0 : i32
    return %arg0, %arg1 : i32, i32
  }
  func.func @transform_1(%arg0: i32, %arg1: i32) -> (i32, i32) {
    %c0_i32 = arith.constant 0 : i32
    %c0_i32_0 = arith.constant 0 : i32
    return %arg1, %c0_i32 : i32, i32
  }
  func.func @transform_2(%arg0: i32, %arg1: i32) -> (i32, i32) {
    %c0_i32 = arith.constant 0 : i32
    %c0_i32_0 = arith.constant 0 : i32
    return %arg0, %c0_i32 : i32, i32
  }
  func.func @transform_3(%arg0: i32, %arg1: i32) -> (i32, i32) {
    %c0_i32 = arith.constant 0 : i32
    %c0_i32_0 = arith.constant 0 : i32
    %c0_i32_1 = arith.constant 0 : i32
    return %c0_i32, %c0_i32_0 : i32, i32
  }
  func.func @transform_4(%arg0: i32, %arg1: i32) -> (i32, i32) {
    %c0_i32 = arith.constant 0 : i32
    %c0_i32_0 = arith.constant 0 : i32
    %c0_i32_1 = arith.constant 0 : i32
    return %c0_i32, %c0_i32_0 : i32, i32
  }
  func.func @transform_5(%arg0: i32, %arg1: i32) -> (i32, i32) {
    %c0_i32 = arith.constant 0 : i32
    %c0_i32_0 = arith.constant 0 : i32
    %c0_i32_1 = arith.constant 0 : i32
    return %c0_i32, %c0_i32_0 : i32, i32
  }
}

module attributes {stable_mosaic.version = 11 : i64} {
  func.func @bn_relu6_kernel(%arg0: i32, %arg1: memref<512x128xbf16, #tpu.memory_space<vmem>>, %arg2: memref<1x128xf32, #tpu.memory_space<vmem>>, %arg3: memref<1x128xf32, #tpu.memory_space<vmem>>, %arg4: memref<512x128xbf16, #tpu.memory_space<vmem>>) attributes {dimension_semantics = [#tpu.dimension_semantics<parallel>], iteration_bounds = array<i64: 1>, scalar_prefetch = 0 : i64, scratch_operands = 0 : i64, tpu.core_type = #tpu.core_type<tc>, window_params = [{transform_indices = @transform_0, window_bounds = array<i64: 512, 128>}, {pipeline_mode = #tpu.pipeline_mode<synchronous>, transform_indices = @transform_1, window_bounds = array<i64: 1, 128>}, {pipeline_mode = #tpu.pipeline_mode<synchronous>, transform_indices = @transform_2, window_bounds = array<i64: 1, 128>}, {transform_indices = @transform_3, window_bounds = array<i64: 512, 128>}]} {
    %c0 = arith.constant 0 : index
    %c0_0 = arith.constant 0 : index
    %0 = vector.load %arg1[%c0, %c0_0] : memref<512x128xbf16, #tpu.memory_space<vmem>>, vector<512x128xbf16>
    %1 = arith.extf %0 : vector<512x128xbf16> to vector<512x128xf32>
    %c0_1 = arith.constant 0 : index
    %c0_2 = arith.constant 0 : index
    %2 = vector.load %arg2[%c0_1, %c0_2] : memref<1x128xf32, #tpu.memory_space<vmem>>, vector<1x128xf32>
    %3 = vector.broadcast %2 : vector<1x128xf32> to vector<512x128xf32>
    %4 = arith.mulf %1, %3 : vector<512x128xf32>
    %c0_3 = arith.constant 0 : index
    %c0_4 = arith.constant 0 : index
    %5 = vector.load %arg3[%c0_3, %c0_4] : memref<1x128xf32, #tpu.memory_space<vmem>>, vector<1x128xf32>
    %6 = vector.broadcast %5 : vector<1x128xf32> to vector<512x128xf32>
    %7 = arith.addf %4, %6 : vector<512x128xf32>
    %cst = arith.constant 0.000000e+00 : f32
    %cst_5 = arith.constant 6.000000e+00 : f32
    %8 = vector.broadcast %cst : f32 to vector<512x128xf32>
    %9 = arith.maximumf %8, %7 : vector<512x128xf32>
    %10 = vector.broadcast %cst_5 : f32 to vector<512x128xf32>
    %11 = arith.minimumf %10, %9 : vector<512x128xf32>
    %12 = arith.truncf %11 : vector<512x128xf32> to vector<512x128xbf16>
    %c0_6 = arith.constant 0 : index
    %c0_7 = arith.constant 0 : index
    %13 = vector.load %arg4[%c0_6, %c0_7] : memref<512x128xbf16, #tpu.memory_space<vmem>>, vector<512x128xbf16>
    tpu.vector_store %arg4[%c0_6, %c0_7], %12 {strides = array<i32>} : memref<512x128xbf16, #tpu.memory_space<vmem>>, vector<512x128xbf16>,
    return
  }
  func.func @transform_0(%arg0: i32) -> (i32, i32) {
    %c0_i32 = arith.constant 0 : i32
    %c0_i32_0 = arith.constant 0 : i32
    return %arg0, %c0_i32 : i32, i32
  }
  func.func @transform_1(%arg0: i32) -> (i32, i32) {
    %c0_i32 = arith.constant 0 : i32
    %c0_i32_0 = arith.constant 0 : i32
    %c0_i32_1 = arith.constant 0 : i32
    return %c0_i32, %c0_i32_0 : i32, i32
  }
  func.func @transform_2(%arg0: i32) -> (i32, i32) {
    %c0_i32 = arith.constant 0 : i32
    %c0_i32_0 = arith.constant 0 : i32
    %c0_i32_1 = arith.constant 0 : i32
    return %c0_i32, %c0_i32_0 : i32, i32
  }
  func.func @transform_3(%arg0: i32) -> (i32, i32) {
    %c0_i32 = arith.constant 0 : i32
    %c0_i32_0 = arith.constant 0 : i32
    return %arg0, %c0_i32 : i32, i32
  }
}

</mosaic_0001>

<llo_original>
// kernel: basic_conv2d_forward.3
$region0: #{basic_conv2d_forward.3}
  #allocation0 [shape = 'u32[]', space=smem, size = 0x4, offset = 0x4, fixed_abs, tag = 'smem constant byte address 0x4 - core index']
  #allocation1 [shape = 'u32[72,128]{1,0:T(1,128)}', space=vmem, size = 0x9000, scoped, tag = 'internal scratch']
  %s0 = inlined_call_operand.vmem [shape: bf16[512,128], index: 0, kind: input, shape index: {}, may-alias: {0,3}]
  %s1 = inlined_call_operand.vmem [shape: f32[1,128], index: 1, kind: input, shape index: {}]
  %s2 = inlined_call_operand.vmem [shape: f32[1,128], index: 2, kind: input, shape index: {}]
  %s3 = inlined_call_operand.vmem [shape: bf16[512,128], index: 3, kind: output, shape index: {}, may-alias: {0,3}]
  %s4 = sld [smem:[#allocation0]]
  $region22: #{basic_conv2d_forward.3} parent=0
    _
  %s6 = ssub.s32 1, %s4
  %s7 = scalar_select 0, %s6, %s4
  // Predicated region
  $region2: #{basic_conv2d_forward.3} parent=0 // pred_check
    _
  $region3: #{basic_conv2d_forward.3} parent=0 // pred_check_branch
    %9 = sbr.rel (0) target = $region5
  $region4: #{basic_conv2d_forward.3} parent=0 // pred_region
    _
  $region5: #{basic_conv2d_forward.3} parent=0 // pred_fallthru
    _
  // Predicated region
  $region6: #{basic_conv2d_forward.3} parent=0 // pred_check
    _
  $region7: #{basic_conv2d_forward.3} parent=0 // pred_check_branch
    %11 = sbr.rel (0) target = $region9
  $region8: #{basic_conv2d_forward.3} parent=0 // pred_region
    _
  $region9: #{basic_conv2d_forward.3} parent=0 // pred_fallthru
    _
  // Predicated region
  $region10: #{basic_conv2d_forward.3} parent=0 // pred_check
    _
  $region11: #{basic_conv2d_forward.3} parent=0 // pred_check_branch
    %13 = sbr.rel (0) target = $region13
  $region12: #{basic_conv2d_forward.3} parent=0 // pred_region
    _
  $region13: #{basic_conv2d_forward.3} parent=0 // pred_fallthru
    _
  %v14 = vld [vmem:[%s0] sm:$0xf]
  %v15 = vld [vmem:[%s0 + $0x4] sm:$0xf]
  %v16 = vld [vmem:[%s0 + $0x8] sm:$0xf]
  %v17 = vld [vmem:[%s0 + $0xc] sm:$0xf]
  %v18 = vld [vmem:[%s0 + $0x10] sm:$0xf]
  %v19 = vld [vmem:[%s0 + $0x14] sm:$0xf]
  %v20 = vld [vmem:[%s0 + $0x18] sm:$0xf]
  %v21 = vld [vmem:[%s0 + $0x1c] sm:$0xf]
  %v22 = vld [vmem:[%s0 + $0x20] sm:$0xf]
  %v23 = vld [vmem:[%s0 + $0x24] sm:$0xf]
  %v24 = vld [vmem:[%s0 + $0x28] sm:$0xf]
  %v25 = vld [vmem:[%s0 + $0x2c] sm:$0xf]
  %v26 = vld [vmem:[%s0 + $0x30] sm:$0xf]
  %v27 = vld [vmem:[%s0 + $0x34] sm:$0xf]
  %v28 = vld [vmem:[%s0 + $0x38] sm:$0xf]
  %v29 = vld [vmem:[%s0 + $0x3c] sm:$0xf]
  %v30 = vld [vmem:[%s0 + $0x40] sm:$0xf]
  %v31 = vld [vmem:[%s0 + $0x44] sm:$0xf]
  %v32 = vld [vmem:[%s0 + $0x48] sm:$0xf]
  %v33 = vld [vmem:[%s0 + $0x4c] sm:$0xf]
  %v34 = vld [vmem:[%s0 + $0x50] sm:$0xf]
  %v35 = vld [vmem:[%s0 + $0x54] sm:$0xf]
  %v36 = vld [vmem:[%s0 + $0x58] sm:$0xf]
  %v37 = vld [vmem:[%s0 + $0x5c] sm:$0xf]
  %v38 = vld [vmem:[%s0 + $0x60] sm:$0xf]
  %v39 = vld [vmem:[%s0 + $0x64] sm:$0xf]
  %v40 = vld [vmem:[%s0 + $0x68] sm:$0xf]
  %v41 = vld [vmem:[%s0 + $0x6c] sm:$0xf]
  %v42 = vld [vmem:[%s0 + $0x70] sm:$0xf]
  %v43 = vld [vmem:[%s0 + $0x74] sm:$0xf]
  %v44 = vld [vmem:[%s0 + $0x78] sm:$0xf]
  %v45 = vld [vmem:[%s0 + $0x7c] sm:$0xf]
  %v46 = vld [vmem:[%s0 + $0x80] sm:$0xf]
  %v47 = vld [vmem:[%s0 + $0x84] sm:$0xf]
  %v48 = vld [vmem:[%s0 + $0x88] sm:$0xf]
  %v49 = vld [vmem:[%s0 + $0x8c] sm:$0xf]
  %v50 = vld [vmem:[%s0 + $0x90] sm:$0xf]
  %v51 = vld [vmem:[%s0 + $0x94] sm:$0xf]
  %v52 = vld [vmem:[%s0 + $0x98] sm:$0xf]
  %v53 = vld [vmem:[%s0 + $0x9c] sm:$0xf]
  %v54 = vld [vmem:[%s0 + $0xa0] sm:$0xf]
  %v55 = vld [vmem:[%s0 + $0xa4] sm:$0xf]
  %v56 = vld [vmem:[%s0 + $0xa8] sm:$0xf]
  %v57 = vld [vmem:[%s0 + $0xac] sm:$0xf]
  %v58 = vld [vmem:[%s0 + $0xb0] sm:$0xf]
  %v59 = vld [vmem:[%s0 + $0xb4] sm:$0xf]
  %v60 = vld [vmem:[%s0 + $0xb8] sm:$0xf]
  %v61 = vld [vmem:[%s0 + $0xbc] sm:$0xf]
  %v62 = vld [vmem:[%s0 + $0xc0] sm:$0xf]
  %v63 = vld [vmem:[%s0 + $0xc4] sm:$0xf]
  %v64 = vld [vmem:[%s0 + $0xc8] sm:$0xf]
  %v65 = vld [vmem:[%s0 + $0xcc] sm:$0xf]
  %v66 = vld [vmem:[%s0 + $0xd0] sm:$0xf]
  %v67 = vld [vmem:[%s0 + $0xd4] sm:$0xf]
  %v68 = vld [vmem:[%s0 + $0xd8] sm:$0xf]
  %v69 = vld [vmem:[%s0 + $0xdc] sm:$0xf]
  %v70 = vld [vmem:[%s0 + $0xe0] sm:$0xf]
  %v71 = vld [vmem:[%s0 + $0xe4] sm:$0xf]
  %v72 = vld [vmem:[%s0 + $0xe8] sm:$0xf]
  %v73 = vld [vmem:[%s0 + $0xec] sm:$0xf]
  %v74 = vld [vmem:[%s0 + $0xf0] sm:$0xf]
  %v75 = vld [vmem:[%s0 + $0xf4] sm:$0xf]
  %v76 = vld [vmem:[%s0 + $0xf8] sm:$0xf]
  %v77 = vld [vmem:[%s0 + $0xfc] sm:$0xf]
  %v78 = vunpack.c.l.bf16 %v14
  %v79 = vunpack.c.l.bf16 %v15
  %v80 = vunpack.c.l.bf16 %v16
  %v81 = vunpack.c.l.bf16 %v17
  %v82 = vunpack.c.l.bf16 %v18
  %v83 = vunpack.c.l.bf16 %v19
  %v84 = vunpack.c.l.bf16 %v20
  %v85 = vunpack.c.l.bf16 %v21
  %v86 = vunpack.c.l.bf16 %v22
  %v87 = vunpack.c.l.bf16 %v23
  %v88 = vunpack.c.l.bf16 %v24
  %v89 = vunpack.c.l.bf16 %v25
  %v90 = vunpack.c.l.bf16 %v26
  %v91 = vunpack.c.l.bf16 %v27
  %v92 = vunpack.c.l.bf16 %v28
  %v93 = vunpack.c.l.bf16 %v29
  %v94 = vunpack.c.l.bf16 %v30
  %v95 = vunpack.c.l.bf16 %v31
  %v96 = vunpack.c.l.bf16 %v32
  %v97 = vunpack.c.l.bf16 %v33
  %v98 = vunpack.c.l.bf16 %v34
  %v99 = vunpack.c.l.bf16 %v35
  %v100 = vunpack.c.l.bf16 %v36
  %v101 = vunpack.c.l.bf16 %v37
  %v102 = vunpack.c.l.bf16 %v38
  %v103 = vunpack.c.l.bf16 %v39
  %v104 = vunpack.c.l.bf16 %v40
  %v105 = vunpack.c.l.bf16 %v41
  %v106 = vunpack.c.l.bf16 %v42
  %v107 = vunpack.c.l.bf16 %v43
  %v108 = vunpack.c.l.bf16 %v44
  %v109 = vunpack.c.l.bf16 %v45
  %v110 = vunpack.c.l.bf16 %v46
  %v111 = vunpack.c.l.bf16 %v47
  %v112 = vunpack.c.l.bf16 %v48
  %v113 = vunpack.c.l.bf16 %v49
  %v114 = vunpack.c.l.bf16 %v50
  %v115 = vunpack.c.l.bf16 %v51
  %v116 = vunpack.c.l.bf16 %v52
  %v117 = vunpack.c.l.bf16 %v53
  %v118 = vunpack.c.l.bf16 %v54
  %v119 = vunpack.c.l.bf16 %v55
  %v120 = vunpack.c.l.bf16 %v56
  %v121 = vunpack.c.l.bf16 %v57
  %v122 = vunpack.c.l.bf16 %v58
  %v123 = vunpack.c.l.bf16 %v59
  %v124 = vunpack.c.l.bf16 %v60
  %v125 = vunpack.c.l.bf16 %v61
  %v126 = vunpack.c.l.bf16 %v62
  %v127 = vunpack.c.l.bf16 %v63
  %v128 = vunpack.c.l.bf16 %v64
  %v129 = vunpack.c.l.bf16 %v65
  %v130 = vunpack.c.l.bf16 %v66
  %v131 = vunpack.c.l.bf16 %v67
  %v132 = vunpack.c.l.bf16 %v68
  %v133 = vunpack.c.l.bf16 %v69
  %v134 = vunpack.c.l.bf16 %v70
  %v135 = vunpack.c.l.bf16 %v71
  %v136 = vunpack.c.l.bf16 %v72
  %v137 = vunpack.c.l.bf16 %v73
  %v138 = vunpack.c.l.bf16 %v74
  %v139 = vunpack.c.l.bf16 %v75
  %v140 = vunpack.c.l.bf16 %v76
  %v141 = vunpack.c.l.bf16 %v77
  %v142 = vld [vmem:[%s1] sm:$0x1]
  %v144 = vperm.slane %v142, 0
  %v146 = vmul.f32 %v78, %v144
  %v147 = vmul.f32 %v79, %v144
  %v148 = vmul.f32 %v80, %v144
  %v149 = vmul.f32 %v81, %v144
  %v150 = vmul.f32 %v82, %v144
  %v151 = vmul.f32 %v83, %v144
  %v152 = vmul.f32 %v84, %v144
  %v153 = vmul.f32 %v85, %v144
  %v154 = vmul.f32 %v86, %v144
  %v155 = vmul.f32 %v87, %v144
  %v156 = vmul.f32 %v88, %v144
  %v157 = vmul.f32 %v89, %v144
  %v158 = vmul.f32 %v90, %v144
  %v159 = vmul.f32 %v91, %v144
  %v160 = vmul.f32 %v92, %v144
  %v161 = vmul.f32 %v93, %v144
  %v162 = vmul.f32 %v94, %v144
  %v163 = vmul.f32 %v95, %v144
  %v164 = vmul.f32 %v96, %v144
  %v165 = vmul.f32 %v97, %v144
  %v166 = vmul.f32 %v98, %v144
  %v167 = vmul.f32 %v99, %v144
  %v168 = vmul.f32 %v100, %v144
  %v169 = vmul.f32 %v101, %v144
  %v170 = vmul.f32 %v102, %v144
  %v171 = vmul.f32 %v103, %v144
  %v172 = vmul.f32 %v104, %v144
  %v173 = vmul.f32 %v105, %v144
  %v174 = vmul.f32 %v106, %v144
  %v175 = vmul.f32 %v107, %v144
  %v176 = vmul.f32 %v108, %v144
  %v177 = vmul.f32 %v109, %v144
  %v178 = vmul.f32 %v110, %v144
  %v179 = vmul.f32 %v111, %v144
  %v180 = vmul.f32 %v112, %v144
  %v181 = vmul.f32 %v113, %v144
  %v182 = vmul.f32 %v114, %v144
  %v183 = vmul.f32 %v115, %v144
  %v184 = vmul.f32 %v116, %v144
  %v185 = vmul.f32 %v117, %v144
  %v186 = vmul.f32 %v118, %v144
  %v187 = vmul.f32 %v119, %v144
  %v188 = vmul.f32 %v120, %v144
  %v189 = vmul.f32 %v121, %v144
  %v190 = vmul.f32 %v122, %v144
  %v191 = vmul.f32 %v123, %v144
  %v192 = vmul.f32 %v124, %v144
  %v193 = vmul.f32 %v125, %v144
  %v194 = vmul.f32 %v126, %v144
  %v195 = vmul.f32 %v127, %v144
  %v196 = vmul.f32 %v128, %v144
  %v197 = vmul.f32 %v129, %v144
  %v198 = vmul.f32 %v130, %v144
  %v199 = vmul.f32 %v131, %v144
  %v200 = vmul.f32 %v132, %v144
  %v201 = vmul.f32 %v133, %v144
  %v202 = vmul.f32 %v134, %v144
  %v203 = vmul.f32 %v135, %v144
  %v204 = vmul.f32 %v136, %v144
  %v205 = vmul.f32 %v137, %v144
  %v206 = vmul.f32 %v138, %v144
  %v207 = vmul.f32 %v139, %v144
  %v208 = vmul.f32 %v140, %v144
  %v209 = vmul.f32 %v141, %v144
  %v210 = vld [vmem:[%s2] sm:$0x1]
  %v212 = vperm.slane %v210, 0
  %v214 = vadd.f32 %v146, %v212
  %v215 = vadd.f32 %v147, %v212
  %v216 = vadd.f32 %v148, %v212
  %v217 = vadd.f32 %v149, %v212
  %v218 = vadd.f32 %v150, %v212
  %v219 = vadd.f32 %v151, %v212
  %v220 = vadd.f32 %v152, %v212
  %v221 = vadd.f32 %v153, %v212
  %v222 = vadd.f32 %v154, %v212
  %v223 = vadd.f32 %v155, %v212
  %v224 = vadd.f32 %v156, %v212
  %v225 = vadd.f32 %v157, %v212
  %v226 = vadd.f32 %v158, %v212
  %v227 = vadd.f32 %v159, %v212
  %v228 = vadd.f32 %v160, %v212
  %v229 = vadd.f32 %v161, %v212
  %v230 = vadd.f32 %v162, %v212
  %v231 = vadd.f32 %v163, %v212
  %v232 = vadd.f32 %v164, %v212
  %v233 = vadd.f32 %v165, %v212
  %v234 = vadd.f32 %v166, %v212
  %v235 = vadd.f32 %v167, %v212
  %v236 = vadd.f32 %v168, %v212
  %v237 = vadd.f32 %v169, %v212
  %v238 = vadd.f32 %v170, %v212
  %v239 = vadd.f32 %v171, %v212
  %v240 = vadd.f32 %v172, %v212
  %v241 = vadd.f32 %v173, %v212
  %v242 = vadd.f32 %v174, %v212
  %v243 = vadd.f32 %v175, %v212
  %v244 = vadd.f32 %v176, %v212
  %v245 = vadd.f32 %v177, %v212
  %v246 = vadd.f32 %v178, %v212
  %v247 = vadd.f32 %v179, %v212
  %v248 = vadd.f32 %v180, %v212
  %v249 = vadd.f32 %v181, %v212
  %v250 = vadd.f32 %v182, %v212
  %v251 = vadd.f32 %v183, %v212
  %v252 = vadd.f32 %v184, %v212
  %v253 = vadd.f32 %v185, %v212
  %v254 = vadd.f32 %v186, %v212
  %v255 = vadd.f32 %v187, %v212
  %v256 = vadd.f32 %v188, %v212
  %v257 = vadd.f32 %v189, %v212
  %v258 = vadd.f32 %v190, %v212
  %v259 = vadd.f32 %v191, %v212
  %v260 = vadd.f32 %v192, %v212
  %v261 = vadd.f32 %v193, %v212
  %v262 = vadd.f32 %v194, %v212
  %v263 = vadd.f32 %v195, %v212
  %v264 = vadd.f32 %v196, %v212
  %v265 = vadd.f32 %v197, %v212
  %v266 = vadd.f32 %v198, %v212
  %v267 = vadd.f32 %v199, %v212
  %v268 = vadd.f32 %v200, %v212
  %v269 = vadd.f32 %v201, %v212
  %v270 = vadd.f32 %v202, %v212
  %v271 = vadd.f32 %v203, %v212
  %v272 = vadd.f32 %v204, %v212
  %v273 = vadd.f32 %v205, %v212
  %v274 = vadd.f32 %v206, %v212
  %v275 = vadd.f32 %v207, %v212
  %v276 = vadd.f32 %v208, %v212
  %v277 = vadd.f32 %v209, %v212
  %v278 = vmax.f32 %v214, 0.0
  %v279 = vmax.f32 %v215, 0.0
  %v280 = vmax.f32 %v216, 0.0
  %v281 = vmax.f32 %v217, 0.0
  %v282 = vmax.f32 %v218, 0.0
  %v283 = vmax.f32 %v219, 0.0
  %v284 = vmax.f32 %v220, 0.0
  %v285 = vmax.f32 %v221, 0.0
  %v286 = vmax.f32 %v222, 0.0
  %v287 = vmax.f32 %v223, 0.0
  %v288 = vmax.f32 %v224, 0.0
  %v289 = vmax.f32 %v225, 0.0
  %v290 = vmax.f32 %v226, 0.0
  %v291 = vmax.f32 %v227, 0.0
  %v292 = vmax.f32 %v228, 0.0
  %v293 = vmax.f32 %v229, 0.0
  %v294 = vmax.f32 %v230, 0.0
  %v295 = vmax.f32 %v231, 0.0
  %v296 = vmax.f32 %v232, 0.0
  %v297 = vmax.f32 %v233, 0.0
  %v298 = vmax.f32 %v234, 0.0
  %v299 = vmax.f32 %v235, 0.0
  %v300 = vmax.f32 %v236, 0.0
  %v301 = vmax.f32 %v237, 0.0
  %v302 = vmax.f32 %v238, 0.0
  %v303 = vmax.f32 %v239, 0.0
  %v304 = vmax.f32 %v240, 0.0
  %v305 = vmax.f32 %v241, 0.0
  %v306 = vmax.f32 %v242, 0.0
  %v307 = vmax.f32 %v243, 0.0
  %v308 = vmax.f32 %v244, 0.0
  %v309 = vmax.f32 %v245, 0.0
  %v310 = vmax.f32 %v246, 0.0
  %v311 = vmax.f32 %v247, 0.0
  %v312 = vmax.f32 %v248, 0.0
  %v313 = vmax.f32 %v249, 0.0
  %v314 = vmax.f32 %v250, 0.0
  %v315 = vmax.f32 %v251, 0.0
  %v316 = vmax.f32 %v252, 0.0
  %v317 = vmax.f32 %v253, 0.0
  %v318 = vmax.f32 %v254, 0.0
  %v319 = vmax.f32 %v255, 0.0
  %v320 = vmax.f32 %v256, 0.0
  %v321 = vmax.f32 %v257, 0.0
  %v322 = vmax.f32 %v258, 0.0
  %v323 = vmax.f32 %v259, 0.0
  %v324 = vmax.f32 %v260, 0.0
  %v325 = vmax.f32 %v261, 0.0
  %v326 = vmax.f32 %v262, 0.0
  %v327 = vmax.f32 %v263, 0.0
  %v328 = vmax.f32 %v264, 0.0
  %v329 = vmax.f32 %v265, 0.0
  %v330 = vmax.f32 %v266, 0.0
  %v331 = vmax.f32 %v267, 0.0
  %v332 = vmax.f32 %v268, 0.0
  %v333 = vmax.f32 %v269, 0.0
  %v334 = vmax.f32 %v270, 0.0
  %v335 = vmax.f32 %v271, 0.0
  %v336 = vmax.f32 %v272, 0.0
  %v337 = vmax.f32 %v273, 0.0
  %v338 = vmax.f32 %v274, 0.0
  %v339 = vmax.f32 %v275, 0.0
  %v340 = vmax.f32 %v276, 0.0
  %v341 = vmax.f32 %v277, 0.0
  %v342 = vmin.f32 %v278, 6.0
  %v343 = vmin.f32 %v279, 6.0
  %v344 = vmin.f32 %v280, 6.0
  %v345 = vmin.f32 %v281, 6.0
  %v346 = vmin.f32 %v282, 6.0
  %v347 = vmin.f32 %v283, 6.0
  %v348 = vmin.f32 %v284, 6.0
  %v349 = vmin.f32 %v285, 6.0
  %v350 = vmin.f32 %v286, 6.0
  %v351 = vmin.f32 %v287, 6.0
  %v352 = vmin.f32 %v288, 6.0
  %v353 = vmin.f32 %v289, 6.0
  %v354 = vmin.f32 %v290, 6.0
  %v355 = vmin.f32 %v291, 6.0
  %v356 = vmin.f32 %v292, 6.0
  %v357 = vmin.f32 %v293, 6.0
  %v358 = vmin.f32 %v294, 6.0
  %v359 = vmin.f32 %v295, 6.0
  %v360 = vmin.f32 %v296, 6.0
  %v361 = vmin.f32 %v297, 6.0
  %v362 = vmin.f32 %v298, 6.0
  %v363 = vmin.f32 %v299, 6.0
  %v364 = vmin.f32 %v300, 6.0
  %v365 = vmin.f32 %v301, 6.0
  %v366 = vmin.f32 %v302, 6.0
  %v367 = vmin.f32 %v303, 6.0
  %v368 = vmin.f32 %v304, 6.0
  %v369 = vmin.f32 %v305, 6.0
  %v370 = vmin.f32 %v306, 6.0
  %v371 = vmin.f32 %v307, 6.0
  %v372 = vmin.f32 %v308, 6.0
  %v373 = vmin.f32 %v309, 6.0
  %v374 = vmin.f32 %v310, 6.0
  %v375 = vmin.f32 %v311, 6.0
  %v376 = vmin.f32 %v312, 6.0
  %v377 = vmin.f32 %v313, 6.0
  %v378 = vmin.f32 %v314, 6.0
  %v379 = vmin.f32 %v315, 6.0
  %v380 = vmin.f32 %v316, 6.0
  %v381 = vmin.f32 %v317, 6.0
  %v382 = vmin.f32 %v318, 6.0
  %v383 = vmin.f32 %v319, 6.0
  %v384 = vmin.f32 %v320, 6.0
  %v385 = vmin.f32 %v321, 6.0
  %v386 = vmin.f32 %v322, 6.0
  %v387 = vmin.f32 %v323, 6.0
  %v388 = vmin.f32 %v324, 6.0
  %v389 = vmin.f32 %v325, 6.0
  %v390 = vmin.f32 %v326, 6.0
  %v391 = vmin.f32 %v327, 6.0
  %v392 = vmin.f32 %v328, 6.0
  %v393 = vmin.f32 %v329, 6.0
  %v394 = vmin.f32 %v330, 6.0
  %v395 = vmin.f32 %v331, 6.0
  %v396 = vmin.f32 %v332, 6.0
  %v397 = vmin.f32 %v333, 6.0
  %v398 = vmin.f32 %v334, 6.0
  %v399 = vmin.f32 %v335, 6.0
  %v400 = vmin.f32 %v336, 6.0
  %v401 = vmin.f32 %v337, 6.0
  %v402 = vmin.f32 %v338, 6.0
  %v403 = vmin.f32 %v339, 6.0
  %v404 = vmin.f32 %v340, 6.0
  %v405 = vmin.f32 %v341, 6.0
  %v406 = vpack.c.bf16 %v342, %v342
  %v407 = vpack.c.bf16 %v343, %v343
  %v408 = vpack.c.bf16 %v344, %v344
  %v409 = vpack.c.bf16 %v345, %v345
  %v410 = vpack.c.bf16 %v346, %v346
  %v411 = vpack.c.bf16 %v347, %v347
  %v412 = vpack.c.bf16 %v348, %v348
  %v413 = vpack.c.bf16 %v349, %v349
  %v414 = vpack.c.bf16 %v350, %v350
  %v415 = vpack.c.bf16 %v351, %v351
  %v416 = vpack.c.bf16 %v352, %v352
  %v417 = vpack.c.bf16 %v353, %v353
  %v418 = vpack.c.bf16 %v354, %v354
  %v419 = vpack.c.bf16 %v355, %v355
  %v420 = vpack.c.bf16 %v356, %v356
  %v421 = vpack.c.bf16 %v357, %v357
  %v422 = vpack.c.bf16 %v358, %v358
  %v423 = vpack.c.bf16 %v359, %v359
  %v424 = vpack.c.bf16 %v360, %v360
  %v425 = vpack.c.bf16 %v361, %v361
  %v426 = vpack.c.bf16 %v362, %v362
  %v427 = vpack.c.bf16 %v363, %v363
  %v428 = vpack.c.bf16 %v364, %v364
  %v429 = vpack.c.bf16 %v365, %v365
  %v430 = vpack.c.bf16 %v366, %v366
  %v431 = vpack.c.bf16 %v367, %v367
  %v432 = vpack.c.bf16 %v368, %v368
  %v433 = vpack.c.bf16 %v369, %v369
  %v434 = vpack.c.bf16 %v370, %v370
  %v435 = vpack.c.bf16 %v371, %v371
  %v436 = vpack.c.bf16 %v372, %v372
  %v437 = vpack.c.bf16 %v373, %v373
  %v438 = vpack.c.bf16 %v374, %v374
  %v439 = vpack.c.bf16 %v375, %v375
  %v440 = vpack.c.bf16 %v376, %v376
  %v441 = vpack.c.bf16 %v377, %v377
  %v442 = vpack.c.bf16 %v378, %v378
  %v443 = vpack.c.bf16 %v379, %v379
  %v444 = vpack.c.bf16 %v380, %v380
  %v445 = vpack.c.bf16 %v381, %v381
  %v446 = vpack.c.bf16 %v382, %v382
  %v447 = vpack.c.bf16 %v383, %v383
  %v448 = vpack.c.bf16 %v384, %v384
  %v449 = vpack.c.bf16 %v385, %v385
  %v450 = vpack.c.bf16 %v386, %v386
  %v451 = vpack.c.bf16 %v387, %v387
  %v452 = vpack.c.bf16 %v388, %v388
  %v453 = vpack.c.bf16 %v389, %v389
  %v454 = vpack.c.bf16 %v390, %v390
  %v455 = vpack.c.bf16 %v391, %v391
  %v456 = vpack.c.bf16 %v392, %v392
  %v457 = vpack.c.bf16 %v393, %v393
  %v458 = vpack.c.bf16 %v394, %v394
  %v459 = vpack.c.bf16 %v395, %v395
  %v460 = vpack.c.bf16 %v396, %v396
  %v461 = vpack.c.bf16 %v397, %v397
  %v462 = vpack.c.bf16 %v398, %v398
  %v463 = vpack.c.bf16 %v399, %v399
  %v464 = vpack.c.bf16 %v400, %v400
  %v465 = vpack.c.bf16 %v401, %v401
  %v466 = vpack.c.bf16 %v402, %v402
  %v467 = vpack.c.bf16 %v403, %v403
  %v468 = vpack.c.bf16 %v404, %v404
  %v469 = vpack.c.bf16 %v405, %v405
  %470 = vst [vmem:[%s3] sm:$0xf] %v406
  %471 = vst [vmem:[%s3 + $0x4] sm:$0xf] %v407
  %472 = vst [vmem:[%s3 + $0x8] sm:$0xf] %v408
  %473 = vst [vmem:[%s3 + $0xc] sm:$0xf] %v409
  %474 = vst [vmem:[%s3 + $0x10] sm:$0xf] %v410
  %475 = vst [vmem:[%s3 + $0x14] sm:$0xf] %v411
  %476 = vst [vmem:[%s3 + $0x18] sm:$0xf] %v412
  %477 = vst [vmem:[%s3 + $0x1c] sm:$0xf] %v413
  %478 = vst [vmem:[%s3 + $0x20] sm:$0xf] %v414
  %479 = vst [vmem:[%s3 + $0x24] sm:$0xf] %v415
  %480 = vst [vmem:[%s3 + $0x28] sm:$0xf] %v416
  %481 = vst [vmem:[%s3 + $0x2c] sm:$0xf] %v417
  %482 = vst [vmem:[%s3 + $0x30] sm:$0xf] %v418
  %483 = vst [vmem:[%s3 + $0x34] sm:$0xf] %v419
  %484 = vst [vmem:[%s3 + $0x38] sm:$0xf] %v420
  %485 = vst [vmem:[%s3 + $0x3c] sm:$0xf] %v421
  %486 = vst [vmem:[%s3 + $0x40] sm:$0xf] %v422
  %487 = vst [vmem:[%s3 + $0x44] sm:$0xf] %v423
  %488 = vst [vmem:[%s3 + $0x48] sm:$0xf] %v424
  %489 = vst [vmem:[%s3 + $0x4c] sm:$0xf] %v425
  %490 = vst [vmem:[%s3 + $0x50] sm:$0xf] %v426
  %491 = vst [vmem:[%s3 + $0x54] sm:$0xf] %v427
  %492 = vst [vmem:[%s3 + $0x58] sm:$0xf] %v428
  %493 = vst [vmem:[%s3 + $0x5c] sm:$0xf] %v429
  %494 = vst [vmem:[%s3 + $0x60] sm:$0xf] %v430
  %495 = vst [vmem:[%s3 + $0x64] sm:$0xf] %v431
  %496 = vst [vmem:[%s3 + $0x68] sm:$0xf] %v432
  %497 = vst [vmem:[%s3 + $0x6c] sm:$0xf] %v433
  %498 = vst [vmem:[%s3 + $0x70] sm:$0xf] %v434
  %499 = vst [vmem:[%s3 + $0x74] sm:$0xf] %v435
  %500 = vst [vmem:[%s3 + $0x78] sm:$0xf] %v436
  %501 = vst [vmem:[%s3 + $0x7c] sm:$0xf] %v437
  %502 = vst [vmem:[%s3 + $0x80] sm:$0xf] %v438
  %503 = vst [vmem:[%s3 + $0x84] sm:$0xf] %v439
  %504 = vst [vmem:[%s3 + $0x88] sm:$0xf] %v440
  %505 = vst [vmem:[%s3 + $0x8c] sm:$0xf] %v441
  %506 = vst [vmem:[%s3 + $0x90] sm:$0xf] %v442
  %507 = vst [vmem:[%s3 + $0x94] sm:$0xf] %v443
  %508 = vst [vmem:[%s3 + $0x98] sm:$0xf] %v444
  %509 = vst [vmem:[%s3 + $0x9c] sm:$0xf] %v445
  %510 = vst [vmem:[%s3 + $0xa0] sm:$0xf] %v446
  %511 = vst [vmem:[%s3 + $0xa4] sm:$0xf] %v447
  %512 = vst [vmem:[%s3 + $0xa8] sm:$0xf] %v448
  %513 = vst [vmem:[%s3 + $0xac] sm:$0xf] %v449
  %514 = vst [vmem:[%s3 + $0xb0] sm:$0xf] %v450
  %515 = vst [vmem:[%s3 + $0xb4] sm:$0xf] %v451
  %516 = vst [vmem:[%s3 + $0xb8] sm:$0xf] %v452
  %517 = vst [vmem:[%s3 + $0xbc] sm:$0xf] %v453
  %518 = vst [vmem:[%s3 + $0xc0] sm:$0xf] %v454
  %519 = vst [vmem:[%s3 + $0xc4] sm:$0xf] %v455
  %520 = vst [vmem:[%s3 + $0xc8] sm:$0xf] %v456
  %521 = vst [vmem:[%s3 + $0xcc] sm:$0xf] %v457
  %522 = vst [vmem:[%s3 + $0xd0] sm:$0xf] %v458
  %523 = vst [vmem:[%s3 + $0xd4] sm:$0xf] %v459
  %524 = vst [vmem:[%s3 + $0xd8] sm:$0xf] %v460
  %525 = vst [vmem:[%s3 + $0xdc] sm:$0xf] %v461
  %526 = vst [vmem:[%s3 + $0xe0] sm:$0xf] %v462
  %527 = vst [vmem:[%s3 + $0xe4] sm:$0xf] %v463
  %528 = vst [vmem:[%s3 + $0xe8] sm:$0xf] %v464
  %529 = vst [vmem:[%s3 + $0xec] sm:$0xf] %v465
  %530 = vst [vmem:[%s3 + $0xf0] sm:$0xf] %v466
  %531 = vst [vmem:[%s3 + $0xf4] sm:$0xf] %v467
  %532 = vst [vmem:[%s3 + $0xf8] sm:$0xf] %v468
  %533 = vst [vmem:[%s3 + $0xfc] sm:$0xf] %v469
  // Predicated region
  $region14: #{basic_conv2d_forward.3} parent=0 // pred_check
    _
  $region15: #{basic_conv2d_forward.3} parent=0 // pred_check_branch
    %535 = sbr.rel (0) target = $region17
  $region16: #{basic_conv2d_forward.3} parent=0 // pred_region
    _
  $region17: #{basic_conv2d_forward.3} parent=0 // pred_fallthru
    _
  // Predicated region
  $region18: #{basic_conv2d_forward.3} parent=0 // pred_check
    _
  $region19: #{basic_conv2d_forward.3} parent=0 // pred_check_branch
    %537 = sbr.rel (0) target = $region21
  $region20: #{basic_conv2d_forward.3} parent=0 // pred_region
    _
  $region21: #{basic_conv2d_forward.3} parent=0 // pred_fallthru
    _

// kernel: basic_conv2d_forward.2
$region0: #{basic_conv2d_forward.2}
  #allocation0 [shape = 'u32[]', space=smem, size = 0x4, offset = 0x4, fixed_abs, tag = 'smem constant byte address 0x4 - core index']
  #allocation1 [shape = 'u32[72,128]{1,0:T(1,128)}', space=vmem, size = 0x9000, scoped, tag = 'internal scratch']
  #allocation2 [shape = 'f32[512,128]{1,0:T(8,128)}', space=vmem, size = 0x40000, scoped, tag = 'scratch operand']
  %s0 = inlined_call_operand.vmem [shape: bf16[512,128], index: 0, kind: input, shape index: {}]
  %s1 = inlined_call_operand.vmem [shape: bf16[128,128], index: 1, kind: input, shape index: {}]
  %s2 = inlined_call_operand.vmem [shape: bf16[512,128], index: 2, kind: output, shape index: {0}]
  %s3 = inlined_call_operand.vmem [shape: f32[1,128], index: 3, kind: output, shape index: {1}]
  %s4 = inlined_call_operand.vmem [shape: f32[1,128], index: 4, kind: output, shape index: {2}]
  %s5 = inlined_call_operand.vmem [shape: f32[1,128], index: 5, kind: output, shape index: {3}]
  %6 = xla_tuple %s2, %s3, %s4, %s5
  %s7 = sld [smem:[#allocation0]]
  $region58: #{basic_conv2d_forward.2} parent=0
    _
  %s9 = ssub.s32 1, %s7
  %s10 = scalar_select 0, %s9, %s7
  // Predicated region
  $region2: #{basic_conv2d_forward.2} parent=0 // pred_check
    _
  $region3: #{basic_conv2d_forward.2} parent=0 // pred_check_branch
    %12 = sbr.rel (0) target = $region5
  $region4: #{basic_conv2d_forward.2} parent=0 // pred_region
    _
  $region5: #{basic_conv2d_forward.2} parent=0 // pred_fallthru
    _
  // Predicated region
  $region6: #{basic_conv2d_forward.2} parent=0 // pred_check
    _
  $region7: #{basic_conv2d_forward.2} parent=0 // pred_check_branch
    %14 = sbr.rel (0) target = $region9
  $region8: #{basic_conv2d_forward.2} parent=0 // pred_region
    _
  $region9: #{basic_conv2d_forward.2} parent=0 // pred_fallthru
    _
  %p15 = scmp.eq.s32.totalorder 0, 0
  // Predicated region
  $region10: #{basic_conv2d_forward.2} parent=0 // pred_check
    %p16 = pneg %p15
  $region11: #{basic_conv2d_forward.2} parent=0 // pred_check_branch
    %18 = sbr.rel (%p16) target = $region13
  $region12: #{basic_conv2d_forward.2} parent=0 // pred_region
    %19 = vst [vmem:[#allocation2] sm:$0xff] 0.0
    %20 = vst [vmem:[#allocation2 + $0x8] sm:$0xff] 0.0
    %21 = vst [vmem:[#allocation2 + $0x10] sm:$0xff] 0.0
    %22 = vst [vmem:[#allocation2 + $0x18] sm:$0xff] 0.0
    %23 = vst [vmem:[#allocation2 + $0x20] sm:$0xff] 0.0
    %24 = vst [vmem:[#allocation2 + $0x28] sm:$0xff] 0.0
    %25 = vst [vmem:[#allocation2 + $0x30] sm:$0xff] 0.0
    %26 = vst [vmem:[#allocation2 + $0x38] sm:$0xff] 0.0
    %27 = vst [vmem:[#allocation2 + $0x40] sm:$0xff] 0.0
    %28 = vst [vmem:[#allocation2 + $0x48] sm:$0xff] 0.0
    %29 = vst [vmem:[#allocation2 + $0x50] sm:$0xff] 0.0
    %30 = vst [vmem:[#allocation2 + $0x58] sm:$0xff] 0.0
    %31 = vst [vmem:[#allocation2 + $0x60] sm:$0xff] 0.0
    %32 = vst [vmem:[#allocation2 + $0x68] sm:$0xff] 0.0
    %33 = vst [vmem:[#allocation2 + $0x70] sm:$0xff] 0.0
    %34 = vst [vmem:[#allocation2 + $0x78] sm:$0xff] 0.0
    %35 = vst [vmem:[#allocation2 + $0x80] sm:$0xff] 0.0
    %36 = vst [vmem:[#allocation2 + $0x88] sm:$0xff] 0.0
    %37 = vst [vmem:[#allocation2 + $0x90] sm:$0xff] 0.0
    %38 = vst [vmem:[#allocation2 + $0x98] sm:$0xff] 0.0
    %39 = vst [vmem:[#allocation2 + $0xa0] sm:$0xff] 0.0
    %40 = vst [vmem:[#allocation2 + $0xa8] sm:$0xff] 0.0
    %41 = vst [vmem:[#allocation2 + $0xb0] sm:$0xff] 0.0
    %42 = vst [vmem:[#allocation2 + $0xb8] sm:$0xff] 0.0
    %43 = vst [vmem:[#allocation2 + $0xc0] sm:$0xff] 0.0
    %44 = vst [vmem:[#allocation2 + $0xc8] sm:$0xff] 0.0
    %45 = vst [vmem:[#allocation2 + $0xd0] sm:$0xff] 0.0
    %46 = vst [vmem:[#allocation2 + $0xd8] sm:$0xff] 0.0
    %47 = vst [vmem:[#allocation2 + $0xe0] sm:$0xff] 0.0
    %48 = vst [vmem:[#allocation2 + $0xe8] sm:$0xff] 0.0
    %49 = vst [vmem:[#allocation2 + $0xf0] sm:$0xff] 0.0
    %50 = vst [vmem:[#allocation2 + $0xf8] sm:$0xff] 0.0
    %51 = vst [vmem:[#allocation2 + $0x100] sm:$0xff] 0.0
    %52 = vst [vmem:[#allocation2 + $0x108] sm:$0xff] 0.0
    %53 = vst [vmem:[#allocation2 + $0x110] sm:$0xff] 0.0
    %54 = vst [vmem:[#allocation2 + $0x118] sm:$0xff] 0.0
    %55 = vst [vmem:[#allocation2 + $0x120] sm:$0xff] 0.0
    %56 = vst [vmem:[#allocation2 + $0x128] sm:$0xff] 0.0
    %57 = vst [vmem:[#allocation2 + $0x130] sm:$0xff] 0.0
    %58 = vst [vmem:[#allocation2 + $0x138] sm:$0xff] 0.0
    %59 = vst [vmem:[#allocation2 + $0x140] sm:$0xff] 0.0
    %60 = vst [vmem:[#allocation2 + $0x148] sm:$0xff] 0.0
    %61 = vst [vmem:[#allocation2 + $0x150] sm:$0xff] 0.0
    %62 = vst [vmem:[#allocation2 + $0x158] sm:$0xff] 0.0
    %63 = vst [vmem:[#allocation2 + $0x160] sm:$0xff] 0.0
    %64 = vst [vmem:[#allocation2 + $0x168] sm:$0xff] 0.0
    %65 = vst [vmem:[#allocation2 + $0x170] sm:$0xff] 0.0
    %66 = vst [vmem:[#allocation2 + $0x178] sm:$0xff] 0.0
    %67 = vst [vmem:[#allocation2 + $0x180] sm:$0xff] 0.0
    %68 = vst [vmem:[#allocation2 + $0x188] sm:$0xff] 0.0
    %69 = vst [vmem:[#allocation2 + $0x190] sm:$0xff] 0.0
    %70 = vst [vmem:[#allocation2 + $0x198] sm:$0xff] 0.0
    %71 = vst [vmem:[#allocation2 + $0x1a0] sm:$0xff] 0.0
    %72 = vst [vmem:[#allocation2 + $0x1a8] sm:$0xff] 0.0
    %73 = vst [vmem:[#allocation2 + $0x1b0] sm:$0xff] 0.0
    %74 = vst [vmem:[#allocation2 + $0x1b8] sm:$0xff] 0.0
    %75 = vst [vmem:[#allocation2 + $0x1c0] sm:$0xff] 0.0
    %76 = vst [vmem:[#allocation2 + $0x1c8] sm:$0xff] 0.0
    %77 = vst [vmem:[#allocation2 + $0x1d0] sm:$0xff] 0.0
    %78 = vst [vmem:[#allocation2 + $0x1d8] sm:$0xff] 0.0
    %79 = vst [vmem:[#allocation2 + $0x1e0] sm:$0xff] 0.0
    %80 = vst [vmem:[#allocation2 + $0x1e8] sm:$0xff] 0.0
    %81 = vst [vmem:[#allocation2 + $0x1f0] sm:$0xff] 0.0
    %82 = vst [vmem:[#allocation2 + $0x1f8] sm:$0xff] 0.0
  $region13: #{basic_conv2d_forward.2} parent=0 // pred_fallthru
    _
  %v83 = vld [vmem:[#allocation2] sm:$0xff]
  %v84 = vld [vmem:[#allocation2 + $0x8] sm:$0xff]
  %v85 = vld [vmem:[#allocation2 + $0x10] sm:$0xff]
  %v86 = vld [vmem:[#allocation2 + $0x18] sm:$0xff]
  %v87 = vld [vmem:[#allocation2 + $0x20] sm:$0xff]
  %v88 = vld [vmem:[#allocation2 + $0x28] sm:$0xff]
  %v89 = vld [vmem:[#allocation2 + $0x30] sm:$0xff]
  %v90 = vld [vmem:[#allocation2 + $0x38] sm:$0xff]
  %v91 = vld [vmem:[#allocation2 + $0x40] sm:$0xff]
  %v92 = vld [vmem:[#allocation2 + $0x48] sm:$0xff]
  %v93 = vld [vmem:[#allocation2 + $0x50] sm:$0xff]
  %v94 = vld [vmem:[#allocation2 + $0x58] sm:$0xff]
  %v95 = vld [vmem:[#allocation2 + $0x60] sm:$0xff]
  %v96 = vld [vmem:[#allocation2 + $0x68] sm:$0xff]
  %v97 = vld [vmem:[#allocation2 + $0x70] sm:$0xff]
  %v98 = vld [vmem:[#allocation2 + $0x78] sm:$0xff]
  %v99 = vld [vmem:[#allocation2 + $0x80] sm:$0xff]
  %v100 = vld [vmem:[#allocation2 + $0x88] sm:$0xff]
  %v101 = vld [vmem:[#allocation2 + $0x90] sm:$0xff]
  %v102 = vld [vmem:[#allocation2 + $0x98] sm:$0xff]
  %v103 = vld [vmem:[#allocation2 + $0xa0] sm:$0xff]
  %v104 = vld [vmem:[#allocation2 + $0xa8] sm:$0xff]
  %v105 = vld [vmem:[#allocation2 + $0xb0] sm:$0xff]
  %v106 = vld [vmem:[#allocation2 + $0xb8] sm:$0xff]
  %v107 = vld [vmem:[#allocation2 + $0xc0] sm:$0xff]
  %v108 = vld [vmem:[#allocation2 + $0xc8] sm:$0xff]
  %v109 = vld [vmem:[#allocation2 + $0xd0] sm:$0xff]
  %v110 = vld [vmem:[#allocation2 + $0xd8] sm:$0xff]
  %v111 = vld [vmem:[#allocation2 + $0xe0] sm:$0xff]
  %v112 = vld [vmem:[#allocation2 + $0xe8] sm:$0xff]
  %v113 = vld [vmem:[#allocation2 + $0xf0] sm:$0xff]
  %v114 = vld [vmem:[#allocation2 + $0xf8] sm:$0xff]
  %v115 = vld [vmem:[#allocation2 + $0x100] sm:$0xff]
  %v116 = vld [vmem:[#allocation2 + $0x108] sm:$0xff]
  %v117 = vld [vmem:[#allocation2 + $0x110] sm:$0xff]
  %v118 = vld [vmem:[#allocation2 + $0x118] sm:$0xff]
  %v119 = vld [vmem:[#allocation2 + $0x120] sm:$0xff]
  %v120 = vld [vmem:[#allocation2 + $0x128] sm:$0xff]
  %v121 = vld [vmem:[#allocation2 + $0x130] sm:$0xff]
  %v122 = vld [vmem:[#allocation2 + $0x138] sm:$0xff]
  %v123 = vld [vmem:[#allocation2 + $0x140] sm:$0xff]
  %v124 = vld [vmem:[#allocation2 + $0x148] sm:$0xff]
  %v125 = vld [vmem:[#allocation2 + $0x150] sm:$0xff]
  %v126 = vld [vmem:[#allocation2 + $0x158] sm:$0xff]
  %v127 = vld [vmem:[#allocation2 + $0x160] sm:$0xff]
  %v128 = vld [vmem:[#allocation2 + $0x168] sm:$0xff]
  %v129 = vld [vmem:[#allocation2 + $0x170] sm:$0xff]
  %v130 = vld [vmem:[#allocation2 + $0x178] sm:$0xff]
  %v131 = vld [vmem:[#allocation2 + $0x180] sm:$0xff]
  %v132 = vld [vmem:[#allocation2 + $0x188] sm:$0xff]
  %v133 = vld [vmem:[#allocation2 + $0x190] sm:$0xff]
  %v134 = vld [vmem:[#allocation2 + $0x198] sm:$0xff]
  %v135 = vld [vmem:[#allocation2 + $0x1a0] sm:$0xff]
  %v136 = vld [vmem:[#allocation2 + $0x1a8] sm:$0xff]
  %v137 = vld [vmem:[#allocation2 + $0x1b0] sm:$0xff]
  %v138 = vld [vmem:[#allocation2 + $0x1b8] sm:$0xff]
  %v139 = vld [vmem:[#allocation2 + $0x1c0] sm:$0xff]
  %v140 = vld [vmem:[#allocation2 + $0x1c8] sm:$0xff]
  %v141 = vld [vmem:[#allocation2 + $0x1d0] sm:$0xff]
  %v142 = vld [vmem:[#allocation2 + $0x1d8] sm:$0xff]
  %v143 = vld [vmem:[#allocation2 + $0x1e0] sm:$0xff]
  %v144 = vld [vmem:[#allocation2 + $0x1e8] sm:$0xff]
  %v145 = vld [vmem:[#allocation2 + $0x1f0] sm:$0xff]
  %v146 = vld [vmem:[#allocation2 + $0x1f8] sm:$0xff]
  %v147 = vld [vmem:[%s0] sm:$0xf]
  %v148 = vld [vmem:[%s0 + $0x4] sm:$0xf]
  %v149 = vld [vmem:[%s0 + $0x8] sm:$0xf]
  %v150 = vld [vmem:[%s0 + $0xc] sm:$0xf]
  %v151 = vld [vmem:[%s0 + $0x10] sm:$0xf]
  %v152 = vld [vmem:[%s0 + $0x14] sm:$0xf]
  %v153 = vld [vmem:[%s0 + $0x18] sm:$0xf]
  %v154 = vld [vmem:[%s0 + $0x1c] sm:$0xf]
  %v155 = vld [vmem:[%s0 + $0x20] sm:$0xf]
  %v156 = vld [vmem:[%s0 + $0x24] sm:$0xf]
  %v157 = vld [vmem:[%s0 + $0x28] sm:$0xf]
  %v158 = vld [vmem:[%s0 + $0x2c] sm:$0xf]
  %v159 = vld [vmem:[%s0 + $0x30] sm:$0xf]
  %v160 = vld [vmem:[%s0 + $0x34] sm:$0xf]
  %v161 = vld [vmem:[%s0 + $0x38] sm:$0xf]
  %v162 = vld [vmem:[%s0 + $0x3c] sm:$0xf]
  %v163 = vld [vmem:[%s0 + $0x40] sm:$0xf]
  %v164 = vld [vmem:[%s0 + $0x44] sm:$0xf]
  %v165 = vld [vmem:[%s0 + $0x48] sm:$0xf]
  %v166 = vld [vmem:[%s0 + $0x4c] sm:$0xf]
  %v167 = vld [vmem:[%s0 + $0x50] sm:$0xf]
  %v168 = vld [vmem:[%s0 + $0x54] sm:$0xf]
  %v169 = vld [vmem:[%s0 + $0x58] sm:$0xf]
  %v170 = vld [vmem:[%s0 + $0x5c] sm:$0xf]
  %v171 = vld [vmem:[%s0 + $0x60] sm:$0xf]
  %v172 = vld [vmem:[%s0 + $0x64] sm:$0xf]
  %v173 = vld [vmem:[%s0 + $0x68] sm:$0xf]
  %v174 = vld [vmem:[%s0 + $0x6c] sm:$0xf]
  %v175 = vld [vmem:[%s0 + $0x70] sm:$0xf]
  %v176 = vld [vmem:[%s0 + $0x74] sm:$0xf]
  %v177 = vld [vmem:[%s0 + $0x78] sm:$0xf]
  %v178 = vld [vmem:[%s0 + $0x7c] sm:$0xf]
  %v179 = vld [vmem:[%s0 + $0x80] sm:$0xf]
  %v180 = vld [vmem:[%s0 + $0x84] sm:$0xf]
  %v181 = vld [vmem:[%s0 + $0x88] sm:$0xf]
  %v182 = vld [vmem:[%s0 + $0x8c] sm:$0xf]
  %v183 = vld [vmem:[%s0 + $0x90] sm:$0xf]
  %v184 = vld [vmem:[%s0 + $0x94] sm:$0xf]
  %v185 = vld [vmem:[%s0 + $0x98] sm:$0xf]
  %v186 = vld [vmem:[%s0 + $0x9c] sm:$0xf]
  %v187 = vld [vmem:[%s0 + $0xa0] sm:$0xf]
  %v188 = vld [vmem:[%s0 + $0xa4] sm:$0xf]
  %v189 = vld [vmem:[%s0 + $0xa8] sm:$0xf]
  %v190 = vld [vmem:[%s0 + $0xac] sm:$0xf]
  %v191 = vld [vmem:[%s0 + $0xb0] sm:$0xf]
  %v192 = vld [vmem:[%s0 + $0xb4] sm:$0xf]
  %v193 = vld [vmem:[%s0 + $0xb8] sm:$0xf]
  %v194 = vld [vmem:[%s0 + $0xbc] sm:$0xf]
  %v195 = vld [vmem:[%s0 + $0xc0] sm:$0xf]
  %v196 = vld [vmem:[%s0 + $0xc4] sm:$0xf]
  %v197 = vld [vmem:[%s0 + $0xc8] sm:$0xf]
  %v198 = vld [vmem:[%s0 + $0xcc] sm:$0xf]
  %v199 = vld [vmem:[%s0 + $0xd0] sm:$0xf]
  %v200 = vld [vmem:[%s0 + $0xd4] sm:$0xf]
  %v201 = vld [vmem:[%s0 + $0xd8] sm:$0xf]
  %v202 = vld [vmem:[%s0 + $0xdc] sm:$0xf]
  %v203 = vld [vmem:[%s0 + $0xe0] sm:$0xf]
  %v204 = vld [vmem:[%s0 + $0xe4] sm:$0xf]
  %v205 = vld [vmem:[%s0 + $0xe8] sm:$0xf]
  %v206 = vld [vmem:[%s0 + $0xec] sm:$0xf]
  %v207 = vld [vmem:[%s0 + $0xf0] sm:$0xf]
  %v208 = vld [vmem:[%s0 + $0xf4] sm:$0xf]
  %v209 = vld [vmem:[%s0 + $0xf8] sm:$0xf]
  %v210 = vld [vmem:[%s0 + $0xfc] sm:$0xf]
  %v211 = vld [vmem:[%s1] sm:$0xf]
  %v212 = vld [vmem:[%s1 + $0x4] sm:$0xf]
  %v213 = vld [vmem:[%s1 + $0x8] sm:$0xf]
  %v214 = vld [vmem:[%s1 + $0xc] sm:$0xf]
  %v215 = vld [vmem:[%s1 + $0x10] sm:$0xf]
  %v216 = vld [vmem:[%s1 + $0x14] sm:$0xf]
  %v217 = vld [vmem:[%s1 + $0x18] sm:$0xf]
  %v218 = vld [vmem:[%s1 + $0x1c] sm:$0xf]
  %v219 = vld [vmem:[%s1 + $0x20] sm:$0xf]
  %v220 = vld [vmem:[%s1 + $0x24] sm:$0xf]
  %v221 = vld [vmem:[%s1 + $0x28] sm:$0xf]
  %v222 = vld [vmem:[%s1 + $0x2c] sm:$0xf]
  %v223 = vld [vmem:[%s1 + $0x30] sm:$0xf]
  %v224 = vld [vmem:[%s1 + $0x34] sm:$0xf]
  %v225 = vld [vmem:[%s1 + $0x38] sm:$0xf]
  %v226 = vld [vmem:[%s1 + $0x3c] sm:$0xf]
  %v291 = vunpack.c.l.b16 %v147
  %v292 = vunpack.c.l.b16 %v148
  %v293 = vunpack.c.l.b16 %v149
  %v294 = vunpack.c.l.b16 %v150
  %v295 = vunpack.c.l.b16 %v151
  %v296 = vunpack.c.l.b16 %v152
  %v297 = vunpack.c.l.b16 %v153
  %v298 = vunpack.c.l.b16 %v154
  %v299 = vunpack.c.l.b16 %v155
  %v300 = vunpack.c.l.b16 %v156
  %v301 = vunpack.c.l.b16 %v157
  %v302 = vunpack.c.l.b16 %v158
  %v303 = vunpack.c.l.b16 %v159
  %v304 = vunpack.c.l.b16 %v160
  %v305 = vunpack.c.l.b16 %v161
  %v306 = vunpack.c.l.b16 %v162
  %v307 = vunpack.c.l.b16 %v163
  %v308 = vunpack.c.l.b16 %v164
  %v309 = vunpack.c.l.b16 %v165
  %v310 = vunpack.c.l.b16 %v166
  %v311 = vunpack.c.l.b16 %v167
  %v312 = vunpack.c.l.b16 %v168
  %v313 = vunpack.c.l.b16 %v169
  %v314 = vunpack.c.l.b16 %v170
  %v315 = vunpack.c.l.b16 %v171
  %v316 = vunpack.c.l.b16 %v172
  %v317 = vunpack.c.l.b16 %v173
  %v318 = vunpack.c.l.b16 %v174
  %v319 = vunpack.c.l.b16 %v175
  %v320 = vunpack.c.l.b16 %v176
  %v321 = vunpack.c.l.b16 %v177
  %v322 = vunpack.c.l.b16 %v178
  %v323 = vunpack.c.l.b16 %v179
  %v324 = vunpack.c.l.b16 %v180
  %v325 = vunpack.c.l.b16 %v181
  %v326 = vunpack.c.l.b16 %v182
  %v327 = vunpack.c.l.b16 %v183
  %v328 = vunpack.c.l.b16 %v184
  %v329 = vunpack.c.l.b16 %v185
  %v330 = vunpack.c.l.b16 %v186
  %v331 = vunpack.c.l.b16 %v187
  %v332 = vunpack.c.l.b16 %v188
  %v333 = vunpack.c.l.b16 %v189
  %v334 = vunpack.c.l.b16 %v190
  %v335 = vunpack.c.l.b16 %v191
  %v336 = vunpack.c.l.b16 %v192
  %v337 = vunpack.c.l.b16 %v193
  %v338 = vunpack.c.l.b16 %v194
  %v339 = vunpack.c.l.b16 %v195
  %v340 = vunpack.c.l.b16 %v196
  %v341 = vunpack.c.l.b16 %v197
  %v342 = vunpack.c.l.b16 %v198
  %v343 = vunpack.c.l.b16 %v199
  %v344 = vunpack.c.l.b16 %v200
  %v345 = vunpack.c.l.b16 %v201
  %v346 = vunpack.c.l.b16 %v202
  %v347 = vunpack.c.l.b16 %v203
  %v348 = vunpack.c.l.b16 %v204
  %v349 = vunpack.c.l.b16 %v205
  %v350 = vunpack.c.l.b16 %v206
  %v351 = vunpack.c.l.b16 %v207
  %v352 = vunpack.c.l.b16 %v208
  %v353 = vunpack.c.l.b16 %v209
  %v354 = vunpack.c.l.b16 %v210
  %v355 = vpack.c.b16 %v292, %v291
  %v356 = vpack.c.b16 %v294, %v293
  %v357 = vpack.c.b16 %v296, %v295
  %v358 = vpack.c.b16 %v298, %v297
  %v359 = vpack.c.b16 %v300, %v299
  %v360 = vpack.c.b16 %v302, %v301
  %v361 = vpack.c.b16 %v304, %v303
  %v362 = vpack.c.b16 %v306, %v305
  %v363 = vpack.c.b16 %v308, %v307
  %v364 = vpack.c.b16 %v310, %v309
  %v365 = vpack.c.b16 %v312, %v311
  %v366 = vpack.c.b16 %v314, %v313
  %v367 = vpack.c.b16 %v316, %v315
  %v368 = vpack.c.b16 %v318, %v317
  %v369 = vpack.c.b16 %v320, %v319
  %v370 = vpack.c.b16 %v322, %v321
  %v371 = vpack.c.b16 %v324, %v323
  %v372 = vpack.c.b16 %v326, %v325
  %v373 = vpack.c.b16 %v328, %v327
  %v374 = vpack.c.b16 %v330, %v329
  %v375 = vpack.c.b16 %v332, %v331
  %v376 = vpack.c.b16 %v334, %v333
  %v377 = vpack.c.b16 %v336, %v335
  %v378 = vpack.c.b16 %v338, %v337
  %v379 = vpack.c.b16 %v340, %v339
  %v380 = vpack.c.b16 %v342, %v341
  %v381 = vpack.c.b16 %v344, %v343
  %v382 = vpack.c.b16 %v346, %v345
  %v383 = vpack.c.b16 %v348, %v347
  %v384 = vpack.c.b16 %v350, %v349
  %v385 = vpack.c.b16 %v352, %v351
  %v386 = vpack.c.b16 %v354, %v353
  %v435 = vunpack.c.l.b16 %v211
  %v436 = vunpack.c.l.b16 %v212
  %v437 = vunpack.c.l.b16 %v213
  %v438 = vunpack.c.l.b16 %v214
  %v439 = vunpack.c.l.b16 %v215
  %v440 = vunpack.c.l.b16 %v216
  %v441 = vunpack.c.l.b16 %v217
  %v442 = vunpack.c.l.b16 %v218
  %v443 = vunpack.c.l.b16 %v219
  %v444 = vunpack.c.l.b16 %v220
  %v445 = vunpack.c.l.b16 %v221
  %v446 = vunpack.c.l.b16 %v222
  %v447 = vunpack.c.l.b16 %v223
  %v448 = vunpack.c.l.b16 %v224
  %v449 = vunpack.c.l.b16 %v225
  %v450 = vunpack.c.l.b16 %v226
  %v451 = vpack.c.b16 %v436, %v435
  %v452 = vpack.c.b16 %v438, %v437
  %v453 = vpack.c.b16 %v440, %v439
  %v454 = vpack.c.b16 %v442, %v441
  %v455 = vpack.c.b16 %v444, %v443
  %v456 = vpack.c.b16 %v446, %v445
  %v457 = vpack.c.b16 %v448, %v447
  %v458 = vpack.c.b16 %v450, %v449
  %467 = vmatpush.bf16.msra.mxu0 %v458
  %468 = vmatpush.bf16.msra.mxu0 %v457
  %469 = vmatpush.bf16.msra.mxu0 %v456
  %470 = vmatpush.bf16.msra.mxu0 %v455
  %471 = vmatpush.bf16.msra.mxu0 %v454
  %472 = vmatpush.bf16.msra.mxu0 %v453
  %473 = vmatpush.bf16.msra.mxu0 %v452
  %474 = vmatpush.bf16.msra.mxu0 %v451
  %475 = vmatmul.bf16.gmra.mxu0 %v355
  %v476 = vpop.f32.mrf.mxu0
  %v477 = vadd.f32 0.0, %v476
  %v478 = vpop.f32.mrf.mxu0
  %v479 = vadd.f32 0.0, %v478
  %480 = vmatmul.bf16.gmra.mxu0 %v356
  %v481 = vpop.f32.mrf.mxu0
  %v482 = vadd.f32 0.0, %v481
  %v483 = vpop.f32.mrf.mxu0
  %v484 = vadd.f32 0.0, %v483
  %485 = vmatmul.bf16.gmra.mxu0 %v357
  %v486 = vpop.f32.mrf.mxu0
  %v487 = vadd.f32 0.0, %v486
  %v488 = vpop.f32.mrf.mxu0
  %v489 = vadd.f32 0.0, %v488
  %490 = vmatmul.bf16.gmra.mxu0 %v358
  %v491 = vpop.f32.mrf.mxu0
  %v492 = vadd.f32 0.0, %v491
  %v493 = vpop.f32.mrf.mxu0
  %v494 = vadd.f32 0.0, %v493
  %495 = vmatmul.bf16.gmra.mxu0 %v359
  %v496 = vpop.f32.mrf.mxu0
  %v497 = vadd.f32 0.0, %v496
  %v498 = vpop.f32.mrf.mxu0
  %v499 = vadd.f32 0.0, %v498
  %500 = vmatmul.bf16.gmra.mxu0 %v360
  %v501 = vpop.f32.mrf.mxu0
  %v502 = vadd.f32 0.0, %v501
  %v503 = vpop.f32.mrf.mxu0
  %v504 = vadd.f32 0.0, %v503
  %505 = vmatmul.bf16.gmra.mxu0 %v361
  %v506 = vpop.f32.mrf.mxu0
  %v507 = vadd.f32 0.0, %v506
  %v508 = vpop.f32.mrf.mxu0
  %v509 = vadd.f32 0.0, %v508
  %510 = vmatmul.bf16.gmra.mxu0 %v362
  %v511 = vpop.f32.mrf.mxu0
  %v512 = vadd.f32 0.0, %v511
  %v513 = vpop.f32.mrf.mxu0
  %v514 = vadd.f32 0.0, %v513
  %515 = vmatmul.bf16.gmra.mxu0 %v363
  %v516 = vpop.f32.mrf.mxu0
  %v517 = vadd.f32 0.0, %v516
  %v518 = vpop.f32.mrf.mxu0
  %v519 = vadd.f32 0.0, %v518
  %520 = vmatmul.bf16.gmra.mxu0 %v364
  %v521 = vpop.f32.mrf.mxu0
  %v522 = vadd.f32 0.0, %v521
  %v523 = vpop.f32.mrf.mxu0
  %v524 = vadd.f32 0.0, %v523
  %525 = vmatmul.bf16.gmra.mxu0 %v365
  %v526 = vpop.f32.mrf.mxu0
  %v527 = vadd.f32 0.0, %v526
  %v528 = vpop.f32.mrf.mxu0
  %v529 = vadd.f32 0.0, %v528
  %530 = vmatmul.bf16.gmra.mxu0 %v366
  %v531 = vpop.f32.mrf.mxu0
  %v532 = vadd.f32 0.0, %v531
  %v533 = vpop.f32.mrf.mxu0
  %v534 = vadd.f32 0.0, %v533
  %535 = vmatmul.bf16.gmra.mxu0 %v367
  %v536 = vpop.f32.mrf.mxu0
  %v537 = vadd.f32 0.0, %v536
  %v538 = vpop.f32.mrf.mxu0
  %v539 = vadd.f32 0.0, %v538
  %540 = vmatmul.bf16.gmra.mxu0 %v368
  %v541 = vpop.f32.mrf.mxu0
  %v542 = vadd.f32 0.0, %v541
  %v543 = vpop.f32.mrf.mxu0
  %v544 = vadd.f32 0.0, %v543
  %545 = vmatmul.bf16.gmra.mxu0 %v369
  %v546 = vpop.f32.mrf.mxu0
  %v547 = vadd.f32 0.0, %v546
  %v548 = vpop.f32.mrf.mxu0
  %v549 = vadd.f32 0.0, %v548
  %550 = vmatmul.bf16.gmra.mxu0 %v370
  %v551 = vpop.f32.mrf.mxu0
  %v552 = vadd.f32 0.0, %v551
  %v553 = vpop.f32.mrf.mxu0
  %v554 = vadd.f32 0.0, %v553
  %555 = vmatmul.bf16.gmra.mxu0 %v371
  %v556 = vpop.f32.mrf.mxu0
  %v557 = vadd.f32 0.0, %v556
  %v558 = vpop.f32.mrf.mxu0
  %v559 = vadd.f32 0.0, %v558
  %560 = vmatmul.bf16.gmra.mxu0 %v372
  %v561 = vpop.f32.mrf.mxu0
  %v562 = vadd.f32 0.0, %v561
  %v563 = vpop.f32.mrf.mxu0
  %v564 = vadd.f32 0.0, %v563
  %565 = vmatmul.bf16.gmra.mxu0 %v373
  %v566 = vpop.f32.mrf.mxu0
  %v567 = vadd.f32 0.0, %v566
  %v568 = vpop.f32.mrf.mxu0
  %v569 = vadd.f32 0.0, %v568
  %570 = vmatmul.bf16.gmra.mxu0 %v374
  %v571 = vpop.f32.mrf.mxu0
  %v572 = vadd.f32 0.0, %v571
  %v573 = vpop.f32.mrf.mxu0
  %v574 = vadd.f32 0.0, %v573
  %575 = vmatmul.bf16.gmra.mxu0 %v375
  %v576 = vpop.f32.mrf.mxu0
  %v577 = vadd.f32 0.0, %v576
  %v578 = vpop.f32.mrf.mxu0
  %v579 = vadd.f32 0.0, %v578
  %580 = vmatmul.bf16.gmra.mxu0 %v376
  %v581 = vpop.f32.mrf.mxu0
  %v582 = vadd.f32 0.0, %v581
  %v583 = vpop.f32.mrf.mxu0
  %v584 = vadd.f32 0.0, %v583
  %585 = vmatmul.bf16.gmra.mxu0 %v377
  %v586 = vpop.f32.mrf.mxu0
  %v587 = vadd.f32 0.0, %v586
  %v588 = vpop.f32.mrf.mxu0
  %v589 = vadd.f32 0.0, %v588
  %590 = vmatmul.bf16.gmra.mxu0 %v378
  %v591 = vpop.f32.mrf.mxu0
  %v592 = vadd.f32 0.0, %v591
  %v593 = vpop.f32.mrf.mxu0
  %v594 = vadd.f32 0.0, %v593
  %595 = vmatmul.bf16.gmra.mxu0 %v379
  %v596 = vpop.f32.mrf.mxu0
  %v597 = vadd.f32 0.0, %v596
  %v598 = vpop.f32.mrf.mxu0
  %v599 = vadd.f32 0.0, %v598
  %600 = vmatmul.bf16.gmra.mxu0 %v380
  %v601 = vpop.f32.mrf.mxu0
  %v602 = vadd.f32 0.0, %v601
  %v603 = vpop.f32.mrf.mxu0
  %v604 = vadd.f32 0.0, %v603
  %605 = vmatmul.bf16.gmra.mxu0 %v381
  %v606 = vpop.f32.mrf.mxu0
  %v607 = vadd.f32 0.0, %v606
  %v608 = vpop.f32.mrf.mxu0
  %v609 = vadd.f32 0.0, %v608
  %610 = vmatmul.bf16.gmra.mxu0 %v382
  %v611 = vpop.f32.mrf.mxu0
  %v612 = vadd.f32 0.0, %v611
  %v613 = vpop.f32.mrf.mxu0
  %v614 = vadd.f32 0.0, %v613
  %615 = vmatmul.bf16.gmra.mxu0 %v383
  %v616 = vpop.f32.mrf.mxu0
  %v617 = vadd.f32 0.0, %v616
  %v618 = vpop.f32.mrf.mxu0
  %v619 = vadd.f32 0.0, %v618
  %620 = vmatmul.bf16.gmra.mxu0 %v384
  %v621 = vpop.f32.mrf.mxu0
  %v622 = vadd.f32 0.0, %v621
  %v623 = vpop.f32.mrf.mxu0
  %v624 = vadd.f32 0.0, %v623
  %625 = vmatmul.bf16.gmra.mxu0 %v385
  %v626 = vpop.f32.mrf.mxu0
  %v627 = vadd.f32 0.0, %v626
  %v628 = vpop.f32.mrf.mxu0
  %v629 = vadd.f32 0.0, %v628
  %630 = vmatmul.bf16.gmra.mxu0 %v386
  %v631 = vpop.f32.mrf.mxu0
  %v632 = vadd.f32 0.0, %v631
  %v633 = vpop.f32.mrf.mxu0
  %v634 = vadd.f32 0.0, %v633
  %635 = vdwg.mxu0
  %v636 = vadd.f32 %v83, %v477
  %v637 = vadd.f32 %v84, %v479
  %v638 = vadd.f32 %v85, %v482
  %v639 = vadd.f32 %v86, %v484
  %v640 = vadd.f32 %v87, %v487
  %v641 = vadd.f32 %v88, %v489
  %v642 = vadd.f32 %v89, %v492
  %v643 = vadd.f32 %v90, %v494
  %v644 = vadd.f32 %v91, %v497
  %v645 = vadd.f32 %v92, %v499
  %v646 = vadd.f32 %v93, %v502
  %v647 = vadd.f32 %v94, %v504
  %v648 = vadd.f32 %v95, %v507
  %v649 = vadd.f32 %v96, %v509
  %v650 = vadd.f32 %v97, %v512
  %v651 = vadd.f32 %v98, %v514
  %v652 = vadd.f32 %v99, %v517
  %v653 = vadd.f32 %v100, %v519
  %v654 = vadd.f32 %v101, %v522
  %v655 = vadd.f32 %v102, %v524
  %v656 = vadd.f32 %v103, %v527
  %v657 = vadd.f32 %v104, %v529
  %v658 = vadd.f32 %v105, %v532
  %v659 = vadd.f32 %v106, %v534
  %v660 = vadd.f32 %v107, %v537
  %v661 = vadd.f32 %v108, %v539
  %v662 = vadd.f32 %v109, %v542
  %v663 = vadd.f32 %v110, %v544
  %v664 = vadd.f32 %v111, %v547
  %v665 = vadd.f32 %v112, %v549
  %v666 = vadd.f32 %v113, %v552
  %v667 = vadd.f32 %v114, %v554
  %v668 = vadd.f32 %v115, %v557
  %v669 = vadd.f32 %v116, %v559
  %v670 = vadd.f32 %v117, %v562
  %v671 = vadd.f32 %v118, %v564
  %v672 = vadd.f32 %v119, %v567
  %v673 = vadd.f32 %v120, %v569
  %v674 = vadd.f32 %v121, %v572
  %v675 = vadd.f32 %v122, %v574
  %v676 = vadd.f32 %v123, %v577
  %v677 = vadd.f32 %v124, %v579
  %v678 = vadd.f32 %v125, %v582
  %v679 = vadd.f32 %v126, %v584
  %v680 = vadd.f32 %v127, %v587
  %v681 = vadd.f32 %v128, %v589
  %v682 = vadd.f32 %v129, %v592
  %v683 = vadd.f32 %v130, %v594
  %v684 = vadd.f32 %v131, %v597
  %v685 = vadd.f32 %v132, %v599
  %v686 = vadd.f32 %v133, %v602
  %v687 = vadd.f32 %v134, %v604
  %v688 = vadd.f32 %v135, %v607
  %v689 = vadd.f32 %v136, %v609
  %v690 = vadd.f32 %v137, %v612
  %v691 = vadd.f32 %v138, %v614
  %v692 = vadd.f32 %v139, %v617
  %v693 = vadd.f32 %v140, %v619
  %v694 = vadd.f32 %v141, %v622
  %v695 = vadd.f32 %v142, %v624
  %v696 = vadd.f32 %v143, %v627
  %v697 = vadd.f32 %v144, %v629
  %v698 = vadd.f32 %v145, %v632
  %v699 = vadd.f32 %v146, %v634
  %700 = vst [vmem:[#allocation2] sm:$0xff] %v636
  %701 = vst [vmem:[#allocation2 + $0x8] sm:$0xff] %v637
  %702 = vst [vmem:[#allocation2 + $0x10] sm:$0xff] %v638
  %703 = vst [vmem:[#allocation2 + $0x18] sm:$0xff] %v639
  %704 = vst [vmem:[#allocation2 + $0x20] sm:$0xff] %v640
  %705 = vst [vmem:[#allocation2 + $0x28] sm:$0xff] %v641
  %706 = vst [vmem:[#allocation2 + $0x30] sm:$0xff] %v642
  %707 = vst [vmem:[#allocation2 + $0x38] sm:$0xff] %v643
  %708 = vst [vmem:[#allocation2 + $0x40] sm:$0xff] %v644
  %709 = vst [vmem:[#allocation2 + $0x48] sm:$0xff] %v645
  %710 = vst [vmem:[#allocation2 + $0x50] sm:$0xff] %v646
  %711 = vst [vmem:[#allocation2 + $0x58] sm:$0xff] %v647
  %712 = vst [vmem:[#allocation2 + $0x60] sm:$0xff] %v648
  %713 = vst [vmem:[#allocation2 + $0x68] sm:$0xff] %v649
  %714 = vst [vmem:[#allocation2 + $0x70] sm:$0xff] %v650
  %715 = vst [vmem:[#allocation2 + $0x78] sm:$0xff] %v651
  %716 = vst [vmem:[#allocation2 + $0x80] sm:$0xff] %v652
  %717 = vst [vmem:[#allocation2 + $0x88] sm:$0xff] %v653
  %718 = vst [vmem:[#allocation2 + $0x90] sm:$0xff] %v654
  %719 = vst [vmem:[#allocation2 + $0x98] sm:$0xff] %v655
  %720 = vst [vmem:[#allocation2 + $0xa0] sm:$0xff] %v656
  %721 = vst [vmem:[#allocation2 + $0xa8] sm:$0xff] %v657
  %722 = vst [vmem:[#allocation2 + $0xb0] sm:$0xff] %v658
  %723 = vst [vmem:[#allocation2 + $0xb8] sm:$0xff] %v659
  %724 = vst [vmem:[#allocation2 + $0xc0] sm:$0xff] %v660
  %725 = vst [vmem:[#allocation2 + $0xc8] sm:$0xff] %v661
  %726 = vst [vmem:[#allocation2 + $0xd0] sm:$0xff] %v662
  %727 = vst [vmem:[#allocation2 + $0xd8] sm:$0xff] %v663
  %728 = vst [vmem:[#allocation2 + $0xe0] sm:$0xff] %v664
  %729 = vst [vmem:[#allocation2 + $0xe8] sm:$0xff] %v665
  %730 = vst [vmem:[#allocation2 + $0xf0] sm:$0xff] %v666
  %731 = vst [vmem:[#allocation2 + $0xf8] sm:$0xff] %v667
  %732 = vst [vmem:[#allocation2 + $0x100] sm:$0xff] %v668
  %733 = vst [vmem:[#allocation2 + $0x108] sm:$0xff] %v669
  %734 = vst [vmem:[#allocation2 + $0x110] sm:$0xff] %v670
  %735 = vst [vmem:[#allocation2 + $0x118] sm:$0xff] %v671
  %736 = vst [vmem:[#allocation2 + $0x120] sm:$0xff] %v672
  %737 = vst [vmem:[#allocation2 + $0x128] sm:$0xff] %v673
  %738 = vst [vmem:[#allocation2 + $0x130] sm:$0xff] %v674
  %739 = vst [vmem:[#allocation2 + $0x138] sm:$0xff] %v675
  %740 = vst [vmem:[#allocation2 + $0x140] sm:$0xff] %v676
  %741 = vst [vmem:[#allocation2 + $0x148] sm:$0xff] %v677
  %742 = vst [vmem:[#allocation2 + $0x150] sm:$0xff] %v678
  %743 = vst [vmem:[#allocation2 + $0x158] sm:$0xff] %v679
  %744 = vst [vmem:[#allocation2 + $0x160] sm:$0xff] %v680
  %745 = vst [vmem:[#allocation2 + $0x168] sm:$0xff] %v681
  %746 = vst [vmem:[#allocation2 + $0x170] sm:$0xff] %v682
  %747 = vst [vmem:[#allocation2 + $0x178] sm:$0xff] %v683
  %748 = vst [vmem:[#allocation2 + $0x180] sm:$0xff] %v684
  %749 = vst [vmem:[#allocation2 + $0x188] sm:$0xff] %v685
  %750 = vst [vmem:[#allocation2 + $0x190] sm:$0xff] %v686
  %751 = vst [vmem:[#allocation2 + $0x198] sm:$0xff] %v687
  %752 = vst [vmem:[#allocation2 + $0x1a0] sm:$0xff] %v688
  %753 = vst [vmem:[#allocation2 + $0x1a8] sm:$0xff] %v689
  %754 = vst [vmem:[#allocation2 + $0x1b0] sm:$0xff] %v690
  %755 = vst [vmem:[#allocation2 + $0x1b8] sm:$0xff] %v691
  %756 = vst [vmem:[#allocation2 + $0x1c0] sm:$0xff] %v692
  %757 = vst [vmem:[#allocation2 + $0x1c8] sm:$0xff] %v693
  %758 = vst [vmem:[#allocation2 + $0x1d0] sm:$0xff] %v694
  %759 = vst [vmem:[#allocation2 + $0x1d8] sm:$0xff] %v695
  %760 = vst [vmem:[#allocation2 + $0x1e0] sm:$0xff] %v696
  %761 = vst [vmem:[#allocation2 + $0x1e8] sm:$0xff] %v697
  %762 = vst [vmem:[#allocation2 + $0x1f0] sm:$0xff] %v698
  %763 = vst [vmem:[#allocation2 + $0x1f8] sm:$0xff] %v699
  // Predicated region
  $region14: #{basic_conv2d_forward.2} parent=0 // pred_check
    %p764 = pneg %p15
  $region15: #{basic_conv2d_forward.2} parent=0 // pred_check_branch
    %766 = sbr.rel (%p764) target = $region17
  $region16: #{basic_conv2d_forward.2} parent=0 // pred_region
    %v767 = vld [vmem:[#allocation2] sm:$0xff]
    %v768 = vld [vmem:[#allocation2 + $0x8] sm:$0xff]
    %v769 = vld [vmem:[#allocation2 + $0x10] sm:$0xff]
    %v770 = vld [vmem:[#allocation2 + $0x18] sm:$0xff]
    %v771 = vld [vmem:[#allocation2 + $0x20] sm:$0xff]
    %v772 = vld [vmem:[#allocation2 + $0x28] sm:$0xff]
    %v773 = vld [vmem:[#allocation2 + $0x30] sm:$0xff]
    %v774 = vld [vmem:[#allocation2 + $0x38] sm:$0xff]
    %v775 = vld [vmem:[#allocation2 + $0x40] sm:$0xff]
    %v776 = vld [vmem:[#allocation2 + $0x48] sm:$0xff]
    %v777 = vld [vmem:[#allocation2 + $0x50] sm:$0xff]
    %v778 = vld [vmem:[#allocation2 + $0x58] sm:$0xff]
    %v779 = vld [vmem:[#allocation2 + $0x60] sm:$0xff]
    %v780 = vld [vmem:[#allocation2 + $0x68] sm:$0xff]
    %v781 = vld [vmem:[#allocation2 + $0x70] sm:$0xff]
    %v782 = vld [vmem:[#allocation2 + $0x78] sm:$0xff]
    %v783 = vld [vmem:[#allocation2 + $0x80] sm:$0xff]
    %v784 = vld [vmem:[#allocation2 + $0x88] sm:$0xff]
    %v785 = vld [vmem:[#allocation2 + $0x90] sm:$0xff]
    %v786 = vld [vmem:[#allocation2 + $0x98] sm:$0xff]
    %v787 = vld [vmem:[#allocation2 + $0xa0] sm:$0xff]
    %v788 = vld [vmem:[#allocation2 + $0xa8] sm:$0xff]
    %v789 = vld [vmem:[#allocation2 + $0xb0] sm:$0xff]
    %v790 = vld [vmem:[#allocation2 + $0xb8] sm:$0xff]
    %v791 = vld [vmem:[#allocation2 + $0xc0] sm:$0xff]
    %v792 = vld [vmem:[#allocation2 + $0xc8] sm:$0xff]
    %v793 = vld [vmem:[#allocation2 + $0xd0] sm:$0xff]
    %v794 = vld [vmem:[#allocation2 + $0xd8] sm:$0xff]
    %v795 = vld [vmem:[#allocation2 + $0xe0] sm:$0xff]
    %v796 = vld [vmem:[#allocation2 + $0xe8] sm:$0xff]
    %v797 = vld [vmem:[#allocation2 + $0xf0] sm:$0xff]
    %v798 = vld [vmem:[#allocation2 + $0xf8] sm:$0xff]
    %v799 = vld [vmem:[#allocation2 + $0x100] sm:$0xff]
    %v800 = vld [vmem:[#allocation2 + $0x108] sm:$0xff]
    %v801 = vld [vmem:[#allocation2 + $0x110] sm:$0xff]
    %v802 = vld [vmem:[#allocation2 + $0x118] sm:$0xff]
    %v803 = vld [vmem:[#allocation2 + $0x120] sm:$0xff]
    %v804 = vld [vmem:[#allocation2 + $0x128] sm:$0xff]
    %v805 = vld [vmem:[#allocation2 + $0x130] sm:$0xff]
    %v806 = vld [vmem:[#allocation2 + $0x138] sm:$0xff]
    %v807 = vld [vmem:[#allocation2 + $0x140] sm:$0xff]
    %v808 = vld [vmem:[#allocation2 + $0x148] sm:$0xff]
    %v809 = vld [vmem:[#allocation2 + $0x150] sm:$0xff]
    %v810 = vld [vmem:[#allocation2 + $0x158] sm:$0xff]
    %v811 = vld [vmem:[#allocation2 + $0x160] sm:$0xff]
    %v812 = vld [vmem:[#allocation2 + $0x168] sm:$0xff]
    %v813 = vld [vmem:[#allocation2 + $0x170] sm:$0xff]
    %v814 = vld [vmem:[#allocation2 + $0x178] sm:$0xff]
    %v815 = vld [vmem:[#allocation2 + $0x180] sm:$0xff]
    %v816 = vld [vmem:[#allocation2 + $0x188] sm:$0xff]
    %v817 = vld [vmem:[#allocation2 + $0x190] sm:$0xff]
    %v818 = vld [vmem:[#allocation2 + $0x198] sm:$0xff]
    %v819 = vld [vmem:[#allocation2 + $0x1a0] sm:$0xff]
    %v820 = vld [vmem:[#allocation2 + $0x1a8] sm:$0xff]
    %v821 = vld [vmem:[#allocation2 + $0x1b0] sm:$0xff]
    %v822 = vld [vmem:[#allocation2 + $0x1b8] sm:$0xff]
    %v823 = vld [vmem:[#allocation2 + $0x1c0] sm:$0xff]
    %v824 = vld [vmem:[#allocation2 + $0x1c8] sm:$0xff]
    %v825 = vld [vmem:[#allocation2 + $0x1d0] sm:$0xff]
    %v826 = vld [vmem:[#allocation2 + $0x1d8] sm:$0xff]
    %v827 = vld [vmem:[#allocation2 + $0x1e0] sm:$0xff]
    %v828 = vld [vmem:[#allocation2 + $0x1e8] sm:$0xff]
    %v829 = vld [vmem:[#allocation2 + $0x1f0] sm:$0xff]
    %v830 = vld [vmem:[#allocation2 + $0x1f8] sm:$0xff]
    %v831 = vpack.c.bf16 %v767, %v767
    %v832 = vpack.c.bf16 %v768, %v768
    %v833 = vpack.c.bf16 %v769, %v769
    %v834 = vpack.c.bf16 %v770, %v770
    %v835 = vpack.c.bf16 %v771, %v771
    %v836 = vpack.c.bf16 %v772, %v772
    %v837 = vpack.c.bf16 %v773, %v773
    %v838 = vpack.c.bf16 %v774, %v774
    %v839 = vpack.c.bf16 %v775, %v775
    %v840 = vpack.c.bf16 %v776, %v776
    %v841 = vpack.c.bf16 %v777, %v777
    %v842 = vpack.c.bf16 %v778, %v778
    %v843 = vpack.c.bf16 %v779, %v779
    %v844 = vpack.c.bf16 %v780, %v780
    %v845 = vpack.c.bf16 %v781, %v781
    %v846 = vpack.c.bf16 %v782, %v782
    %v847 = vpack.c.bf16 %v783, %v783
    %v848 = vpack.c.bf16 %v784, %v784
    %v849 = vpack.c.bf16 %v785, %v785
    %v850 = vpack.c.bf16 %v786, %v786
    %v851 = vpack.c.bf16 %v787, %v787
    %v852 = vpack.c.bf16 %v788, %v788
    %v853 = vpack.c.bf16 %v789, %v789
    %v854 = vpack.c.bf16 %v790, %v790
    %v855 = vpack.c.bf16 %v791, %v791
    %v856 = vpack.c.bf16 %v792, %v792
    %v857 = vpack.c.bf16 %v793, %v793
    %v858 = vpack.c.bf16 %v794, %v794
    %v859 = vpack.c.bf16 %v795, %v795
    %v860 = vpack.c.bf16 %v796, %v796
    %v861 = vpack.c.bf16 %v797, %v797
    %v862 = vpack.c.bf16 %v798, %v798
    %v863 = vpack.c.bf16 %v799, %v799
    %v864 = vpack.c.bf16 %v800, %v800
    %v865 = vpack.c.bf16 %v801, %v801
    %v866 = vpack.c.bf16 %v802, %v802
    %v867 = vpack.c.bf16 %v803, %v803
    %v868 = vpack.c.bf16 %v804, %v804
    %v869 = vpack.c.bf16 %v805, %v805
    %v870 = vpack.c.bf16 %v806, %v806
    %v871 = vpack.c.bf16 %v807, %v807
    %v872 = vpack.c.bf16 %v808, %v808
    %v873 = vpack.c.bf16 %v809, %v809
    %v874 = vpack.c.bf16 %v810, %v810
    %v875 = vpack.c.bf16 %v811, %v811
    %v876 = vpack.c.bf16 %v812, %v812
    %v877 = vpack.c.bf16 %v813, %v813
    %v878 = vpack.c.bf16 %v814, %v814
    %v879 = vpack.c.bf16 %v815, %v815
    %v880 = vpack.c.bf16 %v816, %v816
    %v881 = vpack.c.bf16 %v817, %v817
    %v882 = vpack.c.bf16 %v818, %v818
    %v883 = vpack.c.bf16 %v819, %v819
    %v884 = vpack.c.bf16 %v820, %v820
    %v885 = vpack.c.bf16 %v821, %v821
    %v886 = vpack.c.bf16 %v822, %v822
    %v887 = vpack.c.bf16 %v823, %v823
    %v888 = vpack.c.bf16 %v824, %v824
    %v889 = vpack.c.bf16 %v825, %v825
    %v890 = vpack.c.bf16 %v826, %v826
    %v891 = vpack.c.bf16 %v827, %v827
    %v892 = vpack.c.bf16 %v828, %v828
    %v893 = vpack.c.bf16 %v829, %v829
    %v894 = vpack.c.bf16 %v830, %v830
    %895 = vst [vmem:[%s2] sm:$0xf] %v831
    %896 = vst [vmem:[%s2 + $0x4] sm:$0xf] %v832
    %897 = vst [vmem:[%s2 + $0x8] sm:$0xf] %v833
    %898 = vst [vmem:[%s2 + $0xc] sm:$0xf] %v834
    %899 = vst [vmem:[%s2 + $0x10] sm:$0xf] %v835
    %900 = vst [vmem:[%s2 + $0x14] sm:$0xf] %v836
    %901 = vst [vmem:[%s2 + $0x18] sm:$0xf] %v837
    %902 = vst [vmem:[%s2 + $0x1c] sm:$0xf] %v838
    %903 = vst [vmem:[%s2 + $0x20] sm:$0xf] %v839
    %904 = vst [vmem:[%s2 + $0x24] sm:$0xf] %v840
    %905 = vst [vmem:[%s2 + $0x28] sm:$0xf] %v841
    %906 = vst [vmem:[%s2 + $0x2c] sm:$0xf] %v842
    %907 = vst [vmem:[%s2 + $0x30] sm:$0xf] %v843
    %908 = vst [vmem:[%s2 + $0x34] sm:$0xf] %v844
    %909 = vst [vmem:[%s2 + $0x38] sm:$0xf] %v845
    %910 = vst [vmem:[%s2 + $0x3c] sm:$0xf] %v846
    %911 = vst [vmem:[%s2 + $0x40] sm:$0xf] %v847
    %912 = vst [vmem:[%s2 + $0x44] sm:$0xf] %v848
    %913 = vst [vmem:[%s2 + $0x48] sm:$0xf] %v849
    %914 = vst [vmem:[%s2 + $0x4c] sm:$0xf] %v850
    %915 = vst [vmem:[%s2 + $0x50] sm:$0xf] %v851
    %916 = vst [vmem:[%s2 + $0x54] sm:$0xf] %v852
    %917 = vst [vmem:[%s2 + $0x58] sm:$0xf] %v853
    %918 = vst [vmem:[%s2 + $0x5c] sm:$0xf] %v854
    %919 = vst [vmem:[%s2 + $0x60] sm:$0xf] %v855
    %920 = vst [vmem:[%s2 + $0x64] sm:$0xf] %v856
    %921 = vst [vmem:[%s2 + $0x68] sm:$0xf] %v857
    %922 = vst [vmem:[%s2 + $0x6c] sm:$0xf] %v858
    %923 = vst [vmem:[%s2 + $0x70] sm:$0xf] %v859
    %924 = vst [vmem:[%s2 + $0x74] sm:$0xf] %v860
    %925 = vst [vmem:[%s2 + $0x78] sm:$0xf] %v861
    %926 = vst [vmem:[%s2 + $0x7c] sm:$0xf] %v862
    %927 = vst [vmem:[%s2 + $0x80] sm:$0xf] %v863
    %928 = vst [vmem:[%s2 + $0x84] sm:$0xf] %v864
    %929 = vst [vmem:[%s2 + $0x88] sm:$0xf] %v865
    %930 = vst [vmem:[%s2 + $0x8c] sm:$0xf] %v866
    %931 = vst [vmem:[%s2 + $0x90] sm:$0xf] %v867
    %932 = vst [vmem:[%s2 + $0x94] sm:$0xf] %v868
    %933 = vst [vmem:[%s2 + $0x98] sm:$0xf] %v869
    %934 = vst [vmem:[%s2 + $0x9c] sm:$0xf] %v870
    %935 = vst [vmem:[%s2 + $0xa0] sm:$0xf] %v871
    %936 = vst [vmem:[%s2 + $0xa4] sm:$0xf] %v872
    %937 = vst [vmem:[%s2 + $0xa8] sm:$0xf] %v873
    %938 = vst [vmem:[%s2 + $0xac] sm:$0xf] %v874
    %939 = vst [vmem:[%s2 + $0xb0] sm:$0xf] %v875
    %940 = vst [vmem:[%s2 + $0xb4] sm:$0xf] %v876
    %941 = vst [vmem:[%s2 + $0xb8] sm:$0xf] %v877
    %942 = vst [vmem:[%s2 + $0xbc] sm:$0xf] %v878
    %943 = vst [vmem:[%s2 + $0xc0] sm:$0xf] %v879
    %944 = vst [vmem:[%s2 + $0xc4] sm:$0xf] %v880
    %945 = vst [vmem:[%s2 + $0xc8] sm:$0xf] %v881
    %946 = vst [vmem:[%s2 + $0xcc] sm:$0xf] %v882
    %947 = vst [vmem:[%s2 + $0xd0] sm:$0xf] %v883
    %948 = vst [vmem:[%s2 + $0xd4] sm:$0xf] %v884
    %949 = vst [vmem:[%s2 + $0xd8] sm:$0xf] %v885
    %950 = vst [vmem:[%s2 + $0xdc] sm:$0xf] %v886
    %951 = vst [vmem:[%s2 + $0xe0] sm:$0xf] %v887
    %952 = vst [vmem:[%s2 + $0xe4] sm:$0xf] %v888
    %953 = vst [vmem:[%s2 + $0xe8] sm:$0xf] %v889
    %954 = vst [vmem:[%s2 + $0xec] sm:$0xf] %v890
    %955 = vst [vmem:[%s2 + $0xf0] sm:$0xf] %v891
    %956 = vst [vmem:[%s2 + $0xf4] sm:$0xf] %v892
    %957 = vst [vmem:[%s2 + $0xf8] sm:$0xf] %v893
    %958 = vst [vmem:[%s2 + $0xfc] sm:$0xf] %v894
  $region17: #{basic_conv2d_forward.2} parent=0 // pred_fallthru
    _
  %s959 = smul.u32 0, 512
  %v960 = vlaneseq
  %v961 = vshrl.u32 %v960, 7
  %v962 = vadd.s32 %v961, 8
  %v963 = vadd.s32 %v961, 16
  %v964 = vadd.s32 %v961, 24
  %v965 = vadd.s32 %v961, 32
  %v966 = vadd.s32 %v961, 40
  %v967 = vadd.s32 %v961, 48
  %v968 = vadd.s32 %v961, 56
  %v969 = vadd.s32 %v961, 64
  %v970 = vadd.s32 %v961, 72
  %v971 = vadd.s32 %v961, 80
  %v972 = vadd.s32 %v961, 88
  %v973 = vadd.s32 %v961, 96
  %v974 = vadd.s32 %v961, 104
  %v975 = vadd.s32 %v961, 112
  %v976 = vadd.s32 %v961, 120
  %v977 = vadd.s32 %v961, 128
  %v978 = vadd.s32 %v961, 136
  %v979 = vadd.s32 %v961, 144
  %v980 = vadd.s32 %v961, 152
  %v981 = vadd.s32 %v961, 160
  %v982 = vadd.s32 %v961, 168
  %v983 = vadd.s32 %v961, 176
  %v984 = vadd.s32 %v961, 184
  %v985 = vadd.s32 %v961, 192
  %v986 = vadd.s32 %v961, 200
  %v987 = vadd.s32 %v961, 208
  %v988 = vadd.s32 %v961, 216
  %v989 = vadd.s32 %v961, 224
  %v990 = vadd.s32 %v961, 232
  %v991 = vadd.s32 %v961, 240
  %v992 = vadd.s32 %v961, 248
  %v993 = vadd.s32 %v961, 256
  %v994 = vadd.s32 %v961, 264
  %v995 = vadd.s32 %v961, 272
  %v996 = vadd.s32 %v961, 280
  %v997 = vadd.s32 %v961, 288
  %v998 = vadd.s32 %v961, 296
  %v999 = vadd.s32 %v961, 304
  %v1000 = vadd.s32 %v961, 312
  %v1001 = vadd.s32 %v961, 320
  %v1002 = vadd.s32 %v961, 328
  %v1003 = vadd.s32 %v961, 336
  %v1004 = vadd.s32 %v961, 344
  %v1005 = vadd.s32 %v961, 352
  %v1006 = vadd.s32 %v961, 360
  %v1007 = vadd.s32 %v961, 368
  %v1008 = vadd.s32 %v961, 376
  %v1009 = vadd.s32 %v961, 384
  %v1010 = vadd.s32 %v961, 392
  %v1011 = vadd.s32 %v961, 400
  %v1012 = vadd.s32 %v961, 408
  %v1013 = vadd.s32 %v961, 416
  %v1014 = vadd.s32 %v961, 424
  %v1015 = vadd.s32 %v961, 432
  %v1016 = vadd.s32 %v961, 440
  %v1017 = vadd.s32 %v961, 448
  %v1018 = vadd.s32 %v961, 456
  %v1019 = vadd.s32 %v961, 464
  %v1020 = vadd.s32 %v961, 472
  %v1021 = vadd.s32 %v961, 480
  %v1022 = vadd.s32 %v961, 488
  %v1023 = vadd.s32 %v961, 496
  %v1024 = vadd.s32 %v961, 504
  %v1025 = vstv %s959
  %v1026 = vadd.s32 %v1025, %v961
  %v1027 = vadd.s32 %v1025, %v962
  %v1028 = vadd.s32 %v1025, %v963
  %v1029 = vadd.s32 %v1025, %v964
  %v1030 = vadd.s32 %v1025, %v965
  %v1031 = vadd.s32 %v1025, %v966
  %v1032 = vadd.s32 %v1025, %v967
  %v1033 = vadd.s32 %v1025, %v968
  %v1034 = vadd.s32 %v1025, %v969
  %v1035 = vadd.s32 %v1025, %v970
  %v1036 = vadd.s32 %v1025, %v971
  %v1037 = vadd.s32 %v1025, %v972
  %v1038 = vadd.s32 %v1025, %v973
  %v1039 = vadd.s32 %v1025, %v974
  %v1040 = vadd.s32 %v1025, %v975
  %v1041 = vadd.s32 %v1025, %v976
  %v1042 = vadd.s32 %v1025, %v977
  %v1043 = vadd.s32 %v1025, %v978
  %v1044 = vadd.s32 %v1025, %v979
  %v1045 = vadd.s32 %v1025, %v980
  %v1046 = vadd.s32 %v1025, %v981
  %v1047 = vadd.s32 %v1025, %v982
  %v1048 = vadd.s32 %v1025, %v983
  %v1049 = vadd.s32 %v1025, %v984
  %v1050 = vadd.s32 %v1025, %v985
  %v1051 = vadd.s32 %v1025, %v986
  %v1052 = vadd.s32 %v1025, %v987
  %v1053 = vadd.s32 %v1025, %v988
  %v1054 = vadd.s32 %v1025, %v989
  %v1055 = vadd.s32 %v1025, %v990
  %v1056 = vadd.s32 %v1025, %v991
  %v1057 = vadd.s32 %v1025, %v992
  %v1058 = vadd.s32 %v1025, %v993
  %v1059 = vadd.s32 %v1025, %v994
  %v1060 = vadd.s32 %v1025, %v995
  %v1061 = vadd.s32 %v1025, %v996
  %v1062 = vadd.s32 %v1025, %v997
  %v1063 = vadd.s32 %v1025, %v998
  %v1064 = vadd.s32 %v1025, %v999
  %v1065 = vadd.s32 %v1025, %v1000
  %v1066 = vadd.s32 %v1025, %v1001
  %v1067 = vadd.s32 %v1025, %v1002
  %v1068 = vadd.s32 %v1025, %v1003
  %v1069 = vadd.s32 %v1025, %v1004
  %v1070 = vadd.s32 %v1025, %v1005
  %v1071 = vadd.s32 %v1025, %v1006
  %v1072 = vadd.s32 %v1025, %v1007
  %v1073 = vadd.s32 %v1025, %v1008
  %v1074 = vadd.s32 %v1025, %v1009
  %v1075 = vadd.s32 %v1025, %v1010
  %v1076 = vadd.s32 %v1025, %v1011
  %v1077 = vadd.s32 %v1025, %v1012
  %v1078 = vadd.s32 %v1025, %v1013
  %v1079 = vadd.s32 %v1025, %v1014
  %v1080 = vadd.s32 %v1025, %v1015
  %v1081 = vadd.s32 %v1025, %v1016
  %v1082 = vadd.s32 %v1025, %v1017
  %v1083 = vadd.s32 %v1025, %v1018
  %v1084 = vadd.s32 %v1025, %v1019
  %v1085 = vadd.s32 %v1025, %v1020
  %v1086 = vadd.s32 %v1025, %v1021
  %v1087 = vadd.s32 %v1025, %v1022
  %v1088 = vadd.s32 %v1025, %v1023
  %v1089 = vadd.s32 %v1025, %v1024
  %vm1090 = vcmp.lt.s32.totalorder %v1026, 512
  %vm1091 = vcmp.lt.s32.totalorder %v1027, 512
  %vm1092 = vcmp.lt.s32.totalorder %v1028, 512
  %vm1093 = vcmp.lt.s32.totalorder %v1029, 512
  %vm1094 = vcmp.lt.s32.totalorder %v1030, 512
  %vm1095 = vcmp.lt.s32.totalorder %v1031, 512
  %vm1096 = vcmp.lt.s32.totalorder %v1032, 512
  %vm1097 = vcmp.lt.s32.totalorder %v1033, 512
  %vm1098 = vcmp.lt.s32.totalorder %v1034, 512
  %vm1099 = vcmp.lt.s32.totalorder %v1035, 512
  %vm1100 = vcmp.lt.s32.totalorder %v1036, 512
  %vm1101 = vcmp.lt.s32.totalorder %v1037, 512
  %vm1102 = vcmp.lt.s32.totalorder %v1038, 512
  %vm1103 = vcmp.lt.s32.totalorder %v1039, 512
  %vm1104 = vcmp.lt.s32.totalorder %v1040, 512
  %vm1105 = vcmp.lt.s32.totalorder %v1041, 512
  %vm1106 = vcmp.lt.s32.totalorder %v1042, 512
  %vm1107 = vcmp.lt.s32.totalorder %v1043, 512
  %vm1108 = vcmp.lt.s32.totalorder %v1044, 512
  %vm1109 = vcmp.lt.s32.totalorder %v1045, 512
  %vm1110 = vcmp.lt.s32.totalorder %v1046, 512
  %vm1111 = vcmp.lt.s32.totalorder %v1047, 512
  %vm1112 = vcmp.lt.s32.totalorder %v1048, 512
  %vm1113 = vcmp.lt.s32.totalorder %v1049, 512
  %vm1114 = vcmp.lt.s32.totalorder %v1050, 512
  %vm1115 = vcmp.lt.s32.totalorder %v1051, 512
  %vm1116 = vcmp.lt.s32.totalorder %v1052, 512
  %vm1117 = vcmp.lt.s32.totalorder %v1053, 512
  %vm1118 = vcmp.lt.s32.totalorder %v1054, 512
  %vm1119 = vcmp.lt.s32.totalorder %v1055, 512
  %vm1120 = vcmp.lt.s32.totalorder %v1056, 512
  %vm1121 = vcmp.lt.s32.totalorder %v1057, 512
  %vm1122 = vcmp.lt.s32.totalorder %v1058, 512
  %vm1123 = vcmp.lt.s32.totalorder %v1059, 512
  %vm1124 = vcmp.lt.s32.totalorder %v1060, 512
  %vm1125 = vcmp.lt.s32.totalorder %v1061, 512
  %vm1126 = vcmp.lt.s32.totalorder %v1062, 512
  %vm1127 = vcmp.lt.s32.totalorder %v1063, 512
  %vm1128 = vcmp.lt.s32.totalorder %v1064, 512
  %vm1129 = vcmp.lt.s32.totalorder %v1065, 512
  %vm1130 = vcmp.lt.s32.totalorder %v1066, 512
  %vm1131 = vcmp.lt.s32.totalorder %v1067, 512
  %vm1132 = vcmp.lt.s32.totalorder %v1068, 512
  %vm1133 = vcmp.lt.s32.totalorder %v1069, 512
  %vm1134 = vcmp.lt.s32.totalorder %v1070, 512
  %vm1135 = vcmp.lt.s32.totalorder %v1071, 512
  %vm1136 = vcmp.lt.s32.totalorder %v1072, 512
  %vm1137 = vcmp.lt.s32.totalorder %v1073, 512
  %vm1138 = vcmp.lt.s32.totalorder %v1074, 512
  %vm1139 = vcmp.lt.s32.totalorder %v1075, 512
  %vm1140 = vcmp.lt.s32.totalorder %v1076, 512
  %vm1141 = vcmp.lt.s32.totalorder %v1077, 512
  %vm1142 = vcmp.lt.s32.totalorder %v1078, 512
  %vm1143 = vcmp.lt.s32.totalorder %v1079, 512
  %vm1144 = vcmp.lt.s32.totalorder %v1080, 512
  %vm1145 = vcmp.lt.s32.totalorder %v1081, 512
  %vm1146 = vcmp.lt.s32.totalorder %v1082, 512
  %vm1147 = vcmp.lt.s32.totalorder %v1083, 512
  %vm1148 = vcmp.lt.s32.totalorder %v1084, 512
  %vm1149 = vcmp.lt.s32.totalorder %v1085, 512
  %vm1150 = vcmp.lt.s32.totalorder %v1086, 512
  %vm1151 = vcmp.lt.s32.totalorder %v1087, 512
  %vm1152 = vcmp.lt.s32.totalorder %v1088, 512
  %vm1153 = vcmp.lt.s32.totalorder %v1089, 512
  %v1154 = vsel %vm1090, 1, 0
  %v1155 = vsel %vm1091, 1, 0
  %v1156 = vsel %vm1092, 1, 0
  %v1157 = vsel %vm1093, 1, 0
  %v1158 = vsel %vm1094, 1, 0
  %v1159 = vsel %vm1095, 1, 0
  %v1160 = vsel %vm1096, 1, 0
  %v1161 = vsel %vm1097, 1, 0
  %v1162 = vsel %vm1098, 1, 0
  %v1163 = vsel %vm1099, 1, 0
  %v1164 = vsel %vm1100, 1, 0
  %v1165 = vsel %vm1101, 1, 0
  %v1166 = vsel %vm1102, 1, 0
  %v1167 = vsel %vm1103, 1, 0
  %v1168 = vsel %vm1104, 1, 0
  %v1169 = vsel %vm1105, 1, 0
  %v1170 = vsel %vm1106, 1, 0
  %v1171 = vsel %vm1107, 1, 0
  %v1172 = vsel %vm1108, 1, 0
  %v1173 = vsel %vm1109, 1, 0
  %v1174 = vsel %vm1110, 1, 0
  %v1175 = vsel %vm1111, 1, 0
  %v1176 = vsel %vm1112, 1, 0
  %v1177 = vsel %vm1113, 1, 0
  %v1178 = vsel %vm1114, 1, 0
  %v1179 = vsel %vm1115, 1, 0
  %v1180 = vsel %vm1116, 1, 0
  %v1181 = vsel %vm1117, 1, 0
  %v1182 = vsel %vm1118, 1, 0
  %v1183 = vsel %vm1119, 1, 0
  %v1184 = vsel %vm1120, 1, 0
  %v1185 = vsel %vm1121, 1, 0
  %v1186 = vsel %vm1122, 1, 0
  %v1187 = vsel %vm1123, 1, 0
  %v1188 = vsel %vm1124, 1, 0
  %v1189 = vsel %vm1125, 1, 0
  %v1190 = vsel %vm1126, 1, 0
  %v1191 = vsel %vm1127, 1, 0
  %v1192 = vsel %vm1128, 1, 0
  %v1193 = vsel %vm1129, 1, 0
  %v1194 = vsel %vm1130, 1, 0
  %v1195 = vsel %vm1131, 1, 0
  %v1196 = vsel %vm1132, 1, 0
  %v1197 = vsel %vm1133, 1, 0
  %v1198 = vsel %vm1134, 1, 0
  %v1199 = vsel %vm1135, 1, 0
  %v1200 = vsel %vm1136, 1, 0
  %v1201 = vsel %vm1137, 1, 0
  %v1202 = vsel %vm1138, 1, 0
  %v1203 = vsel %vm1139, 1, 0
  %v1204 = vsel %vm1140, 1, 0
  %v1205 = vsel %vm1141, 1, 0
  %v1206 = vsel %vm1142, 1, 0
  %v1207 = vsel %vm1143, 1, 0
  %v1208 = vsel %vm1144, 1, 0
  %v1209 = vsel %vm1145, 1, 0
  %v1210 = vsel %vm1146, 1, 0
  %v1211 = vsel %vm1147, 1, 0
  %v1212 = vsel %vm1148, 1, 0
  %v1213 = vsel %vm1149, 1, 0
  %v1214 = vsel %vm1150, 1, 0
  %v1215 = vsel %vm1151, 1, 0
  %v1216 = vsel %vm1152, 1, 0
  %v1217 = vsel %vm1153, 1, 0
  %v1218 = vcvt.s32.f32 %v1154
  %v1219 = vcvt.s32.f32 %v1155
  %v1220 = vcvt.s32.f32 %v1156
  %v1221 = vcvt.s32.f32 %v1157
  %v1222 = vcvt.s32.f32 %v1158
  %v1223 = vcvt.s32.f32 %v1159
  %v1224 = vcvt.s32.f32 %v1160
  %v1225 = vcvt.s32.f32 %v1161
  %v1226 = vcvt.s32.f32 %v1162
  %v1227 = vcvt.s32.f32 %v1163
  %v1228 = vcvt.s32.f32 %v1164
  %v1229 = vcvt.s32.f32 %v1165
  %v1230 = vcvt.s32.f32 %v1166
  %v1231 = vcvt.s32.f32 %v1167
  %v1232 = vcvt.s32.f32 %v1168
  %v1233 = vcvt.s32.f32 %v1169
  %v1234 = vcvt.s32.f32 %v1170
  %v1235 = vcvt.s32.f32 %v1171
  %v1236 = vcvt.s32.f32 %v1172
  %v1237 = vcvt.s32.f32 %v1173
  %v1238 = vcvt.s32.f32 %v1174
  %v1239 = vcvt.s32.f32 %v1175
  %v1240 = vcvt.s32.f32 %v1176
  %v1241 = vcvt.s32.f32 %v1177
  %v1242 = vcvt.s32.f32 %v1178
  %v1243 = vcvt.s32.f32 %v1179
  %v1244 = vcvt.s32.f32 %v1180
  %v1245 = vcvt.s32.f32 %v1181
  %v1246 = vcvt.s32.f32 %v1182
  %v1247 = vcvt.s32.f32 %v1183
  %v1248 = vcvt.s32.f32 %v1184
  %v1249 = vcvt.s32.f32 %v1185
  %v1250 = vcvt.s32.f32 %v1186
  %v1251 = vcvt.s32.f32 %v1187
  %v1252 = vcvt.s32.f32 %v1188
  %v1253 = vcvt.s32.f32 %v1189
  %v1254 = vcvt.s32.f32 %v1190
  %v1255 = vcvt.s32.f32 %v1191
  %v1256 = vcvt.s32.f32 %v1192
  %v1257 = vcvt.s32.f32 %v1193
  %v1258 = vcvt.s32.f32 %v1194
  %v1259 = vcvt.s32.f32 %v1195
  %v1260 = vcvt.s32.f32 %v1196
  %v1261 = vcvt.s32.f32 %v1197
  %v1262 = vcvt.s32.f32 %v1198
  %v1263 = vcvt.s32.f32 %v1199
  %v1264 = vcvt.s32.f32 %v1200
  %v1265 = vcvt.s32.f32 %v1201
  %v1266 = vcvt.s32.f32 %v1202
  %v1267 = vcvt.s32.f32 %v1203
  %v1268 = vcvt.s32.f32 %v1204
  %v1269 = vcvt.s32.f32 %v1205
  %v1270 = vcvt.s32.f32 %v1206
  %v1271 = vcvt.s32.f32 %v1207
  %v1272 = vcvt.s32.f32 %v1208
  %v1273 = vcvt.s32.f32 %v1209
  %v1274 = vcvt.s32.f32 %v1210
  %v1275 = vcvt.s32.f32 %v1211
  %v1276 = vcvt.s32.f32 %v1212
  %v1277 = vcvt.s32.f32 %v1213
  %v1278 = vcvt.s32.f32 %v1214
  %v1279 = vcvt.s32.f32 %v1215
  %v1280 = vcvt.s32.f32 %v1216
  %v1281 = vcvt.s32.f32 %v1217
  %p1282 = scmp.eq.s32.totalorder 0, 0
  %p1283 = pnand %p15, %p1282
  %p1284 = pneg %p1283
  // Predicated region
  $region18: #{basic_conv2d_forward.2} parent=0 // pred_check
    _
  $region19: #{basic_conv2d_forward.2} parent=0 // pred_check_branch
    %1286 = sbr.rel (%p1283) target = $region21
  $region20: #{basic_conv2d_forward.2} parent=0 // pred_region
    %v1287 = vld [vmem:[#allocation2] sm:$0xff]
    %v1288 = vld [vmem:[#allocation2 + $0x8] sm:$0xff]
    %v1289 = vld [vmem:[#allocation2 + $0x10] sm:$0xff]
    %v1290 = vld [vmem:[#allocation2 + $0x18] sm:$0xff]
    %v1291 = vld [vmem:[#allocation2 + $0x20] sm:$0xff]
    %v1292 = vld [vmem:[#allocation2 + $0x28] sm:$0xff]
    %v1293 = vld [vmem:[#allocation2 + $0x30] sm:$0xff]
    %v1294 = vld [vmem:[#allocation2 + $0x38] sm:$0xff]
    %v1295 = vld [vmem:[#allocation2 + $0x40] sm:$0xff]
    %v1296 = vld [vmem:[#allocation2 + $0x48] sm:$0xff]
    %v1297 = vld [vmem:[#allocation2 + $0x50] sm:$0xff]
    %v1298 = vld [vmem:[#allocation2 + $0x58] sm:$0xff]
    %v1299 = vld [vmem:[#allocation2 + $0x60] sm:$0xff]
    %v1300 = vld [vmem:[#allocation2 + $0x68] sm:$0xff]
    %v1301 = vld [vmem:[#allocation2 + $0x70] sm:$0xff]
    %v1302 = vld [vmem:[#allocation2 + $0x78] sm:$0xff]
    %v1303 = vld [vmem:[#allocation2 + $0x80] sm:$0xff]
    %v1304 = vld [vmem:[#allocation2 + $0x88] sm:$0xff]
    %v1305 = vld [vmem:[#allocation2 + $0x90] sm:$0xff]
    %v1306 = vld [vmem:[#allocation2 + $0x98] sm:$0xff]
    %v1307 = vld [vmem:[#allocation2 + $0xa0] sm:$0xff]
    %v1308 = vld [vmem:[#allocation2 + $0xa8] sm:$0xff]
    %v1309 = vld [vmem:[#allocation2 + $0xb0] sm:$0xff]
    %v1310 = vld [vmem:[#allocation2 + $0xb8] sm:$0xff]
    %v1311 = vld [vmem:[#allocation2 + $0xc0] sm:$0xff]
    %v1312 = vld [vmem:[#allocation2 + $0xc8] sm:$0xff]
    %v1313 = vld [vmem:[#allocation2 + $0xd0] sm:$0xff]
    %v1314 = vld [vmem:[#allocation2 + $0xd8] sm:$0xff]
    %v1315 = vld [vmem:[#allocation2 + $0xe0] sm:$0xff]
    %v1316 = vld [vmem:[#allocation2 + $0xe8] sm:$0xff]
    %v1317 = vld [vmem:[#allocation2 + $0xf0] sm:$0xff]
    %v1318 = vld [vmem:[#allocation2 + $0xf8] sm:$0xff]
    %v1319 = vld [vmem:[#allocation2 + $0x100] sm:$0xff]
    %v1320 = vld [vmem:[#allocation2 + $0x108] sm:$0xff]
    %v1321 = vld [vmem:[#allocation2 + $0x110] sm:$0xff]
    %v1322 = vld [vmem:[#allocation2 + $0x118] sm:$0xff]
    %v1323 = vld [vmem:[#allocation2 + $0x120] sm:$0xff]
    %v1324 = vld [vmem:[#allocation2 + $0x128] sm:$0xff]
    %v1325 = vld [vmem:[#allocation2 + $0x130] sm:$0xff]
    %v1326 = vld [vmem:[#allocation2 + $0x138] sm:$0xff]
    %v1327 = vld [vmem:[#allocation2 + $0x140] sm:$0xff]
    %v1328 = vld [vmem:[#allocation2 + $0x148] sm:$0xff]
    %v1329 = vld [vmem:[#allocation2 + $0x150] sm:$0xff]
    %v1330 = vld [vmem:[#allocation2 + $0x158] sm:$0xff]
    %v1331 = vld [vmem:[#allocation2 + $0x160] sm:$0xff]
    %v1332 = vld [vmem:[#allocation2 + $0x168] sm:$0xff]
    %v1333 = vld [vmem:[#allocation2 + $0x170] sm:$0xff]
    %v1334 = vld [vmem:[#allocation2 + $0x178] sm:$0xff]
    %v1335 = vld [vmem:[#allocation2 + $0x180] sm:$0xff]
    %v1336 = vld [vmem:[#allocation2 + $0x188] sm:$0xff]
    %v1337 = vld [vmem:[#allocation2 + $0x190] sm:$0xff]
    %v1338 = vld [vmem:[#allocation2 + $0x198] sm:$0xff]
    %v1339 = vld [vmem:[#allocation2 + $0x1a0] sm:$0xff]
    %v1340 = vld [vmem:[#allocation2 + $0x1a8] sm:$0xff]
    %v1341 = vld [vmem:[#allocation2 + $0x1b0] sm:$0xff]
    %v1342 = vld [vmem:[#allocation2 + $0x1b8] sm:$0xff]
    %v1343 = vld [vmem:[#allocation2 + $0x1c0] sm:$0xff]
    %v1344 = vld [vmem:[#allocation2 + $0x1c8] sm:$0xff]
    %v1345 = vld [vmem:[#allocation2 + $0x1d0] sm:$0xff]
    %v1346 = vld [vmem:[#allocation2 + $0x1d8] sm:$0xff]
    %v1347 = vld [vmem:[#allocation2 + $0x1e0] sm:$0xff]
    %v1348 = vld [vmem:[#allocation2 + $0x1e8] sm:$0xff]
    %v1349 = vld [vmem:[#allocation2 + $0x1f0] sm:$0xff]
    %v1350 = vld [vmem:[#allocation2 + $0x1f8] sm:$0xff]
    %v1351 = vmul.f32 %v1287, %v1218
    %v1352 = vmul.f32 %v1288, %v1219
    %v1353 = vmul.f32 %v1289, %v1220
    %v1354 = vmul.f32 %v1290, %v1221
    %v1355 = vmul.f32 %v1291, %v1222
    %v1356 = vmul.f32 %v1292, %v1223
    %v1357 = vmul.f32 %v1293, %v1224
    %v1358 = vmul.f32 %v1294, %v1225
    %v1359 = vmul.f32 %v1295, %v1226
    %v1360 = vmul.f32 %v1296, %v1227
    %v1361 = vmul.f32 %v1297, %v1228
    %v1362 = vmul.f32 %v1298, %v1229
    %v1363 = vmul.f32 %v1299, %v1230
    %v1364 = vmul.f32 %v1300, %v1231
    %v1365 = vmul.f32 %v1301, %v1232
    %v1366 = vmul.f32 %v1302, %v1233
    %v1367 = vmul.f32 %v1303, %v1234
    %v1368 = vmul.f32 %v1304, %v1235
    %v1369 = vmul.f32 %v1305, %v1236
    %v1370 = vmul.f32 %v1306, %v1237
    %v1371 = vmul.f32 %v1307, %v1238
    %v1372 = vmul.f32 %v1308, %v1239
    %v1373 = vmul.f32 %v1309, %v1240
    %v1374 = vmul.f32 %v1310, %v1241
    %v1375 = vmul.f32 %v1311, %v1242
    %v1376 = vmul.f32 %v1312, %v1243
    %v1377 = vmul.f32 %v1313, %v1244
    %v1378 = vmul.f32 %v1314, %v1245
    %v1379 = vmul.f32 %v1315, %v1246
    %v1380 = vmul.f32 %v1316, %v1247
    %v1381 = vmul.f32 %v1317, %v1248
    %v1382 = vmul.f32 %v1318, %v1249
    %v1383 = vmul.f32 %v1319, %v1250
    %v1384 = vmul.f32 %v1320, %v1251
    %v1385 = vmul.f32 %v1321, %v1252
    %v1386 = vmul.f32 %v1322, %v1253
    %v1387 = vmul.f32 %v1323, %v1254
    %v1388 = vmul.f32 %v1324, %v1255
    %v1389 = vmul.f32 %v1325, %v1256
    %v1390 = vmul.f32 %v1326, %v1257
    %v1391 = vmul.f32 %v1327, %v1258
    %v1392 = vmul.f32 %v1328, %v1259
    %v1393 = vmul.f32 %v1329, %v1260
    %v1394 = vmul.f32 %v1330, %v1261
    %v1395 = vmul.f32 %v1331, %v1262
    %v1396 = vmul.f32 %v1332, %v1263
    %v1397 = vmul.f32 %v1333, %v1264
    %v1398 = vmul.f32 %v1334, %v1265
    %v1399 = vmul.f32 %v1335, %v1266
    %v1400 = vmul.f32 %v1336, %v1267
    %v1401 = vmul.f32 %v1337, %v1268
    %v1402 = vmul.f32 %v1338, %v1269
    %v1403 = vmul.f32 %v1339, %v1270
    %v1404 = vmul.f32 %v1340, %v1271
    %v1405 = vmul.f32 %v1341, %v1272
    %v1406 = vmul.f32 %v1342, %v1273
    %v1407 = vmul.f32 %v1343, %v1274
    %v1408 = vmul.f32 %v1344, %v1275
    %v1409 = vmul.f32 %v1345, %v1276
    %v1410 = vmul.f32 %v1346, %v1277
    %v1411 = vmul.f32 %v1347, %v1278
    %v1412 = vmul.f32 %v1348, %v1279
    %v1413 = vmul.f32 %v1349, %v1280
    %v1414 = vmul.f32 %v1350, %v1281
    %v1415 = vadd.f32 %v1351, %v1352
    %v1416 = vadd.f32 %v1415, %v1353
    %v1417 = vadd.f32 %v1416, %v1354
    %v1418 = vadd.f32 %v1417, %v1355
    %v1419 = vadd.f32 %v1418, %v1356
    %v1420 = vadd.f32 %v1419, %v1357
    %v1421 = vadd.f32 %v1420, %v1358
    %v1422 = vadd.f32 %v1421, %v1359
    %v1423 = vadd.f32 %v1422, %v1360
    %v1424 = vadd.f32 %v1423, %v1361
    %v1425 = vadd.f32 %v1424, %v1362
    %v1426 = vadd.f32 %v1425, %v1363
    %v1427 = vadd.f32 %v1426, %v1364
    %v1428 = vadd.f32 %v1427, %v1365
    %v1429 = vadd.f32 %v1428, %v1366
    %v1430 = vadd.f32 %v1429, %v1367
    %v1431 = vadd.f32 %v1430, %v1368
    %v1432 = vadd.f32 %v1431, %v1369
    %v1433 = vadd.f32 %v1432, %v1370
    %v1434 = vadd.f32 %v1433, %v1371
    %v1435 = vadd.f32 %v1434, %v1372
    %v1436 = vadd.f32 %v1435, %v1373
    %v1437 = vadd.f32 %v1436, %v1374
    %v1438 = vadd.f32 %v1437, %v1375
    %v1439 = vadd.f32 %v1438, %v1376
    %v1440 = vadd.f32 %v1439, %v1377
    %v1441 = vadd.f32 %v1440, %v1378
    %v1442 = vadd.f32 %v1441, %v1379
    %v1443 = vadd.f32 %v1442, %v1380
    %v1444 = vadd.f32 %v1443, %v1381
    %v1445 = vadd.f32 %v1444, %v1382
    %v1446 = vadd.f32 %v1445, %v1383
    %v1447 = vadd.f32 %v1446, %v1384
    %v1448 = vadd.f32 %v1447, %v1385
    %v1449 = vadd.f32 %v1448, %v1386
    %v1450 = vadd.f32 %v1449, %v1387
    %v1451 = vadd.f32 %v1450, %v1388
    %v1452 = vadd.f32 %v1451, %v1389
    %v1453 = vadd.f32 %v1452, %v1390
    %v1454 = vadd.f32 %v1453, %v1391
    %v1455 = vadd.f32 %v1454, %v1392
    %v1456 = vadd.f32 %v1455, %v1393
    %v1457 = vadd.f32 %v1456, %v1394
    %v1458 = vadd.f32 %v1457, %v1395
    %v1459 = vadd.f32 %v1458, %v1396
    %v1460 = vadd.f32 %v1459, %v1397
    %v1461 = vadd.f32 %v1460, %v1398
    %v1462 = vadd.f32 %v1461, %v1399
    %v1463 = vadd.f32 %v1462, %v1400
    %v1464 = vadd.f32 %v1463, %v1401
    %v1465 = vadd.f32 %v1464, %v1402
    %v1466 = vadd.f32 %v1465, %v1403
    %v1467 = vadd.f32 %v1466, %v1404
    %v1468 = vadd.f32 %v1467, %v1405
    %v1469 = vadd.f32 %v1468, %v1406
    %v1470 = vadd.f32 %v1469, %v1407
    %v1471 = vadd.f32 %v1470, %v1408
    %v1472 = vadd.f32 %v1471, %v1409
    %v1473 = vadd.f32 %v1472, %v1410
    %v1474 = vadd.f32 %v1473, %v1411
    %v1475 = vadd.f32 %v1474, %v1412
    %v1476 = vadd.f32 %v1475, %v1413
    %v1477 = vadd.f32 %v1476, %v1414
    %v1478 = vrot.slane %v1477, 4
    %v1479 = vadd.f32 %v1477, %v1478
    %v1480 = vrot.slane %v1479, 2
    %v1481 = vadd.f32 %v1479, %v1480
    %v1482 = vrot.slane %v1481, 1
    %v1483 = vadd.f32 %v1481, %v1482
    %v1484 = vmul.f32 %v1483, 0.001953125
    %v1485 = vsub.f32 %v1287, %v1484
    %v1486 = vsub.f32 %v1288, %v1484
    %v1487 = vsub.f32 %v1289, %v1484
    %v1488 = vsub.f32 %v1290, %v1484
    %v1489 = vsub.f32 %v1291, %v1484
    %v1490 = vsub.f32 %v1292, %v1484
    %v1491 = vsub.f32 %v1293, %v1484
    %v1492 = vsub.f32 %v1294, %v1484
    %v1493 = vsub.f32 %v1295, %v1484
    %v1494 = vsub.f32 %v1296, %v1484
    %v1495 = vsub.f32 %v1297, %v1484
    %v1496 = vsub.f32 %v1298, %v1484
    %v1497 = vsub.f32 %v1299, %v1484
    %v1498 = vsub.f32 %v1300, %v1484
    %v1499 = vsub.f32 %v1301, %v1484
    %v1500 = vsub.f32 %v1302, %v1484
    %v1501 = vsub.f32 %v1303, %v1484
    %v1502 = vsub.f32 %v1304, %v1484
    %v1503 = vsub.f32 %v1305, %v1484
    %v1504 = vsub.f32 %v1306, %v1484
    %v1505 = vsub.f32 %v1307, %v1484
    %v1506 = vsub.f32 %v1308, %v1484
    %v1507 = vsub.f32 %v1309, %v1484
    %v1508 = vsub.f32 %v1310, %v1484
    %v1509 = vsub.f32 %v1311, %v1484
    %v1510 = vsub.f32 %v1312, %v1484
    %v1511 = vsub.f32 %v1313, %v1484
    %v1512 = vsub.f32 %v1314, %v1484
    %v1513 = vsub.f32 %v1315, %v1484
    %v1514 = vsub.f32 %v1316, %v1484
    %v1515 = vsub.f32 %v1317, %v1484
    %v1516 = vsub.f32 %v1318, %v1484
    %v1517 = vsub.f32 %v1319, %v1484
    %v1518 = vsub.f32 %v1320, %v1484
    %v1519 = vsub.f32 %v1321, %v1484
    %v1520 = vsub.f32 %v1322, %v1484
    %v1521 = vsub.f32 %v1323, %v1484
    %v1522 = vsub.f32 %v1324, %v1484
    %v1523 = vsub.f32 %v1325, %v1484
    %v1524 = vsub.f32 %v1326, %v1484
    %v1525 = vsub.f32 %v1327, %v1484
    %v1526 = vsub.f32 %v1328, %v1484
    %v1527 = vsub.f32 %v1329, %v1484
    %v1528 = vsub.f32 %v1330, %v1484
    %v1529 = vsub.f32 %v1331, %v1484
    %v1530 = vsub.f32 %v1332, %v1484
    %v1531 = vsub.f32 %v1333, %v1484
    %v1532 = vsub.f32 %v1334, %v1484
    %v1533 = vsub.f32 %v1335, %v1484
    %v1534 = vsub.f32 %v1336, %v1484
    %v1535 = vsub.f32 %v1337, %v1484
    %v1536 = vsub.f32 %v1338, %v1484
    %v1537 = vsub.f32 %v1339, %v1484
    %v1538 = vsub.f32 %v1340, %v1484
    %v1539 = vsub.f32 %v1341, %v1484
    %v1540 = vsub.f32 %v1342, %v1484
    %v1541 = vsub.f32 %v1343, %v1484
    %v1542 = vsub.f32 %v1344, %v1484
    %v1543 = vsub.f32 %v1345, %v1484
    %v1544 = vsub.f32 %v1346, %v1484
    %v1545 = vsub.f32 %v1347, %v1484
    %v1546 = vsub.f32 %v1348, %v1484
    %v1547 = vsub.f32 %v1349, %v1484
    %v1548 = vsub.f32 %v1350, %v1484
    %v1549 = vmul.f32 %v1485, %v1218
    %v1550 = vmul.f32 %v1486, %v1219
    %v1551 = vmul.f32 %v1487, %v1220
    %v1552 = vmul.f32 %v1488, %v1221
    %v1553 = vmul.f32 %v1489, %v1222
    %v1554 = vmul.f32 %v1490, %v1223
    %v1555 = vmul.f32 %v1491, %v1224
    %v1556 = vmul.f32 %v1492, %v1225
    %v1557 = vmul.f32 %v1493, %v1226
    %v1558 = vmul.f32 %v1494, %v1227
    %v1559 = vmul.f32 %v1495, %v1228
    %v1560 = vmul.f32 %v1496, %v1229
    %v1561 = vmul.f32 %v1497, %v1230
    %v1562 = vmul.f32 %v1498, %v1231
    %v1563 = vmul.f32 %v1499, %v1232
    %v1564 = vmul.f32 %v1500, %v1233
    %v1565 = vmul.f32 %v1501, %v1234
    %v1566 = vmul.f32 %v1502, %v1235
    %v1567 = vmul.f32 %v1503, %v1236
    %v1568 = vmul.f32 %v1504, %v1237
    %v1569 = vmul.f32 %v1505, %v1238
    %v1570 = vmul.f32 %v1506, %v1239
    %v1571 = vmul.f32 %v1507, %v1240
    %v1572 = vmul.f32 %v1508, %v1241
    %v1573 = vmul.f32 %v1509, %v1242
    %v1574 = vmul.f32 %v1510, %v1243
    %v1575 = vmul.f32 %v1511, %v1244
    %v1576 = vmul.f32 %v1512, %v1245
    %v1577 = vmul.f32 %v1513, %v1246
    %v1578 = vmul.f32 %v1514, %v1247
    %v1579 = vmul.f32 %v1515, %v1248
    %v1580 = vmul.f32 %v1516, %v1249
    %v1581 = vmul.f32 %v1517, %v1250
    %v1582 = vmul.f32 %v1518, %v1251
    %v1583 = vmul.f32 %v1519, %v1252
    %v1584 = vmul.f32 %v1520, %v1253
    %v1585 = vmul.f32 %v1521, %v1254
    %v1586 = vmul.f32 %v1522, %v1255
    %v1587 = vmul.f32 %v1523, %v1256
    %v1588 = vmul.f32 %v1524, %v1257
    %v1589 = vmul.f32 %v1525, %v1258
    %v1590 = vmul.f32 %v1526, %v1259
    %v1591 = vmul.f32 %v1527, %v1260
    %v1592 = vmul.f32 %v1528, %v1261
    %v1593 = vmul.f32 %v1529, %v1262
    %v1594 = vmul.f32 %v1530, %v1263
    %v1595 = vmul.f32 %v1531, %v1264
    %v1596 = vmul.f32 %v1532, %v1265
    %v1597 = vmul.f32 %v1533, %v1266
    %v1598 = vmul.f32 %v1534, %v1267
    %v1599 = vmul.f32 %v1535, %v1268
    %v1600 = vmul.f32 %v1536, %v1269
    %v1601 = vmul.f32 %v1537, %v1270
    %v1602 = vmul.f32 %v1538, %v1271
    %v1603 = vmul.f32 %v1539, %v1272
    %v1604 = vmul.f32 %v1540, %v1273
    %v1605 = vmul.f32 %v1541, %v1274
    %v1606 = vmul.f32 %v1542, %v1275
    %v1607 = vmul.f32 %v1543, %v1276
    %v1608 = vmul.f32 %v1544, %v1277
    %v1609 = vmul.f32 %v1545, %v1278
    %v1610 = vmul.f32 %v1546, %v1279
    %v1611 = vmul.f32 %v1547, %v1280
    %v1612 = vmul.f32 %v1548, %v1281
    %1613 = vst [vmem:[%s5] sm:$0x1] %v1484
    %1614 = vst [vmem:[%s3] sm:$0x1] %v1483
    %v1615 = vmul.f32 %v1549, %v1549
    %v1616 = vmul.f32 %v1550, %v1550
    %v1617 = vmul.f32 %v1551, %v1551
    %v1618 = vmul.f32 %v1552, %v1552
    %v1619 = vmul.f32 %v1553, %v1553
    %v1620 = vmul.f32 %v1554, %v1554
    %v1621 = vmul.f32 %v1555, %v1555
    %v1622 = vmul.f32 %v1556, %v1556
    %v1623 = vmul.f32 %v1557, %v1557
    %v1624 = vmul.f32 %v1558, %v1558
    %v1625 = vmul.f32 %v1559, %v1559
    %v1626 = vmul.f32 %v1560, %v1560
    %v1627 = vmul.f32 %v1561, %v1561
    %v1628 = vmul.f32 %v1562, %v1562
    %v1629 = vmul.f32 %v1563, %v1563
    %v1630 = vmul.f32 %v1564, %v1564
    %v1631 = vmul.f32 %v1565, %v1565
    %v1632 = vmul.f32 %v1566, %v1566
    %v1633 = vmul.f32 %v1567, %v1567
    %v1634 = vmul.f32 %v1568, %v1568
    %v1635 = vmul.f32 %v1569, %v1569
    %v1636 = vmul.f32 %v1570, %v1570
    %v1637 = vmul.f32 %v1571, %v1571
    %v1638 = vmul.f32 %v1572, %v1572
    %v1639 = vmul.f32 %v1573, %v1573
    %v1640 = vmul.f32 %v1574, %v1574
    %v1641 = vmul.f32 %v1575, %v1575
    %v1642 = vmul.f32 %v1576, %v1576
    %v1643 = vmul.f32 %v1577, %v1577
    %v1644 = vmul.f32 %v1578, %v1578
    %v1645 = vmul.f32 %v1579, %v1579
    %v1646 = vmul.f32 %v1580, %v1580
    %v1647 = vmul.f32 %v1581, %v1581
    %v1648 = vmul.f32 %v1582, %v1582
    %v1649 = vmul.f32 %v1583, %v1583
    %v1650 = vmul.f32 %v1584, %v1584
    %v1651 = vmul.f32 %v1585, %v1585
    %v1652 = vmul.f32 %v1586, %v1586
    %v1653 = vmul.f32 %v1587, %v1587
    %v1654 = vmul.f32 %v1588, %v1588
    %v1655 = vmul.f32 %v1589, %v1589
    %v1656 = vmul.f32 %v1590, %v1590
    %v1657 = vmul.f32 %v1591, %v1591
    %v1658 = vmul.f32 %v1592, %v1592
    %v1659 = vmul.f32 %v1593, %v1593
    %v1660 = vmul.f32 %v1594, %v1594
    %v1661 = vmul.f32 %v1595, %v1595
    %v1662 = vmul.f32 %v1596, %v1596
    %v1663 = vmul.f32 %v1597, %v1597
    %v1664 = vmul.f32 %v1598, %v1598
    %v1665 = vmul.f32 %v1599, %v1599
    %v1666 = vmul.f32 %v1600, %v1600
    %v1667 = vmul.f32 %v1601, %v1601
    %v1668 = vmul.f32 %v1602, %v1602
    %v1669 = vmul.f32 %v1603, %v1603
    %v1670 = vmul.f32 %v1604, %v1604
    %v1671 = vmul.f32 %v1605, %v1605
    %v1672 = vmul.f32 %v1606, %v1606
    %v1673 = vmul.f32 %v1607, %v1607
    %v1674 = vmul.f32 %v1608, %v1608
    %v1675 = vmul.f32 %v1609, %v1609
    %v1676 = vmul.f32 %v1610, %v1610
    %v1677 = vmul.f32 %v1611, %v1611
    %v1678 = vmul.f32 %v1612, %v1612
    %v1679 = vadd.f32 %v1615, %v1616
    %v1680 = vadd.f32 %v1679, %v1617
    %v1681 = vadd.f32 %v1680, %v1618
    %v1682 = vadd.f32 %v1681, %v1619
    %v1683 = vadd.f32 %v1682, %v1620
    %v1684 = vadd.f32 %v1683, %v1621
    %v1685 = vadd.f32 %v1684, %v1622
    %v1686 = vadd.f32 %v1685, %v1623
    %v1687 = vadd.f32 %v1686, %v1624
    %v1688 = vadd.f32 %v1687, %v1625
    %v1689 = vadd.f32 %v1688, %v1626
    %v1690 = vadd.f32 %v1689, %v1627
    %v1691 = vadd.f32 %v1690, %v1628
    %v1692 = vadd.f32 %v1691, %v1629
    %v1693 = vadd.f32 %v1692, %v1630
    %v1694 = vadd.f32 %v1693, %v1631
    %v1695 = vadd.f32 %v1694, %v1632
    %v1696 = vadd.f32 %v1695, %v1633
    %v1697 = vadd.f32 %v1696, %v1634
    %v1698 = vadd.f32 %v1697, %v1635
    %v1699 = vadd.f32 %v1698, %v1636
    %v1700 = vadd.f32 %v1699, %v1637
    %v1701 = vadd.f32 %v1700, %v1638
    %v1702 = vadd.f32 %v1701, %v1639
    %v1703 = vadd.f32 %v1702, %v1640
    %v1704 = vadd.f32 %v1703, %v1641
    %v1705 = vadd.f32 %v1704, %v1642
    %v1706 = vadd.f32 %v1705, %v1643
    %v1707 = vadd.f32 %v1706, %v1644
    %v1708 = vadd.f32 %v1707, %v1645
    %v1709 = vadd.f32 %v1708, %v1646
    %v1710 = vadd.f32 %v1709, %v1647
    %v1711 = vadd.f32 %v1710, %v1648
    %v1712 = vadd.f32 %v1711, %v1649
    %v1713 = vadd.f32 %v1712, %v1650
    %v1714 = vadd.f32 %v1713, %v1651
    %v1715 = vadd.f32 %v1714, %v1652
    %v1716 = vadd.f32 %v1715, %v1653
    %v1717 = vadd.f32 %v1716, %v1654
    %v1718 = vadd.f32 %v1717, %v1655
    %v1719 = vadd.f32 %v1718, %v1656
    %v1720 = vadd.f32 %v1719, %v1657
    %v1721 = vadd.f32 %v1720, %v1658
    %v1722 = vadd.f32 %v1721, %v1659
    %v1723 = vadd.f32 %v1722, %v1660
    %v1724 = vadd.f32 %v1723, %v1661
    %v1725 = vadd.f32 %v1724, %v1662
    %v1726 = vadd.f32 %v1725, %v1663
    %v1727 = vadd.f32 %v1726, %v1664
    %v1728 = vadd.f32 %v1727, %v1665
    %v1729 = vadd.f32 %v1728, %v1666
    %v1730 = vadd.f32 %v1729, %v1667
    %v1731 = vadd.f32 %v1730, %v1668
    %v1732 = vadd.f32 %v1731, %v1669
    %v1733 = vadd.f32 %v1732, %v1670
    %v1734 = vadd.f32 %v1733, %v1671
    %v1735 = vadd.f32 %v1734, %v1672
    %v1736 = vadd.f32 %v1735, %v1673
    %v1737 = vadd.f32 %v1736, %v1674
    %v1738 = vadd.f32 %v1737, %v1675
    %v1739 = vadd.f32 %v1738, %v1676
    %v1740 = vadd.f32 %v1739, %v1677
    %v1741 = vadd.f32 %v1740, %v1678
    %v1742 = vrot.slane %v1741, 4
    %v1743 = vadd.f32 %v1741, %v1742
    %v1744 = vrot.slane %v1743, 2
    %v1745 = vadd.f32 %v1743, %v1744
    %v1746 = vrot.slane %v1745, 1
    %v1747 = vadd.f32 %v1745, %v1746
    %1748 = vst [vmem:[%s4] sm:$0x1] %v1747
  $region21: #{basic_conv2d_forward.2} parent=0 // pred_fallthru
    _
  %p1749 = scmp.ne.s32.totalorder 0, 0
  %p1750 = pnand %p15, %p1749
  %p1751 = pneg %p1750
  // Predicated region
  $region22: #{basic_conv2d_forward.2} parent=0 // pred_check
    _
  $region23: #{basic_conv2d_forward.2} parent=0 // pred_check_branch
    %1753 = sbr.rel (%p1750) target = $region25
  $region24: #{basic_conv2d_forward.2} parent=0 // pred_region
    %v1754 = vld [vmem:[#allocation2] sm:$0xff]
    %v1755 = vld [vmem:[#allocation2 + $0x8] sm:$0xff]
    %v1756 = vld [vmem:[#allocation2 + $0x10] sm:$0xff]
    %v1757 = vld [vmem:[#allocation2 + $0x18] sm:$0xff]
    %v1758 = vld [vmem:[#allocation2 + $0x20] sm:$0xff]
    %v1759 = vld [vmem:[#allocation2 + $0x28] sm:$0xff]
    %v1760 = vld [vmem:[#allocation2 + $0x30] sm:$0xff]
    %v1761 = vld [vmem:[#allocation2 + $0x38] sm:$0xff]
    %v1762 = vld [vmem:[#allocation2 + $0x40] sm:$0xff]
    %v1763 = vld [vmem:[#allocation2 + $0x48] sm:$0xff]
    %v1764 = vld [vmem:[#allocation2 + $0x50] sm:$0xff]
    %v1765 = vld [vmem:[#allocation2 + $0x58] sm:$0xff]
    %v1766 = vld [vmem:[#allocation2 + $0x60] sm:$0xff]
    %v1767 = vld [vmem:[#allocation2 + $0x68] sm:$0xff]
    %v1768 = vld [vmem:[#allocation2 + $0x70] sm:$0xff]
    %v1769 = vld [vmem:[#allocation2 + $0x78] sm:$0xff]
    %v1770 = vld [vmem:[#allocation2 + $0x80] sm:$0xff]
    %v1771 = vld [vmem:[#allocation2 + $0x88] sm:$0xff]
    %v1772 = vld [vmem:[#allocation2 + $0x90] sm:$0xff]
    %v1773 = vld [vmem:[#allocation2 + $0x98] sm:$0xff]
    %v1774 = vld [vmem:[#allocation2 + $0xa0] sm:$0xff]
    %v1775 = vld [vmem:[#allocation2 + $0xa8] sm:$0xff]
    %v1776 = vld [vmem:[#allocation2 + $0xb0] sm:$0xff]
    %v1777 = vld [vmem:[#allocation2 + $0xb8] sm:$0xff]
    %v1778 = vld [vmem:[#allocation2 + $0xc0] sm:$0xff]
    %v1779 = vld [vmem:[#allocation2 + $0xc8] sm:$0xff]
    %v1780 = vld [vmem:[#allocation2 + $0xd0] sm:$0xff]
    %v1781 = vld [vmem:[#allocation2 + $0xd8] sm:$0xff]
    %v1782 = vld [vmem:[#allocation2 + $0xe0] sm:$0xff]
    %v1783 = vld [vmem:[#allocation2 + $0xe8] sm:$0xff]
    %v1784 = vld [vmem:[#allocation2 + $0xf0] sm:$0xff]
    %v1785 = vld [vmem:[#allocation2 + $0xf8] sm:$0xff]
    %v1786 = vld [vmem:[#allocation2 + $0x100] sm:$0xff]
    %v1787 = vld [vmem:[#allocation2 + $0x108] sm:$0xff]
    %v1788 = vld [vmem:[#allocation2 + $0x110] sm:$0xff]
    %v1789 = vld [vmem:[#allocation2 + $0x118] sm:$0xff]
    %v1790 = vld [vmem:[#allocation2 + $0x120] sm:$0xff]
    %v1791 = vld [vmem:[#allocation2 + $0x128] sm:$0xff]
    %v1792 = vld [vmem:[#allocation2 + $0x130] sm:$0xff]
    %v1793 = vld [vmem:[#allocation2 + $0x138] sm:$0xff]
    %v1794 = vld [vmem:[#allocation2 + $0x140] sm:$0xff]
    %v1795 = vld [vmem:[#allocation2 + $0x148] sm:$0xff]
    %v1796 = vld [vmem:[#allocation2 + $0x150] sm:$0xff]
    %v1797 = vld [vmem:[#allocation2 + $0x158] sm:$0xff]
    %v1798 = vld [vmem:[#allocation2 + $0x160] sm:$0xff]
    %v1799 = vld [vmem:[#allocation2 + $0x168] sm:$0xff]
    %v1800 = vld [vmem:[#allocation2 + $0x170] sm:$0xff]
    %v1801 = vld [vmem:[#allocation2 + $0x178] sm:$0xff]
    %v1802 = vld [vmem:[#allocation2 + $0x180] sm:$0xff]
    %v1803 = vld [vmem:[#allocation2 + $0x188] sm:$0xff]
    %v1804 = vld [vmem:[#allocation2 + $0x190] sm:$0xff]
    %v1805 = vld [vmem:[#allocation2 + $0x198] sm:$0xff]
    %v1806 = vld [vmem:[#allocation2 + $0x1a0] sm:$0xff]
    %v1807 = vld [vmem:[#allocation2 + $0x1a8] sm:$0xff]
    %v1808 = vld [vmem:[#allocation2 + $0x1b0] sm:$0xff]
    %v1809 = vld [vmem:[#allocation2 + $0x1b8] sm:$0xff]
    %v1810 = vld [vmem:[#allocation2 + $0x1c0] sm:$0xff]
    %v1811 = vld [vmem:[#allocation2 + $0x1c8] sm:$0xff]
    %v1812 = vld [vmem:[#allocation2 + $0x1d0] sm:$0xff]
    %v1813 = vld [vmem:[#allocation2 + $0x1d8] sm:$0xff]
    %v1814 = vld [vmem:[#allocation2 + $0x1e0] sm:$0xff]
    %v1815 = vld [vmem:[#allocation2 + $0x1e8] sm:$0xff]
    %v1816 = vld [vmem:[#allocation2 + $0x1f0] sm:$0xff]
    %v1817 = vld [vmem:[#allocation2 + $0x1f8] sm:$0xff]
    %v1818 = vmul.f32 %v1754, %v1218
    %v1819 = vmul.f32 %v1755, %v1219
    %v1820 = vmul.f32 %v1756, %v1220
    %v1821 = vmul.f32 %v1757, %v1221
    %v1822 = vmul.f32 %v1758, %v1222
    %v1823 = vmul.f32 %v1759, %v1223
    %v1824 = vmul.f32 %v1760, %v1224
    %v1825 = vmul.f32 %v1761, %v1225
    %v1826 = vmul.f32 %v1762, %v1226
    %v1827 = vmul.f32 %v1763, %v1227
    %v1828 = vmul.f32 %v1764, %v1228
    %v1829 = vmul.f32 %v1765, %v1229
    %v1830 = vmul.f32 %v1766, %v1230
    %v1831 = vmul.f32 %v1767, %v1231
    %v1832 = vmul.f32 %v1768, %v1232
    %v1833 = vmul.f32 %v1769, %v1233
    %v1834 = vmul.f32 %v1770, %v1234
    %v1835 = vmul.f32 %v1771, %v1235
    %v1836 = vmul.f32 %v1772, %v1236
    %v1837 = vmul.f32 %v1773, %v1237
    %v1838 = vmul.f32 %v1774, %v1238
    %v1839 = vmul.f32 %v1775, %v1239
    %v1840 = vmul.f32 %v1776, %v1240
    %v1841 = vmul.f32 %v1777, %v1241
    %v1842 = vmul.f32 %v1778, %v1242
    %v1843 = vmul.f32 %v1779, %v1243
    %v1844 = vmul.f32 %v1780, %v1244
    %v1845 = vmul.f32 %v1781, %v1245
    %v1846 = vmul.f32 %v1782, %v1246
    %v1847 = vmul.f32 %v1783, %v1247
    %v1848 = vmul.f32 %v1784, %v1248
    %v1849 = vmul.f32 %v1785, %v1249
    %v1850 = vmul.f32 %v1786, %v1250
    %v1851 = vmul.f32 %v1787, %v1251
    %v1852 = vmul.f32 %v1788, %v1252
    %v1853 = vmul.f32 %v1789, %v1253
    %v1854 = vmul.f32 %v1790, %v1254
    %v1855 = vmul.f32 %v1791, %v1255
    %v1856 = vmul.f32 %v1792, %v1256
    %v1857 = vmul.f32 %v1793, %v1257
    %v1858 = vmul.f32 %v1794, %v1258
    %v1859 = vmul.f32 %v1795, %v1259
    %v1860 = vmul.f32 %v1796, %v1260
    %v1861 = vmul.f32 %v1797, %v1261
    %v1862 = vmul.f32 %v1798, %v1262
    %v1863 = vmul.f32 %v1799, %v1263
    %v1864 = vmul.f32 %v1800, %v1264
    %v1865 = vmul.f32 %v1801, %v1265
    %v1866 = vmul.f32 %v1802, %v1266
    %v1867 = vmul.f32 %v1803, %v1267
    %v1868 = vmul.f32 %v1804, %v1268
    %v1869 = vmul.f32 %v1805, %v1269
    %v1870 = vmul.f32 %v1806, %v1270
    %v1871 = vmul.f32 %v1807, %v1271
    %v1872 = vmul.f32 %v1808, %v1272
    %v1873 = vmul.f32 %v1809, %v1273
    %v1874 = vmul.f32 %v1810, %v1274
    %v1875 = vmul.f32 %v1811, %v1275
    %v1876 = vmul.f32 %v1812, %v1276
    %v1877 = vmul.f32 %v1813, %v1277
    %v1878 = vmul.f32 %v1814, %v1278
    %v1879 = vmul.f32 %v1815, %v1279
    %v1880 = vmul.f32 %v1816, %v1280
    %v1881 = vmul.f32 %v1817, %v1281
    %v1882 = vld [vmem:[%s5] sm:$0x1]
    %v1884 = vperm.slane %v1882, 0
    %v1886 = vsub.f32 %v1754, %v1884
    %v1887 = vsub.f32 %v1755, %v1884
    %v1888 = vsub.f32 %v1756, %v1884
    %v1889 = vsub.f32 %v1757, %v1884
    %v1890 = vsub.f32 %v1758, %v1884
    %v1891 = vsub.f32 %v1759, %v1884
    %v1892 = vsub.f32 %v1760, %v1884
    %v1893 = vsub.f32 %v1761, %v1884
    %v1894 = vsub.f32 %v1762, %v1884
    %v1895 = vsub.f32 %v1763, %v1884
    %v1896 = vsub.f32 %v1764, %v1884
    %v1897 = vsub.f32 %v1765, %v1884
    %v1898 = vsub.f32 %v1766, %v1884
    %v1899 = vsub.f32 %v1767, %v1884
    %v1900 = vsub.f32 %v1768, %v1884
    %v1901 = vsub.f32 %v1769, %v1884
    %v1902 = vsub.f32 %v1770, %v1884
    %v1903 = vsub.f32 %v1771, %v1884
    %v1904 = vsub.f32 %v1772, %v1884
    %v1905 = vsub.f32 %v1773, %v1884
    %v1906 = vsub.f32 %v1774, %v1884
    %v1907 = vsub.f32 %v1775, %v1884
    %v1908 = vsub.f32 %v1776, %v1884
    %v1909 = vsub.f32 %v1777, %v1884
    %v1910 = vsub.f32 %v1778, %v1884
    %v1911 = vsub.f32 %v1779, %v1884
    %v1912 = vsub.f32 %v1780, %v1884
    %v1913 = vsub.f32 %v1781, %v1884
    %v1914 = vsub.f32 %v1782, %v1884
    %v1915 = vsub.f32 %v1783, %v1884
    %v1916 = vsub.f32 %v1784, %v1884
    %v1917 = vsub.f32 %v1785, %v1884
    %v1918 = vsub.f32 %v1786, %v1884
    %v1919 = vsub.f32 %v1787, %v1884
    %v1920 = vsub.f32 %v1788, %v1884
    %v1921 = vsub.f32 %v1789, %v1884
    %v1922 = vsub.f32 %v1790, %v1884
    %v1923 = vsub.f32 %v1791, %v1884
    %v1924 = vsub.f32 %v1792, %v1884
    %v1925 = vsub.f32 %v1793, %v1884
    %v1926 = vsub.f32 %v1794, %v1884
    %v1927 = vsub.f32 %v1795, %v1884
    %v1928 = vsub.f32 %v1796, %v1884
    %v1929 = vsub.f32 %v1797, %v1884
    %v1930 = vsub.f32 %v1798, %v1884
    %v1931 = vsub.f32 %v1799, %v1884
    %v1932 = vsub.f32 %v1800, %v1884
    %v1933 = vsub.f32 %v1801, %v1884
    %v1934 = vsub.f32 %v1802, %v1884
    %v1935 = vsub.f32 %v1803, %v1884
    %v1936 = vsub.f32 %v1804, %v1884
    %v1937 = vsub.f32 %v1805, %v1884
    %v1938 = vsub.f32 %v1806, %v1884
    %v1939 = vsub.f32 %v1807, %v1884
    %v1940 = vsub.f32 %v1808, %v1884
    %v1941 = vsub.f32 %v1809, %v1884
    %v1942 = vsub.f32 %v1810, %v1884
    %v1943 = vsub.f32 %v1811, %v1884
    %v1944 = vsub.f32 %v1812, %v1884
    %v1945 = vsub.f32 %v1813, %v1884
    %v1946 = vsub.f32 %v1814, %v1884
    %v1947 = vsub.f32 %v1815, %v1884
    %v1948 = vsub.f32 %v1816, %v1884
    %v1949 = vsub.f32 %v1817, %v1884
    %v1950 = vmul.f32 %v1886, %v1218
    %v1951 = vmul.f32 %v1887, %v1219
    %v1952 = vmul.f32 %v1888, %v1220
    %v1953 = vmul.f32 %v1889, %v1221
    %v1954 = vmul.f32 %v1890, %v1222
    %v1955 = vmul.f32 %v1891, %v1223
    %v1956 = vmul.f32 %v1892, %v1224
    %v1957 = vmul.f32 %v1893, %v1225
    %v1958 = vmul.f32 %v1894, %v1226
    %v1959 = vmul.f32 %v1895, %v1227
    %v1960 = vmul.f32 %v1896, %v1228
    %v1961 = vmul.f32 %v1897, %v1229
    %v1962 = vmul.f32 %v1898, %v1230
    %v1963 = vmul.f32 %v1899, %v1231
    %v1964 = vmul.f32 %v1900, %v1232
    %v1965 = vmul.f32 %v1901, %v1233
    %v1966 = vmul.f32 %v1902, %v1234
    %v1967 = vmul.f32 %v1903, %v1235
    %v1968 = vmul.f32 %v1904, %v1236
    %v1969 = vmul.f32 %v1905, %v1237
    %v1970 = vmul.f32 %v1906, %v1238
    %v1971 = vmul.f32 %v1907, %v1239
    %v1972 = vmul.f32 %v1908, %v1240
    %v1973 = vmul.f32 %v1909, %v1241
    %v1974 = vmul.f32 %v1910, %v1242
    %v1975 = vmul.f32 %v1911, %v1243
    %v1976 = vmul.f32 %v1912, %v1244
    %v1977 = vmul.f32 %v1913, %v1245
    %v1978 = vmul.f32 %v1914, %v1246
    %v1979 = vmul.f32 %v1915, %v1247
    %v1980 = vmul.f32 %v1916, %v1248
    %v1981 = vmul.f32 %v1917, %v1249
    %v1982 = vmul.f32 %v1918, %v1250
    %v1983 = vmul.f32 %v1919, %v1251
    %v1984 = vmul.f32 %v1920, %v1252
    %v1985 = vmul.f32 %v1921, %v1253
    %v1986 = vmul.f32 %v1922, %v1254
    %v1987 = vmul.f32 %v1923, %v1255
    %v1988 = vmul.f32 %v1924, %v1256
    %v1989 = vmul.f32 %v1925, %v1257
    %v1990 = vmul.f32 %v1926, %v1258
    %v1991 = vmul.f32 %v1927, %v1259
    %v1992 = vmul.f32 %v1928, %v1260
    %v1993 = vmul.f32 %v1929, %v1261
    %v1994 = vmul.f32 %v1930, %v1262
    %v1995 = vmul.f32 %v1931, %v1263
    %v1996 = vmul.f32 %v1932, %v1264
    %v1997 = vmul.f32 %v1933, %v1265
    %v1998 = vmul.f32 %v1934, %v1266
    %v1999 = vmul.f32 %v1935, %v1267
    %v2000 = vmul.f32 %v1936, %v1268
    %v2001 = vmul.f32 %v1937, %v1269
    %v2002 = vmul.f32 %v1938, %v1270
    %v2003 = vmul.f32 %v1939, %v1271
    %v2004 = vmul.f32 %v1940, %v1272
    %v2005 = vmul.f32 %v1941, %v1273
    %v2006 = vmul.f32 %v1942, %v1274
    %v2007 = vmul.f32 %v1943, %v1275
    %v2008 = vmul.f32 %v1944, %v1276
    %v2009 = vmul.f32 %v1945, %v1277
    %v2010 = vmul.f32 %v1946, %v1278
    %v2011 = vmul.f32 %v1947, %v1279
    %v2012 = vmul.f32 %v1948, %v1280
    %v2013 = vmul.f32 %v1949, %v1281
    %v2014 = vld [vmem:[%s3] sm:$0x1]
    %v2015 = vadd.f32 %v1818, %v1819
    %v2016 = vadd.f32 %v2015, %v1820
    %v2017 = vadd.f32 %v2016, %v1821
    %v2018 = vadd.f32 %v2017, %v1822
    %v2019 = vadd.f32 %v2018, %v1823
    %v2020 = vadd.f32 %v2019, %v1824
    %v2021 = vadd.f32 %v2020, %v1825
    %v2022 = vadd.f32 %v2021, %v1826
    %v2023 = vadd.f32 %v2022, %v1827
    %v2024 = vadd.f32 %v2023, %v1828
    %v2025 = vadd.f32 %v2024, %v1829
    %v2026 = vadd.f32 %v2025, %v1830
    %v2027 = vadd.f32 %v2026, %v1831
    %v2028 = vadd.f32 %v2027, %v1832
    %v2029 = vadd.f32 %v2028, %v1833
    %v2030 = vadd.f32 %v2029, %v1834
    %v2031 = vadd.f32 %v2030, %v1835
    %v2032 = vadd.f32 %v2031, %v1836
    %v2033 = vadd.f32 %v2032, %v1837
    %v2034 = vadd.f32 %v2033, %v1838
    %v2035 = vadd.f32 %v2034, %v1839
    %v2036 = vadd.f32 %v2035, %v1840
    %v2037 = vadd.f32 %v2036, %v1841
    %v2038 = vadd.f32 %v2037, %v1842
    %v2039 = vadd.f32 %v2038, %v1843
    %v2040 = vadd.f32 %v2039, %v1844
    %v2041 = vadd.f32 %v2040, %v1845
    %v2042 = vadd.f32 %v2041, %v1846
    %v2043 = vadd.f32 %v2042, %v1847
    %v2044 = vadd.f32 %v2043, %v1848
    %v2045 = vadd.f32 %v2044, %v1849
    %v2046 = vadd.f32 %v2045, %v1850
    %v2047 = vadd.f32 %v2046, %v1851
    %v2048 = vadd.f32 %v2047, %v1852
    %v2049 = vadd.f32 %v2048, %v1853
    %v2050 = vadd.f32 %v2049, %v1854
    %v2051 = vadd.f32 %v2050, %v1855
    %v2052 = vadd.f32 %v2051, %v1856
    %v2053 = vadd.f32 %v2052, %v1857
    %v2054 = vadd.f32 %v2053, %v1858
    %v2055 = vadd.f32 %v2054, %v1859
    %v2056 = vadd.f32 %v2055, %v1860
    %v2057 = vadd.f32 %v2056, %v1861
    %v2058 = vadd.f32 %v2057, %v1862
    %v2059 = vadd.f32 %v2058, %v1863
    %v2060 = vadd.f32 %v2059, %v1864
    %v2061 = vadd.f32 %v2060, %v1865
    %v2062 = vadd.f32 %v2061, %v1866
    %v2063 = vadd.f32 %v2062, %v1867
    %v2064 = vadd.f32 %v2063, %v1868
    %v2065 = vadd.f32 %v2064, %v1869
    %v2066 = vadd.f32 %v2065, %v1870
    %v2067 = vadd.f32 %v2066, %v1871
    %v2068 = vadd.f32 %v2067, %v1872
    %v2069 = vadd.f32 %v2068, %v1873
    %v2070 = vadd.f32 %v2069, %v1874
    %v2071 = vadd.f32 %v2070, %v1875
    %v2072 = vadd.f32 %v2071, %v1876
    %v2073 = vadd.f32 %v2072, %v1877
    %v2074 = vadd.f32 %v2073, %v1878
    %v2075 = vadd.f32 %v2074, %v1879
    %v2076 = vadd.f32 %v2075, %v1880
    %v2077 = vadd.f32 %v2076, %v1881
    %v2078 = vrot.slane %v2077, 4
    %v2079 = vadd.f32 %v2077, %v2078
    %v2080 = vrot.slane %v2079, 2
    %v2081 = vadd.f32 %v2079, %v2080
    %v2082 = vrot.slane %v2081, 1
    %v2083 = vadd.f32 %v2081, %v2082
    %v2084 = vadd.f32 %v2014, %v2083
    %2085 = vst [vmem:[%s3] sm:$0x1] %v2084
    %v2086 = vld [vmem:[%s4] sm:$0x1]
    %v2087 = vmul.f32 %v1950, %v1950
    %v2088 = vmul.f32 %v1951, %v1951
    %v2089 = vmul.f32 %v1952, %v1952
    %v2090 = vmul.f32 %v1953, %v1953
    %v2091 = vmul.f32 %v1954, %v1954
    %v2092 = vmul.f32 %v1955, %v1955
    %v2093 = vmul.f32 %v1956, %v1956
    %v2094 = vmul.f32 %v1957, %v1957
    %v2095 = vmul.f32 %v1958, %v1958
    %v2096 = vmul.f32 %v1959, %v1959
    %v2097 = vmul.f32 %v1960, %v1960
    %v2098 = vmul.f32 %v1961, %v1961
    %v2099 = vmul.f32 %v1962, %v1962
    %v2100 = vmul.f32 %v1963, %v1963
    %v2101 = vmul.f32 %v1964, %v1964
    %v2102 = vmul.f32 %v1965, %v1965
    %v2103 = vmul.f32 %v1966, %v1966
    %v2104 = vmul.f32 %v1967, %v1967
    %v2105 = vmul.f32 %v1968, %v1968
    %v2106 = vmul.f32 %v1969, %v1969
    %v2107 = vmul.f32 %v1970, %v1970
    %v2108 = vmul.f32 %v1971, %v1971
    %v2109 = vmul.f32 %v1972, %v1972
    %v2110 = vmul.f32 %v1973, %v1973
    %v2111 = vmul.f32 %v1974, %v1974
    %v2112 = vmul.f32 %v1975, %v1975
    %v2113 = vmul.f32 %v1976, %v1976
    %v2114 = vmul.f32 %v1977, %v1977
    %v2115 = vmul.f32 %v1978, %v1978
    %v2116 = vmul.f32 %v1979, %v1979
    %v2117 = vmul.f32 %v1980, %v1980
    %v2118 = vmul.f32 %v1981, %v1981
    %v2119 = vmul.f32 %v1982, %v1982
    %v2120 = vmul.f32 %v1983, %v1983
    %v2121 = vmul.f32 %v1984, %v1984
    %v2122 = vmul.f32 %v1985, %v1985
    %v2123 = vmul.f32 %v1986, %v1986
    %v2124 = vmul.f32 %v1987, %v1987
    %v2125 = vmul.f32 %v1988, %v1988
    %v2126 = vmul.f32 %v1989, %v1989
    %v2127 = vmul.f32 %v1990, %v1990
    %v2128 = vmul.f32 %v1991, %v1991
    %v2129 = vmul.f32 %v1992, %v1992
    %v2130 = vmul.f32 %v1993, %v1993
    %v2131 = vmul.f32 %v1994, %v1994
    %v2132 = vmul.f32 %v1995, %v1995
    %v2133 = vmul.f32 %v1996, %v1996
    %v2134 = vmul.f32 %v1997, %v1997
    %v2135 = vmul.f32 %v1998, %v1998
    %v2136 = vmul.f32 %v1999, %v1999
    %v2137 = vmul.f32 %v2000, %v2000
    %v2138 = vmul.f32 %v2001, %v2001
    %v2139 = vmul.f32 %v2002, %v2002
    %v2140 = vmul.f32 %v2003, %v2003
    %v2141 = vmul.f32 %v2004, %v2004
    %v2142 = vmul.f32 %v2005, %v2005
    %v2143 = vmul.f32 %v2006, %v2006
    %v2144 = vmul.f32 %v2007, %v2007
    %v2145 = vmul.f32 %v2008, %v2008
    %v2146 = vmul.f32 %v2009, %v2009
    %v2147 = vmul.f32 %v2010, %v2010
    %v2148 = vmul.f32 %v2011, %v2011
    %v2149 = vmul.f32 %v2012, %v2012
    %v2150 = vmul.f32 %v2013, %v2013
    %v2151 = vadd.f32 %v2087, %v2088
    %v2152 = vadd.f32 %v2151, %v2089
    %v2153 = vadd.f32 %v2152, %v2090
    %v2154 = vadd.f32 %v2153, %v2091
    %v2155 = vadd.f32 %v2154, %v2092
    %v2156 = vadd.f32 %v2155, %v2093
    %v2157 = vadd.f32 %v2156, %v2094
    %v2158 = vadd.f32 %v2157, %v2095
    %v2159 = vadd.f32 %v2158, %v2096
    %v2160 = vadd.f32 %v2159, %v2097
    %v2161 = vadd.f32 %v2160, %v2098
    %v2162 = vadd.f32 %v2161, %v2099
    %v2163 = vadd.f32 %v2162, %v2100
    %v2164 = vadd.f32 %v2163, %v2101
    %v2165 = vadd.f32 %v2164, %v2102
    %v2166 = vadd.f32 %v2165, %v2103
    %v2167 = vadd.f32 %v2166, %v2104
    %v2168 = vadd.f32 %v2167, %v2105
    %v2169 = vadd.f32 %v2168, %v2106
    %v2170 = vadd.f32 %v2169, %v2107
    %v2171 = vadd.f32 %v2170, %v2108
    %v2172 = vadd.f32 %v2171, %v2109
    %v2173 = vadd.f32 %v2172, %v2110
    %v2174 = vadd.f32 %v2173, %v2111
    %v2175 = vadd.f32 %v2174, %v2112
    %v2176 = vadd.f32 %v2175, %v2113
    %v2177 = vadd.f32 %v2176, %v2114
    %v2178 = vadd.f32 %v2177, %v2115
    %v2179 = vadd.f32 %v2178, %v2116
    %v2180 = vadd.f32 %v2179, %v2117
    %v2181 = vadd.f32 %v2180, %v2118
    %v2182 = vadd.f32 %v2181, %v2119
    %v2183 = vadd.f32 %v2182, %v2120
    %v2184 = vadd.f32 %v2183, %v2121
    %v2185 = vadd.f32 %v2184, %v2122
    %v2186 = vadd.f32 %v2185, %v2123
    %v2187 = vadd.f32 %v2186, %v2124
    %v2188 = vadd.f32 %v2187, %v2125
    %v2189 = vadd.f32 %v2188, %v2126
    %v2190 = vadd.f32 %v2189, %v2127
    %v2191 = vadd.f32 %v2190, %v2128
    %v2192 = vadd.f32 %v2191, %v2129
    %v2193 = vadd.f32 %v2192, %v2130
    %v2194 = vadd.f32 %v2193, %v2131
    %v2195 = vadd.f32 %v2194, %v2132
    %v2196 = vadd.f32 %v2195, %v2133
    %v2197 = vadd.f32 %v2196, %v2134
    %v2198 = vadd.f32 %v2197, %v2135
    %v2199 = vadd.f32 %v2198, %v2136
    %v2200 = vadd.f32 %v2199, %v2137
    %v2201 = vadd.f32 %v2200, %v2138
    %v2202 = vadd.f32 %v2201, %v2139
    %v2203 = vadd.f32 %v2202, %v2140
    %v2204 = vadd.f32 %v2203, %v2141
    %v2205 = vadd.f32 %v2204, %v2142
    %v2206 = vadd.f32 %v2205, %v2143
    %v2207 = vadd.f32 %v2206, %v2144
    %v2208 = vadd.f32 %v2207, %v2145
    %v2209 = vadd.f32 %v2208, %v2146
    %v2210 = vadd.f32 %v2209, %v2147
    %v2211 = vadd.f32 %v2210, %v2148
    %v2212 = vadd.f32 %v2211, %v2149
    %v2213 = vadd.f32 %v2212, %v2150
    %v2214 = vrot.slane %v2213, 4
    %v2215 = vadd.f32 %v2213, %v2214
    %v2216 = vrot.slane %v2215, 2
    %v2217 = vadd.f32 %v2215, %v2216
    %v2218 = vrot.slane %v2217, 1
    %v2219 = vadd.f32 %v2217, %v2218
    %v2220 = vadd.f32 %v2086, %v2219
    %2221 = vst [vmem:[%s4] sm:$0x1] %v2220
  $region25: #{basic_conv2d_forward.2} parent=0 // pred_fallthru
    _
  // Predicated region
  $region26: #{basic_conv2d_forward.2} parent=0 // pred_check
    _
  $region27: #{basic_conv2d_forward.2} parent=0 // pred_check_branch
    %2223 = sbr.rel (0) target = $region29
  $region28: #{basic_conv2d_forward.2} parent=0 // pred_region
    _
  $region29: #{basic_conv2d_forward.2} parent=0 // pred_fallthru
    _
  // Predicated region
  $region30: #{basic_conv2d_forward.2} parent=0 // pred_check
    _
  $region31: #{basic_conv2d_forward.2} parent=0 // pred_check_branch
    %2225 = sbr.rel (0) target = $region33
  $region32: #{basic_conv2d_forward.2} parent=0 // pred_region
    _
  $region33: #{basic_conv2d_forward.2} parent=0 // pred_fallthru
    _
  // Predicated region
  $region34: #{basic_conv2d_forward.2} parent=0 // pred_check
    _
  $region35: #{basic_conv2d_forward.2} parent=0 // pred_check_branch
    %2227 = sbr.rel (0) target = $region37
  $region36: #{basic_conv2d_forward.2} parent=0 // pred_region
    _
  $region37: #{basic_conv2d_forward.2} parent=0 // pred_fallthru
    _
  // Predicated region
  $region38: #{basic_conv2d_forward.2} parent=0 // pred_check
    _
  $region39: #{basic_conv2d_forward.2} parent=0 // pred_check_branch
    %2229 = sbr.rel (0) target = $region41
  $region40: #{basic_conv2d_forward.2} parent=0 // pred_region
    _
  $region41: #{basic_conv2d_forward.2} parent=0 // pred_fallthru
    _
  // Predicated region
  $region42: #{basic_conv2d_forward.2} parent=0 // pred_check
    _
  $region43: #{basic_conv2d_forward.2} parent=0 // pred_check_branch
    %2231 = sbr.rel (0) target = $region45
  $region44: #{basic_conv2d_forward.2} parent=0 // pred_region
    _
  $region45: #{basic_conv2d_forward.2} parent=0 // pred_fallthru
    _
  // Predicated region
  $region46: #{basic_conv2d_forward.2} parent=0 // pred_check
    _
  $region47: #{basic_conv2d_forward.2} parent=0 // pred_check_branch
    %2233 = sbr.rel (0) target = $region49
  $region48: #{basic_conv2d_forward.2} parent=0 // pred_region
    _
  $region49: #{basic_conv2d_forward.2} parent=0 // pred_fallthru
    _
  // Predicated region
  $region50: #{basic_conv2d_forward.2} parent=0 // pred_check
    _
  $region51: #{basic_conv2d_forward.2} parent=0 // pred_check_branch
    %2235 = sbr.rel (0) target = $region53
  $region52: #{basic_conv2d_forward.2} parent=0 // pred_region
    _
  $region53: #{basic_conv2d_forward.2} parent=0 // pred_fallthru
    _
  // Predicated region
  $region54: #{basic_conv2d_forward.2} parent=0 // pred_check
    _
  $region55: #{basic_conv2d_forward.2} parent=0 // pred_check_branch
    %2237 = sbr.rel (0) target = $region57
  $region56: #{basic_conv2d_forward.2} parent=0 // pred_region
    _
  $region57: #{basic_conv2d_forward.2} parent=0 // pred_fallthru
    _

</llo_original>
